<compile_context>
chip_gen: v5e
topology: v5e:2x2
jax: 0.10.0
libtpu: 0.0.40
codegen_flags: <defaults>
</compile_context>

<pallas_src>
import math
import numpy as np
import jax
import jax.numpy as jnp
from jax import lax
from jax.experimental import pallas as pl
from jax.experimental.pallas import tpu as pltpu

# ---- alphabet constants (mirrors sequence_models.constants; no checkpoint load) ----
CAN_AAS = "ACDEFGHIKLMNPQRSTVWY"
AMB_AAS = "BZX"
OTHER_AAS = "JOU"
ALL_AAS = CAN_AAS + AMB_AAS + OTHER_AAS
GAP, START, STOP, MSK = "-", "@", "*", "#"
PAD = GAP
PROTEIN_ALPHABET = ALL_AAS + GAP + START + STOP + MSK  # 30 tokens
PAD_IDX = PROTEIN_ALPHABET.index(PAD)                  # 26

LANE = 128  # padded channel width (TPU lane count)


# ---------------- math helpers ----------------
def _gelu(x):
    # PyTorch nn.GELU() default: exact erf form
    return 0.5 * x * (1.0 + lax.erf(x / math.sqrt(2.0)))


def _ln_padded(x, g, b, d_true, eps=1e-5):
    """LayerNorm over the first d_true channels of a 128-lane-padded tensor.

    Padded channels of x are exactly zero, so full-lane sums equal true-channel
    sums; g/b are zero-padded so padded channels stay zero after the norm.
    Single-pass statistics (one cross-lane reduction pair instead of two)."""
    s1 = jnp.sum(x, axis=-1, keepdims=True)
    s2 = jnp.sum(x * x, axis=-1, keepdims=True)
    mu = s1 / d_true
    var = s2 / d_true - mu * mu
    return (x - mu) * lax.rsqrt(var + eps) * g + b


# ---------------- fused Pallas kernel ----------------
def _make_fused_kernel(L, M, d_model, d_h, kernel_size, dilations, want_logits):
    n_layers = len(dilations)

    def kernel(tok_ref, embup_ref, bup_ref,
               ln1g_ref, ln1b_ref, w1_ref, b1_ref,
               ln2g_ref, ln2b_ref, cw_ref, cb_ref,
               ln3g_ref, ln3b_ref, w2_ref, b2_ref,
               lnfg_ref, lnfb_ref, wd_ref, bd_ref,
               o_ref):
        tok = tok_ref[...]                                      # (M, 1) int32
        # padding mask rebuilt in-kernel (no separate mask DMA stream)
        mask = (tok != PAD_IDX).astype(jnp.float32)             # (M, 1)
        # embedding as one-hot matmul against the pre-fused (emb @ wup) table
        col = lax.broadcasted_iota(jnp.int32, (M, LANE), 1)
        onehot = (tok == col).astype(jnp.float32)               # (M, 128)
        x = jnp.dot(onehot, embup_ref[...],
                    preferred_element_type=jnp.float32) + bup_ref[...]
        # position within each length-L sequence of the flattened (B*L) rows,
        # used to mask conv taps so they never cross sequence boundaries.
        pos = lax.broadcasted_iota(jnp.int32, (M, 1), 0) % L

        for l in range(n_layers):                               # static unroll
            dil = dilations[l]
            pad = dil * (kernel_size - 1) // 2
            # sequence1: LN -> GELU -> Linear(D->Dh) -> LN -> GELU
            h = _gelu(_ln_padded(x, ln1g_ref[l], ln1b_ref[l], d_model))
            h = jnp.dot(h, w1_ref[l], preferred_element_type=jnp.float32) + b1_ref[l]
            h = _gelu(_ln_padded(h, ln2g_ref[l], ln2b_ref[l], d_h))
            # MaskedConv1d: mask, then dilated conv as a sum of rolled taps
            h = h * mask
            acc = jnp.broadcast_to(cb_ref[l], (M, LANE))        # hoisted conv bias
            for t in range(kernel_size):                        # static taps
                off = t * dil - pad
                if off == 0:
                    tap = h
                else:
                    # tap[i] = h[i + off] if (i+off) stays inside its sequence else 0
                    tap = pltpu.roll(h, (-off) % M, axis=0)     # XLU sublane rotate
                    valid = (pos + off >= 0) & (pos + off < L)
                    tap = jnp.where(valid, tap, 0.0)
                acc = acc + jnp.dot(tap, cw_ref[l, t],
                                    preferred_element_type=jnp.float32)
            # sequence2: LN -> GELU -> Linear(Dh->D), residual add
            h = _gelu(_ln_padded(acc, ln3g_ref[l], ln3b_ref[l], d_h))
            h = jnp.dot(h, w2_ref[l], preferred_element_type=jnp.float32) + b2_ref[l]
            x = x + h

        if want_logits:
            # fused ByteNetLM head: last LayerNorm + decoder matmul
            h = _ln_padded(x, lnfg_ref[...], lnfb_ref[...], d_model)
            o_ref[...] = jnp.dot(h, wd_ref[...],
                                 preferred_element_type=jnp.float32) + bd_ref[...]
        else:
            o_ref[...] = x

    return kernel


# ---------------- parameter padding / stacking ----------------
def _pad2d(a, rows, cols):
    out = jnp.zeros((rows, cols), a.dtype)
    return out.at[:a.shape[0], :a.shape[1]].set(a)


def _prepare_padded(params):
    D = params["wup"].shape[1]
    Dh = params["layers"][0]["w1"].shape[1]
    V = params["wdec"].shape[1]
    k = params["kernel_size"]
    emb_up = params["emb"] @ params["wup"]                      # pre-fused (V, D)
    p = {
        "emb_up": _pad2d(emb_up, LANE, LANE),
        "bup": _pad2d(params["bup"], 1, LANE),
        "lnf_g": _pad2d(params["lnf_g"], 1, LANE),
        "lnf_b": _pad2d(params["lnf_b"], 1, LANE),
        "wdec": _pad2d(params["wdec"], LANE, LANE),
        "bdec": _pad2d(params["bdec"], 1, LANE),
    }

    def stack(name, rows, cols):
        return jnp.stack([_pad2d(lp[name], rows, cols) for lp in params["layers"]])

    p["ln1_g"] = stack("ln1_g", 1, LANE); p["ln1_b"] = stack("ln1_b", 1, LANE)
    p["w1"] = stack("w1", LANE, LANE);    p["b1"] = stack("b1", 1, LANE)
    p["ln2_g"] = stack("ln2_g", 1, LANE); p["ln2_b"] = stack("ln2_b", 1, LANE)
    p["conv_w"] = jnp.stack([
        jnp.stack([_pad2d(lp["conv_w"][t], LANE, LANE) for t in range(k)])
        for lp in params["layers"]])                            # (n_layers, k, 128, 128)
    p["conv_b"] = stack("conv_b", 1, LANE)
    p["ln3_g"] = stack("ln3_g", 1, LANE); p["ln3_b"] = stack("ln3_b", 1, LANE)
    p["w2"] = stack("w2", LANE, LANE);    p["b2"] = stack("b2", 1, LANE)
    return p, D, Dh, V


# ---------------- CARP forward (Pallas) ----------------
def carp_forward(params, tokens, result="repr"):
    if result not in ("repr", "logits"):
        raise ValueError("Result must be either 'repr' or 'logits'")
    B, L = tokens.shape
    M = B * L
    pp, D, Dh, V = _prepare_padded(params)
    kernel = _make_fused_kernel(L, M, D, Dh, params["kernel_size"],
                                tuple(params["dilations"]), result == "logits")
    tok = tokens.reshape(M, 1).astype(jnp.int32)
    # Single pallas_call; every operand is a whole-array VMEM-resident block
    # (total footprint ~1.7 MB at these sizes, far below the scoped VMEM limit).
    # TODO(synk): for production CARP sizes (d_model~1280, long L) tile the M axis
    # with conv halos and cast matmul operands to bf16 on v6e/v7x.
    out = pl.pallas_call(
        kernel,
        out_shape=jax.ShapeDtypeStruct((M, LANE), jnp.float32),
    )(tok, pp["emb_up"], pp["bup"],
      pp["ln1_g"], pp["ln1_b"], pp["w1"], pp["b1"],
      pp["ln2_g"], pp["ln2_b"], pp["conv_w"], pp["conv_b"],
      pp["ln3_g"], pp["ln3_b"], pp["w2"], pp["b2"],
      pp["lnf_g"], pp["lnf_b"], pp["wdec"], pp["bdec"])
    if result == "repr":
        return out[:, :D].reshape(B, L, D)
    return out[:, :V].reshape(B, L, V)


# ---------------- pure-JAX reference (for self-check) ----------------
def _ln_ref(x, g, b, eps=1e-5):
    mu = jnp.mean(x, axis=-1, keepdims=True)
    var = jnp.mean((x - mu) ** 2, axis=-1, keepdims=True)
    return (x - mu) * lax.rsqrt(var + eps) * g + b


def ref_forward(params, tokens, result="repr"):
    mask = (tokens != PAD_IDX)[..., None].astype(jnp.float32)
    onehot = jax.nn.one_hot(tokens, params["emb"].shape[0], dtype=jnp.float32)
    e = onehot @ params["emb"] @ params["wup"] + params["bup"]
    k = params["kernel_size"]
    for lp, dil in zip(params["layers"], params["dilations"]):
        pad = dil * (k - 1) // 2
        L = e.shape[1]
        h = _gelu(_ln_ref(e, lp["ln1_g"], lp["ln1_b"]))
        h = h @ lp["w1"] + lp["b1"]
        h = _gelu(_ln_ref(h, lp["ln2_g"], lp["ln2_b"]))
        h = h * mask
        hp = jnp.pad(h, ((0, 0), (pad, pad), (0, 0)))
        acc = jnp.zeros(h.shape[:2] + (lp["conv_b"].shape[-1],), jnp.float32) + lp["conv_b"]
        for t in range(k):
            acc = acc + hp[:, t * dil:t * dil + L, :] @ lp["conv_w"][t]
        h = _gelu(_ln_ref(acc, lp["ln3_g"], lp["ln3_b"]))
        h = h @ lp["w2"] + lp["b2"]
        e = e + h
    if result == "repr":
        return e
    return _ln_ref(e, params["lnf_g"], params["lnf_b"]) @ params["wdec"] + params["bdec"]


# ---------------- deterministic parameter init (synthetic; no checkpoint) ----------------
def init_carp_params(key, n_tokens=30, d_embedding=8, d_model=32,
                     n_layers=2, kernel_size=5, dilations=(1, 2)):
    d_h = d_model // 2
    keys = iter(jax.random.split(key, 64))
    nrm = lambda shp, s: jax.random.normal(next(keys), shp, jnp.float32) * s
    params = {
        "emb": nrm((n_tokens, d_embedding), 0.5),
        "wup": nrm((d_embedding, d_model), 0.2),
        "bup": nrm((1, d_model), 0.1),
        "kernel_size": kernel_size,
        "dilations": list(dilations),
        "layers": [],
        "lnf_g": jnp.ones((1, d_model), jnp.float32),
        "lnf_b": jnp.zeros((1, d_model), jnp.float32),
        "wdec": nrm((d_model, n_tokens), 0.2),
        "bdec": jnp.zeros((1, n_tokens), jnp.float32),
    }
    for _ in range(n_layers):
        params["layers"].append({
            "ln1_g": jnp.ones((1, d_model), jnp.float32),
            "ln1_b": jnp.zeros((1, d_model), jnp.float32),
            "w1": nrm((d_model, d_h), 0.2),
            "b1": nrm((1, d_h), 0.1),
            "ln2_g": jnp.ones((1, d_h), jnp.float32),
            "ln2_b": jnp.zeros((1, d_h), jnp.float32),
            # torch Conv1d weight (out, in, k) stored here as (k, in, out)
            "conv_w": nrm((kernel_size, d_h, d_h), 0.2),
            "conv_b": nrm((1, d_h), 0.1),
            "ln3_g": jnp.ones((1, d_h), jnp.float32),
            "ln3_b": jnp.zeros((1, d_h), jnp.float32),
            "w2": nrm((d_h, d_model), 0.2),
            "b2": nrm((1, d_model), 0.1),
        })
    return params


if __name__ == "__main__":
    key = jax.random.PRNGKey(0)
    pk, xk = jax.random.split(key)
    params = init_carp_params(pk)

    B, L = 2, 16
    tokens = jax.random.randint(xk, (B, L), 0, len(ALL_AAS), dtype=jnp.int32)
    tokens = tokens.at[:, -3:].set(PAD_IDX)  # trailing PAD tokens to exercise the mask

    reprs = carp_forward(params, tokens, result="repr")      # (B, L, d_model)
    logits = carp_forward(params, tokens, result="logits")   # (B, L, n_tokens)
    jax.block_until_ready((reprs, logits))

    r_ref = ref_forward(params, tokens, "repr")
    l_ref = ref_forward(params, tokens, "logits")

    assert reprs.shape == (B, L, 32) and logits.shape == (B, L, 30)
    assert np.allclose(np.asarray(reprs), np.asarray(r_ref), rtol=1e-4, atol=1e-4)
    assert np.allclose(np.asarray(logits), np.asarray(l_ref), rtol=1e-4, atol=1e-4)
    print("KERNEL_OK")
</pallas_src>

<mosaic_0001>
module attributes {stable_mosaic.version = 11 : i64} {
  func.func @kernel(%arg0: memref<32x1xi32, #tpu.memory_space<vmem>>, %arg1: memref<128x128xf32, #tpu.memory_space<vmem>>, %arg2: memref<1x128xf32, #tpu.memory_space<vmem>>, %arg3: memref<2x1x128xf32, #tpu.memory_space<vmem>>, %arg4: memref<2x1x128xf32, #tpu.memory_space<vmem>>, %arg5: memref<2x128x128xf32, #tpu.memory_space<vmem>>, %arg6: memref<2x1x128xf32, #tpu.memory_space<vmem>>, %arg7: memref<2x1x128xf32, #tpu.memory_space<vmem>>, %arg8: memref<2x1x128xf32, #tpu.memory_space<vmem>>, %arg9: memref<2x5x128x128xf32, #tpu.memory_space<vmem>>, %arg10: memref<2x1x128xf32, #tpu.memory_space<vmem>>, %arg11: memref<2x1x128xf32, #tpu.memory_space<vmem>>, %arg12: memref<2x1x128xf32, #tpu.memory_space<vmem>>, %arg13: memref<2x128x128xf32, #tpu.memory_space<vmem>>, %arg14: memref<2x1x128xf32, #tpu.memory_space<vmem>>, %arg15: memref<1x128xf32, #tpu.memory_space<vmem>>, %arg16: memref<1x128xf32, #tpu.memory_space<vmem>>, %arg17: memref<128x128xf32, #tpu.memory_space<vmem>>, %arg18: memref<1x128xf32, #tpu.memory_space<vmem>>, %arg19: memref<32x128xf32, #tpu.memory_space<vmem>>) attributes {dimension_semantics = [], scalar_prefetch = 0 : i64, scratch_operands = 0 : i64, tpu.core_type = #tpu.core_type<tc>} {
    %c0 = arith.constant 0 : index
    %c0_0 = arith.constant 0 : index
    %0 = vector.load %arg0[%c0, %c0_0] : memref<32x1xi32, #tpu.memory_space<vmem>>, vector<32x1xi32>
    %c26_i32 = arith.constant 26 : i32
    %1 = vector.broadcast %c26_i32 : i32 to vector<32x1xi32>
    %2 = arith.cmpi ne, %0, %1 : vector<32x1xi32>
    %3 = arith.extui %2 : vector<32x1xi1> to vector<32x1xi32>
    %4 = arith.sitofp %3 : vector<32x1xi32> to vector<32x1xf32>
    %5 = tpu.iota {dimensions = array<i32: 1>} : vector<32x128xi32>
    %6 = vector.broadcast %0 : vector<32x1xi32> to vector<32x128xi32>
    %7 = arith.cmpi eq, %6, %5 : vector<32x128xi32>
    %8 = arith.extui %7 : vector<32x128xi1> to vector<32x128xi32>
    %9 = arith.sitofp %8 : vector<32x128xi32> to vector<32x128xf32>
    %c0_1 = arith.constant 0 : index
    %c0_2 = arith.constant 0 : index
    %10 = vector.load %arg1[%c0_1, %c0_2] : memref<128x128xf32, #tpu.memory_space<vmem>>, vector<128x128xf32>
    %cst = arith.constant dense<0.000000e+00> : vector<32x128xf32>
    %11 = tpu.matmul %9, %10, %cst {dimension_numbers = #tpu.dot_dimension_numbers<[1], [0], [0], [1], [0, 0, 1, 1], [], []>} : vector<32x128xf32>, vector<128x128xf32>, vector<32x128xf32> -> vector<32x128xf32>
    %c0_3 = arith.constant 0 : index
    %c0_4 = arith.constant 0 : index
    %12 = vector.load %arg2[%c0_3, %c0_4] : memref<1x128xf32, #tpu.memory_space<vmem>>, vector<1x128xf32>
    %13 = vector.broadcast %12 : vector<1x128xf32> to vector<32x128xf32>
    %14 = arith.addf %11, %13 : vector<32x128xf32>
    %15 = tpu.iota {dimensions = array<i32: 0>} : vector<32x1xi32>
    %c16_i32 = arith.constant 16 : i32
    %c0_i32 = arith.constant 0 : i32
    %16 = arith.cmpi eq, %c16_i32, %c0_i32 : i32
    %c1_i32 = arith.constant 1 : i32
    %17 = arith.select %16, %c1_i32, %c16_i32 : i32
    %18 = vector.broadcast %17 : i32 to vector<32x1xi32>
    %19 = arith.remsi %15, %18 : vector<32x1xi32>
    %c0_i32_5 = arith.constant 0 : i32
    %20 = vector.broadcast %c0_i32_5 : i32 to vector<32x1xi32>
    %21 = arith.cmpi ne, %19, %20 : vector<32x1xi32>
    %c0_i32_6 = arith.constant 0 : i32
    %22 = vector.broadcast %c0_i32_6 : i32 to vector<32x1xi32>
    %23 = arith.cmpi slt, %19, %22 : vector<32x1xi32>
    %c0_i32_7 = arith.constant 0 : i32
    %24 = arith.cmpi slt, %17, %c0_i32_7 : i32
    %25 = vector.broadcast %24 : i1 to vector<32x1xi1>
    %26 = vector.broadcast %25 : vector<32x1xi1> to vector<32x1xi1>
    %27 = arith.xori %23, %26 : vector<32x1xi1>
    %28 = arith.andi %27, %21 : vector<32x1xi1>
    %29 = vector.broadcast %17 : i32 to vector<32x1xi32>
    %30 = arith.addi %19, %29 : vector<32x1xi32>
    %31 = arith.select %28, %30, %19 : vector<32x1xi1>, vector<32x1xi32>
    %c0_8 = arith.constant 0 : index
    %c0_9 = arith.constant 0 : index
    %c0_10 = arith.constant 0 : index
    %32 = vector.load %arg3[%c0_8, %c0_9, %c0_10] : memref<2x1x128xf32, #tpu.memory_space<vmem>>, vector<1x1x128xf32>
    %33 = vector.shape_cast %32 : vector<1x1x128xf32> to vector<1x128xf32>
    %c0_11 = arith.constant 0 : index
    %c0_12 = arith.constant 0 : index
    %c0_13 = arith.constant 0 : index
    %34 = vector.load %arg4[%c0_11, %c0_12, %c0_13] : memref<2x1x128xf32, #tpu.memory_space<vmem>>, vector<1x1x128xf32>
    %35 = vector.shape_cast %34 : vector<1x1x128xf32> to vector<1x128xf32>
    %cst_14 = arith.constant dense<0.000000e+00> : vector<32xf32>
    %36 = vector.multi_reduction <add>, %14, %cst_14 [1] : vector<32x128xf32> to vector<32xf32>
    %37 = vector.shape_cast %36 : vector<32xf32> to vector<32x1xf32>
    %38 = arith.mulf %14, %14 : vector<32x128xf32>
    %cst_15 = arith.constant dense<0.000000e+00> : vector<32xf32>
    %39 = vector.multi_reduction <add>, %38, %cst_15 [1] : vector<32x128xf32> to vector<32xf32>
    %40 = vector.shape_cast %39 : vector<32xf32> to vector<32x1xf32>
    %cst_16 = arith.constant 3.200000e+01 : f32
    %41 = vector.broadcast %cst_16 : f32 to vector<32x1xf32>
    %42 = arith.divf %37, %41 : vector<32x1xf32>
    %cst_17 = arith.constant 3.200000e+01 : f32
    %43 = vector.broadcast %cst_17 : f32 to vector<32x1xf32>
    %44 = arith.divf %40, %43 : vector<32x1xf32>
    %45 = arith.mulf %42, %42 : vector<32x1xf32>
    %46 = arith.subf %44, %45 : vector<32x1xf32>
    %47 = vector.broadcast %42 : vector<32x1xf32> to vector<32x128xf32>
    %48 = arith.subf %14, %47 : vector<32x128xf32>
    %cst_18 = arith.constant 9.99999974E-6 : f32
    %49 = vector.broadcast %cst_18 : f32 to vector<32x1xf32>
    %50 = arith.addf %46, %49 : vector<32x1xf32>
    %51 = math.rsqrt %50 : vector<32x1xf32>
    %52 = vector.broadcast %51 : vector<32x1xf32> to vector<32x128xf32>
    %53 = arith.mulf %48, %52 : vector<32x128xf32>
    %54 = vector.broadcast %33 : vector<1x128xf32> to vector<32x128xf32>
    %55 = arith.mulf %53, %54 : vector<32x128xf32>
    %56 = vector.broadcast %35 : vector<1x128xf32> to vector<32x128xf32>
    %57 = arith.addf %55, %56 : vector<32x128xf32>
    %cst_19 = arith.constant 5.000000e-01 : f32
    %58 = vector.broadcast %cst_19 : f32 to vector<32x128xf32>
    %59 = arith.mulf %58, %57 : vector<32x128xf32>
    %cst_20 = arith.constant 1.41421354 : f32
    %60 = vector.broadcast %cst_20 : f32 to vector<32x128xf32>
    %61 = arith.divf %57, %60 : vector<32x128xf32>
    %62 = math.erf %61 : vector<32x128xf32>
    %cst_21 = arith.constant 1.000000e+00 : f32
    %63 = vector.broadcast %cst_21 : f32 to vector<32x128xf32>
    %64 = arith.addf %63, %62 : vector<32x128xf32>
    %65 = arith.mulf %59, %64 : vector<32x128xf32>
    %c0_22 = arith.constant 0 : index
    %c0_23 = arith.constant 0 : index
    %c0_24 = arith.constant 0 : index
    %66 = vector.load %arg5[%c0_22, %c0_23, %c0_24] : memref<2x128x128xf32, #tpu.memory_space<vmem>>, vector<1x128x128xf32>
    %67 = vector.shape_cast %66 : vector<1x128x128xf32> to vector<128x128xf32>
    %cst_25 = arith.constant dense<0.000000e+00> : vector<32x128xf32>
    %68 = tpu.matmul %65, %67, %cst_25 {dimension_numbers = #tpu.dot_dimension_numbers<[1], [0], [0], [1], [0, 0, 1, 1], [], []>} : vector<32x128xf32>, vector<128x128xf32>, vector<32x128xf32> -> vector<32x128xf32>
    %c0_26 = arith.constant 0 : index
    %c0_27 = arith.constant 0 : index
    %c0_28 = arith.constant 0 : index
    %69 = vector.load %arg6[%c0_26, %c0_27, %c0_28] : memref<2x1x128xf32, #tpu.memory_space<vmem>>, vector<1x1x128xf32>
    %70 = vector.shape_cast %69 : vector<1x1x128xf32> to vector<1x128xf32>
    %71 = vector.broadcast %70 : vector<1x128xf32> to vector<32x128xf32>
    %72 = arith.addf %68, %71 : vector<32x128xf32>
    %c0_29 = arith.constant 0 : index
    %c0_30 = arith.constant 0 : index
    %c0_31 = arith.constant 0 : index
    %73 = vector.load %arg7[%c0_29, %c0_30, %c0_31] : memref<2x1x128xf32, #tpu.memory_space<vmem>>, vector<1x1x128xf32>
    %74 = vector.shape_cast %73 : vector<1x1x128xf32> to vector<1x128xf32>
    %c0_32 = arith.constant 0 : index
    %c0_33 = arith.constant 0 : index
    %c0_34 = arith.constant 0 : index
    %75 = vector.load %arg8[%c0_32, %c0_33, %c0_34] : memref<2x1x128xf32, #tpu.memory_space<vmem>>, vector<1x1x128xf32>
    %76 = vector.shape_cast %75 : vector<1x1x128xf32> to vector<1x128xf32>
    %cst_35 = arith.constant dense<0.000000e+00> : vector<32xf32>
    %77 = vector.multi_reduction <add>, %72, %cst_35 [1] : vector<32x128xf32> to vector<32xf32>
    %78 = vector.shape_cast %77 : vector<32xf32> to vector<32x1xf32>
    %79 = arith.mulf %72, %72 : vector<32x128xf32>
    %cst_36 = arith.constant dense<0.000000e+00> : vector<32xf32>
    %80 = vector.multi_reduction <add>, %79, %cst_36 [1] : vector<32x128xf32> to vector<32xf32>
    %81 = vector.shape_cast %80 : vector<32xf32> to vector<32x1xf32>
    %cst_37 = arith.constant 1.600000e+01 : f32
    %82 = vector.broadcast %cst_37 : f32 to vector<32x1xf32>
    %83 = arith.divf %78, %82 : vector<32x1xf32>
    %cst_38 = arith.constant 1.600000e+01 : f32
    %84 = vector.broadcast %cst_38 : f32 to vector<32x1xf32>
    %85 = arith.divf %81, %84 : vector<32x1xf32>
    %86 = arith.mulf %83, %83 : vector<32x1xf32>
    %87 = arith.subf %85, %86 : vector<32x1xf32>
    %88 = vector.broadcast %83 : vector<32x1xf32> to vector<32x128xf32>
    %89 = arith.subf %72, %88 : vector<32x128xf32>
    %cst_39 = arith.constant 9.99999974E-6 : f32
    %90 = vector.broadcast %cst_39 : f32 to vector<32x1xf32>
    %91 = arith.addf %87, %90 : vector<32x1xf32>
    %92 = math.rsqrt %91 : vector<32x1xf32>
    %93 = vector.broadcast %92 : vector<32x1xf32> to vector<32x128xf32>
    %94 = arith.mulf %89, %93 : vector<32x128xf32>
    %95 = vector.broadcast %74 : vector<1x128xf32> to vector<32x128xf32>
    %96 = arith.mulf %94, %95 : vector<32x128xf32>
    %97 = vector.broadcast %76 : vector<1x128xf32> to vector<32x128xf32>
    %98 = arith.addf %96, %97 : vector<32x128xf32>
    %cst_40 = arith.constant 5.000000e-01 : f32
    %99 = vector.broadcast %cst_40 : f32 to vector<32x128xf32>
    %100 = arith.mulf %99, %98 : vector<32x128xf32>
    %cst_41 = arith.constant 1.41421354 : f32
    %101 = vector.broadcast %cst_41 : f32 to vector<32x128xf32>
    %102 = arith.divf %98, %101 : vector<32x128xf32>
    %103 = math.erf %102 : vector<32x128xf32>
    %cst_42 = arith.constant 1.000000e+00 : f32
    %104 = vector.broadcast %cst_42 : f32 to vector<32x128xf32>
    %105 = arith.addf %104, %103 : vector<32x128xf32>
    %106 = arith.mulf %100, %105 : vector<32x128xf32>
    %107 = vector.broadcast %4 : vector<32x1xf32> to vector<32x128xf32>
    %108 = arith.mulf %106, %107 : vector<32x128xf32>
    %c0_43 = arith.constant 0 : index
    %c0_44 = arith.constant 0 : index
    %c0_45 = arith.constant 0 : index
    %109 = vector.load %arg10[%c0_43, %c0_44, %c0_45] : memref<2x1x128xf32, #tpu.memory_space<vmem>>, vector<1x1x128xf32>
    %110 = vector.shape_cast %109 : vector<1x1x128xf32> to vector<1x128xf32>
    %111 = vector.shape_cast %110 : vector<1x128xf32> to vector<1x128xf32>
    %112 = vector.broadcast %111 : vector<1x128xf32> to vector<32x128xf32>
    %c2_i32 = arith.constant 2 : i32
    %113 = tpu.dynamic_rotate %108 by %c2_i32 dim 0 : vector<32x128xf32>, i32 -> vector<32x128xf32>
    %c-2_i32 = arith.constant -2 : i32
    %114 = vector.broadcast %c-2_i32 : i32 to vector<32x1xi32>
    %115 = arith.addi %31, %114 : vector<32x1xi32>
    %c0_i32_46 = arith.constant 0 : i32
    %116 = vector.broadcast %c0_i32_46 : i32 to vector<32x1xi32>
    %117 = arith.cmpi sge, %115, %116 : vector<32x1xi32>
    %c-2_i32_47 = arith.constant -2 : i32
    %118 = vector.broadcast %c-2_i32_47 : i32 to vector<32x1xi32>
    %119 = arith.addi %31, %118 : vector<32x1xi32>
    %c16_i32_48 = arith.constant 16 : i32
    %120 = vector.broadcast %c16_i32_48 : i32 to vector<32x1xi32>
    %121 = arith.cmpi slt, %119, %120 : vector<32x1xi32>
    %122 = arith.andi %117, %121 : vector<32x1xi1>
    %cst_49 = arith.constant 0.000000e+00 : f32
    %123 = vector.shape_cast %122 : vector<32x1xi1> to vector<32x1xi1>
    %124 = vector.broadcast %123 : vector<32x1xi1> to vector<32x128xi1>
    %125 = vector.broadcast %cst_49 : f32 to vector<32x128xf32>
    %126 = arith.select %124, %113, %125 : vector<32x128xi1>, vector<32x128xf32>
    %c0_50 = arith.constant 0 : index
    %c0_51 = arith.constant 0 : index
    %c0_52 = arith.constant 0 : index
    %c0_53 = arith.constant 0 : index
    %127 = vector.load %arg9[%c0_50, %c0_51, %c0_52, %c0_53] : memref<2x5x128x128xf32, #tpu.memory_space<vmem>>, vector<1x1x128x128xf32>
    %128 = vector.shape_cast %127 : vector<1x1x128x128xf32> to vector<128x128xf32>
    %cst_54 = arith.constant dense<0.000000e+00> : vector<32x128xf32>
    %129 = tpu.matmul %126, %128, %cst_54 {dimension_numbers = #tpu.dot_dimension_numbers<[1], [0], [0], [1], [0, 0, 1, 1], [], []>} : vector<32x128xf32>, vector<128x128xf32>, vector<32x128xf32> -> vector<32x128xf32>
    %130 = arith.addf %112, %129 : vector<32x128xf32>
    %c1_i32_55 = arith.constant 1 : i32
    %131 = tpu.dynamic_rotate %108 by %c1_i32_55 dim 0 : vector<32x128xf32>, i32 -> vector<32x128xf32>
    %c-1_i32 = arith.constant -1 : i32
    %132 = vector.broadcast %c-1_i32 : i32 to vector<32x1xi32>
    %133 = arith.addi %31, %132 : vector<32x1xi32>
    %c0_i32_56 = arith.constant 0 : i32
    %134 = vector.broadcast %c0_i32_56 : i32 to vector<32x1xi32>
    %135 = arith.cmpi sge, %133, %134 : vector<32x1xi32>
    %c-1_i32_57 = arith.constant -1 : i32
    %136 = vector.broadcast %c-1_i32_57 : i32 to vector<32x1xi32>
    %137 = arith.addi %31, %136 : vector<32x1xi32>
    %c16_i32_58 = arith.constant 16 : i32
    %138 = vector.broadcast %c16_i32_58 : i32 to vector<32x1xi32>
    %139 = arith.cmpi slt, %137, %138 : vector<32x1xi32>
    %140 = arith.andi %135, %139 : vector<32x1xi1>
    %cst_59 = arith.constant 0.000000e+00 : f32
    %141 = vector.shape_cast %140 : vector<32x1xi1> to vector<32x1xi1>
    %142 = vector.broadcast %141 : vector<32x1xi1> to vector<32x128xi1>
    %143 = vector.broadcast %cst_59 : f32 to vector<32x128xf32>
    %144 = arith.select %142, %131, %143 : vector<32x128xi1>, vector<32x128xf32>
    %c0_60 = arith.constant 0 : index
    %c1 = arith.constant 1 : index
    %c0_61 = arith.constant 0 : index
    %c0_62 = arith.constant 0 : index
    %145 = vector.load %arg9[%c0_60, %c1, %c0_61, %c0_62] : memref<2x5x128x128xf32, #tpu.memory_space<vmem>>, vector<1x1x128x128xf32>
    %146 = vector.shape_cast %145 : vector<1x1x128x128xf32> to vector<128x128xf32>
    %cst_63 = arith.constant dense<0.000000e+00> : vector<32x128xf32>
    %147 = tpu.matmul %144, %146, %cst_63 {dimension_numbers = #tpu.dot_dimension_numbers<[1], [0], [0], [1], [0, 0, 1, 1], [], []>} : vector<32x128xf32>, vector<128x128xf32>, vector<32x128xf32> -> vector<32x128xf32>
    %148 = arith.addf %130, %147 : vector<32x128xf32>
    %c0_64 = arith.constant 0 : index
    %c2 = arith.constant 2 : index
    %c0_65 = arith.constant 0 : index
    %c0_66 = arith.constant 0 : index
    %149 = vector.load %arg9[%c0_64, %c2, %c0_65, %c0_66] : memref<2x5x128x128xf32, #tpu.memory_space<vmem>>, vector<1x1x128x128xf32>
    %150 = vector.shape_cast %149 : vector<1x1x128x128xf32> to vector<128x128xf32>
    %cst_67 = arith.constant dense<0.000000e+00> : vector<32x128xf32>
    %151 = tpu.matmul %108, %150, %cst_67 {dimension_numbers = #tpu.dot_dimension_numbers<[1], [0], [0], [1], [0, 0, 1, 1], [], []>} : vector<32x128xf32>, vector<128x128xf32>, vector<32x128xf32> -> vector<32x128xf32>
    %152 = arith.addf %148, %151 : vector<32x128xf32>
    %c31_i32 = arith.constant 31 : i32
    %153 = tpu.dynamic_rotate %108 by %c31_i32 dim 0 : vector<32x128xf32>, i32 -> vector<32x128xf32>
    %c1_i32_68 = arith.constant 1 : i32
    %154 = vector.broadcast %c1_i32_68 : i32 to vector<32x1xi32>
    %155 = arith.addi %31, %154 : vector<32x1xi32>
    %c0_i32_69 = arith.constant 0 : i32
    %156 = vector.broadcast %c0_i32_69 : i32 to vector<32x1xi32>
    %157 = arith.cmpi sge, %155, %156 : vector<32x1xi32>
    %c1_i32_70 = arith.constant 1 : i32
    %158 = vector.broadcast %c1_i32_70 : i32 to vector<32x1xi32>
    %159 = arith.addi %31, %158 : vector<32x1xi32>
    %c16_i32_71 = arith.constant 16 : i32
    %160 = vector.broadcast %c16_i32_71 : i32 to vector<32x1xi32>
    %161 = arith.cmpi slt, %159, %160 : vector<32x1xi32>
    %162 = arith.andi %157, %161 : vector<32x1xi1>
    %cst_72 = arith.constant 0.000000e+00 : f32
    %163 = vector.shape_cast %162 : vector<32x1xi1> to vector<32x1xi1>
    %164 = vector.broadcast %163 : vector<32x1xi1> to vector<32x128xi1>
    %165 = vector.broadcast %cst_72 : f32 to vector<32x128xf32>
    %166 = arith.select %164, %153, %165 : vector<32x128xi1>, vector<32x128xf32>
    %c0_73 = arith.constant 0 : index
    %c3 = arith.constant 3 : index
    %c0_74 = arith.constant 0 : index
    %c0_75 = arith.constant 0 : index
    %167 = vector.load %arg9[%c0_73, %c3, %c0_74, %c0_75] : memref<2x5x128x128xf32, #tpu.memory_space<vmem>>, vector<1x1x128x128xf32>
    %168 = vector.shape_cast %167 : vector<1x1x128x128xf32> to vector<128x128xf32>
    %cst_76 = arith.constant dense<0.000000e+00> : vector<32x128xf32>
    %169 = tpu.matmul %166, %168, %cst_76 {dimension_numbers = #tpu.dot_dimension_numbers<[1], [0], [0], [1], [0, 0, 1, 1], [], []>} : vector<32x128xf32>, vector<128x128xf32>, vector<32x128xf32> -> vector<32x128xf32>
    %170 = arith.addf %152, %169 : vector<32x128xf32>
    %c30_i32 = arith.constant 30 : i32
    %171 = tpu.dynamic_rotate %108 by %c30_i32 dim 0 : vector<32x128xf32>, i32 -> vector<32x128xf32>
    %c2_i32_77 = arith.constant 2 : i32
    %172 = vector.broadcast %c2_i32_77 : i32 to vector<32x1xi32>
    %173 = arith.addi %31, %172 : vector<32x1xi32>
    %c0_i32_78 = arith.constant 0 : i32
    %174 = vector.broadcast %c0_i32_78 : i32 to vector<32x1xi32>
    %175 = arith.cmpi sge, %173, %174 : vector<32x1xi32>
    %c2_i32_79 = arith.constant 2 : i32
    %176 = vector.broadcast %c2_i32_79 : i32 to vector<32x1xi32>
    %177 = arith.addi %31, %176 : vector<32x1xi32>
    %c16_i32_80 = arith.constant 16 : i32
    %178 = vector.broadcast %c16_i32_80 : i32 to vector<32x1xi32>
    %179 = arith.cmpi slt, %177, %178 : vector<32x1xi32>
    %180 = arith.andi %175, %179 : vector<32x1xi1>
    %cst_81 = arith.constant 0.000000e+00 : f32
    %181 = vector.shape_cast %180 : vector<32x1xi1> to vector<32x1xi1>
    %182 = vector.broadcast %181 : vector<32x1xi1> to vector<32x128xi1>
    %183 = vector.broadcast %cst_81 : f32 to vector<32x128xf32>
    %184 = arith.select %182, %171, %183 : vector<32x128xi1>, vector<32x128xf32>
    %c0_82 = arith.constant 0 : index
    %c4 = arith.constant 4 : index
    %c0_83 = arith.constant 0 : index
    %c0_84 = arith.constant 0 : index
    %185 = vector.load %arg9[%c0_82, %c4, %c0_83, %c0_84] : memref<2x5x128x128xf32, #tpu.memory_space<vmem>>, vector<1x1x128x128xf32>
    %186 = vector.shape_cast %185 : vector<1x1x128x128xf32> to vector<128x128xf32>
    %cst_85 = arith.constant dense<0.000000e+00> : vector<32x128xf32>
    %187 = tpu.matmul %184, %186, %cst_85 {dimension_numbers = #tpu.dot_dimension_numbers<[1], [0], [0], [1], [0, 0, 1, 1], [], []>} : vector<32x128xf32>, vector<128x128xf32>, vector<32x128xf32> -> vector<32x128xf32>
    %188 = arith.addf %170, %187 : vector<32x128xf32>
    %c0_86 = arith.constant 0 : index
    %c0_87 = arith.constant 0 : index
    %c0_88 = arith.constant 0 : index
    %189 = vector.load %arg11[%c0_86, %c0_87, %c0_88] : memref<2x1x128xf32, #tpu.memory_space<vmem>>, vector<1x1x128xf32>
    %190 = vector.shape_cast %189 : vector<1x1x128xf32> to vector<1x128xf32>
    %c0_89 = arith.constant 0 : index
    %c0_90 = arith.constant 0 : index
    %c0_91 = arith.constant 0 : index
    %191 = vector.load %arg12[%c0_89, %c0_90, %c0_91] : memref<2x1x128xf32, #tpu.memory_space<vmem>>, vector<1x1x128xf32>
    %192 = vector.shape_cast %191 : vector<1x1x128xf32> to vector<1x128xf32>
    %cst_92 = arith.constant dense<0.000000e+00> : vector<32xf32>
    %193 = vector.multi_reduction <add>, %188, %cst_92 [1] : vector<32x128xf32> to vector<32xf32>
    %194 = vector.shape_cast %193 : vector<32xf32> to vector<32x1xf32>
    %195 = arith.mulf %188, %188 : vector<32x128xf32>
    %cst_93 = arith.constant dense<0.000000e+00> : vector<32xf32>
    %196 = vector.multi_reduction <add>, %195, %cst_93 [1] : vector<32x128xf32> to vector<32xf32>
    %197 = vector.shape_cast %196 : vector<32xf32> to vector<32x1xf32>
    %cst_94 = arith.constant 1.600000e+01 : f32
    %198 = vector.broadcast %cst_94 : f32 to vector<32x1xf32>
    %199 = arith.divf %194, %198 : vector<32x1xf32>
    %cst_95 = arith.constant 1.600000e+01 : f32
    %200 = vector.broadcast %cst_95 : f32 to vector<32x1xf32>
    %201 = arith.divf %197, %200 : vector<32x1xf32>
    %202 = arith.mulf %199, %199 : vector<32x1xf32>
    %203 = arith.subf %201, %202 : vector<32x1xf32>
    %204 = vector.broadcast %199 : vector<32x1xf32> to vector<32x128xf32>
    %205 = arith.subf %188, %204 : vector<32x128xf32>
    %cst_96 = arith.constant 9.99999974E-6 : f32
    %206 = vector.broadcast %cst_96 : f32 to vector<32x1xf32>
    %207 = arith.addf %203, %206 : vector<32x1xf32>
    %208 = math.rsqrt %207 : vector<32x1xf32>
    %209 = vector.broadcast %208 : vector<32x1xf32> to vector<32x128xf32>
    %210 = arith.mulf %205, %209 : vector<32x128xf32>
    %211 = vector.broadcast %190 : vector<1x128xf32> to vector<32x128xf32>
    %212 = arith.mulf %210, %211 : vector<32x128xf32>
    %213 = vector.broadcast %192 : vector<1x128xf32> to vector<32x128xf32>
    %214 = arith.addf %212, %213 : vector<32x128xf32>
    %cst_97 = arith.constant 5.000000e-01 : f32
    %215 = vector.broadcast %cst_97 : f32 to vector<32x128xf32>
    %216 = arith.mulf %215, %214 : vector<32x128xf32>
    %cst_98 = arith.constant 1.41421354 : f32
    %217 = vector.broadcast %cst_98 : f32 to vector<32x128xf32>
    %218 = arith.divf %214, %217 : vector<32x128xf32>
    %219 = math.erf %218 : vector<32x128xf32>
    %cst_99 = arith.constant 1.000000e+00 : f32
    %220 = vector.broadcast %cst_99 : f32 to vector<32x128xf32>
    %221 = arith.addf %220, %219 : vector<32x128xf32>
    %222 = arith.mulf %216, %221 : vector<32x128xf32>
    %c0_100 = arith.constant 0 : index
    %c0_101 = arith.constant 0 : index
    %c0_102 = arith.constant 0 : index
    %223 = vector.load %arg13[%c0_100, %c0_101, %c0_102] : memref<2x128x128xf32, #tpu.memory_space<vmem>>, vector<1x128x128xf32>
    %224 = vector.shape_cast %223 : vector<1x128x128xf32> to vector<128x128xf32>
    %cst_103 = arith.constant dense<0.000000e+00> : vector<32x128xf32>
    %225 = tpu.matmul %222, %224, %cst_103 {dimension_numbers = #tpu.dot_dimension_numbers<[1], [0], [0], [1], [0, 0, 1, 1], [], []>} : vector<32x128xf32>, vector<128x128xf32>, vector<32x128xf32> -> vector<32x128xf32>
    %c0_104 = arith.constant 0 : index
    %c0_105 = arith.constant 0 : index
    %c0_106 = arith.constant 0 : index
    %226 = vector.load %arg14[%c0_104, %c0_105, %c0_106] : memref<2x1x128xf32, #tpu.memory_space<vmem>>, vector<1x1x128xf32>
    %227 = vector.shape_cast %226 : vector<1x1x128xf32> to vector<1x128xf32>
    %228 = vector.broadcast %227 : vector<1x128xf32> to vector<32x128xf32>
    %229 = arith.addf %225, %228 : vector<32x128xf32>
    %230 = arith.addf %14, %229 : vector<32x128xf32>
    %c1_107 = arith.constant 1 : index
    %c0_108 = arith.constant 0 : index
    %c0_109 = arith.constant 0 : index
    %231 = vector.load %arg3[%c1_107, %c0_108, %c0_109] : memref<2x1x128xf32, #tpu.memory_space<vmem>>, vector<1x1x128xf32>
    %232 = vector.shape_cast %231 : vector<1x1x128xf32> to vector<1x128xf32>
    %c1_110 = arith.constant 1 : index
    %c0_111 = arith.constant 0 : index
    %c0_112 = arith.constant 0 : index
    %233 = vector.load %arg4[%c1_110, %c0_111, %c0_112] : memref<2x1x128xf32, #tpu.memory_space<vmem>>, vector<1x1x128xf32>
    %234 = vector.shape_cast %233 : vector<1x1x128xf32> to vector<1x128xf32>
    %cst_113 = arith.constant dense<0.000000e+00> : vector<32xf32>
    %235 = vector.multi_reduction <add>, %230, %cst_113 [1] : vector<32x128xf32> to vector<32xf32>
    %236 = vector.shape_cast %235 : vector<32xf32> to vector<32x1xf32>
    %237 = arith.mulf %230, %230 : vector<32x128xf32>
    %cst_114 = arith.constant dense<0.000000e+00> : vector<32xf32>
    %238 = vector.multi_reduction <add>, %237, %cst_114 [1] : vector<32x128xf32> to vector<32xf32>
    %239 = vector.shape_cast %238 : vector<32xf32> to vector<32x1xf32>
    %cst_115 = arith.constant 3.200000e+01 : f32
    %240 = vector.broadcast %cst_115 : f32 to vector<32x1xf32>
    %241 = arith.divf %236, %240 : vector<32x1xf32>
    %cst_116 = arith.constant 3.200000e+01 : f32
    %242 = vector.broadcast %cst_116 : f32 to vector<32x1xf32>
    %243 = arith.divf %239, %242 : vector<32x1xf32>
    %244 = arith.mulf %241, %241 : vector<32x1xf32>
    %245 = arith.subf %243, %244 : vector<32x1xf32>
    %246 = vector.broadcast %241 : vector<32x1xf32> to vector<32x128xf32>
    %247 = arith.subf %230, %246 : vector<32x128xf32>
    %cst_117 = arith.constant 9.99999974E-6 : f32
    %248 = vector.broadcast %cst_117 : f32 to vector<32x1xf32>
    %249 = arith.addf %245, %248 : vector<32x1xf32>
    %250 = math.rsqrt %249 : vector<32x1xf32>
    %251 = vector.broadcast %250 : vector<32x1xf32> to vector<32x128xf32>
    %252 = arith.mulf %247, %251 : vector<32x128xf32>
    %253 = vector.broadcast %232 : vector<1x128xf32> to vector<32x128xf32>
    %254 = arith.mulf %252, %253 : vector<32x128xf32>
    %255 = vector.broadcast %234 : vector<1x128xf32> to vector<32x128xf32>
    %256 = arith.addf %254, %255 : vector<32x128xf32>
    %cst_118 = arith.constant 5.000000e-01 : f32
    %257 = vector.broadcast %cst_118 : f32 to vector<32x128xf32>
    %258 = arith.mulf %257, %256 : vector<32x128xf32>
    %cst_119 = arith.constant 1.41421354 : f32
    %259 = vector.broadcast %cst_119 : f32 to vector<32x128xf32>
    %260 = arith.divf %256, %259 : vector<32x128xf32>
    %261 = math.erf %260 : vector<32x128xf32>
    %cst_120 = arith.constant 1.000000e+00 : f32
    %262 = vector.broadcast %cst_120 : f32 to vector<32x128xf32>
    %263 = arith.addf %262, %261 : vector<32x128xf32>
    %264 = arith.mulf %258, %263 : vector<32x128xf32>
    %c1_121 = arith.constant 1 : index
    %c0_122 = arith.constant 0 : index
    %c0_123 = arith.constant 0 : index
    %265 = vector.load %arg5[%c1_121, %c0_122, %c0_123] : memref<2x128x128xf32, #tpu.memory_space<vmem>>, vector<1x128x128xf32>
    %266 = vector.shape_cast %265 : vector<1x128x128xf32> to vector<128x128xf32>
    %cst_124 = arith.constant dense<0.000000e+00> : vector<32x128xf32>
    %267 = tpu.matmul %264, %266, %cst_124 {dimension_numbers = #tpu.dot_dimension_numbers<[1], [0], [0], [1], [0, 0, 1, 1], [], []>} : vector<32x128xf32>, vector<128x128xf32>, vector<32x128xf32> -> vector<32x128xf32>
    %c1_125 = arith.constant 1 : index
    %c0_126 = arith.constant 0 : index
    %c0_127 = arith.constant 0 : index
    %268 = vector.load %arg6[%c1_125, %c0_126, %c0_127] : memref<2x1x128xf32, #tpu.memory_space<vmem>>, vector<1x1x128xf32>
    %269 = vector.shape_cast %268 : vector<1x1x128xf32> to vector<1x128xf32>
    %270 = vector.broadcast %269 : vector<1x128xf32> to vector<32x128xf32>
    %271 = arith.addf %267, %270 : vector<32x128xf32>
    %c1_128 = arith.constant 1 : index
    %c0_129 = arith.constant 0 : index
    %c0_130 = arith.constant 0 : index
    %272 = vector.load %arg7[%c1_128, %c0_129, %c0_130] : memref<2x1x128xf32, #tpu.memory_space<vmem>>, vector<1x1x128xf32>
    %273 = vector.shape_cast %272 : vector<1x1x128xf32> to vector<1x128xf32>
    %c1_131 = arith.constant 1 : index
    %c0_132 = arith.constant 0 : index
    %c0_133 = arith.constant 0 : index
    %274 = vector.load %arg8[%c1_131, %c0_132, %c0_133] : memref<2x1x128xf32, #tpu.memory_space<vmem>>, vector<1x1x128xf32>
    %275 = vector.shape_cast %274 : vector<1x1x128xf32> to vector<1x128xf32>
    %cst_134 = arith.constant dense<0.000000e+00> : vector<32xf32>
    %276 = vector.multi_reduction <add>, %271, %cst_134 [1] : vector<32x128xf32> to vector<32xf32>
    %277 = vector.shape_cast %276 : vector<32xf32> to vector<32x1xf32>
    %278 = arith.mulf %271, %271 : vector<32x128xf32>
    %cst_135 = arith.constant dense<0.000000e+00> : vector<32xf32>
    %279 = vector.multi_reduction <add>, %278, %cst_135 [1] : vector<32x128xf32> to vector<32xf32>
    %280 = vector.shape_cast %279 : vector<32xf32> to vector<32x1xf32>
    %cst_136 = arith.constant 1.600000e+01 : f32
    %281 = vector.broadcast %cst_136 : f32 to vector<32x1xf32>
    %282 = arith.divf %277, %281 : vector<32x1xf32>
    %cst_137 = arith.constant 1.600000e+01 : f32
    %283 = vector.broadcast %cst_137 : f32 to vector<32x1xf32>
    %284 = arith.divf %280, %283 : vector<32x1xf32>
    %285 = arith.mulf %282, %282 : vector<32x1xf32>
    %286 = arith.subf %284, %285 : vector<32x1xf32>
    %287 = vector.broadcast %282 : vector<32x1xf32> to vector<32x128xf32>
    %288 = arith.subf %271, %287 : vector<32x128xf32>
    %cst_138 = arith.constant 9.99999974E-6 : f32
    %289 = vector.broadcast %cst_138 : f32 to vector<32x1xf32>
    %290 = arith.addf %286, %289 : vector<32x1xf32>
    %291 = math.rsqrt %290 : vector<32x1xf32>
    %292 = vector.broadcast %291 : vector<32x1xf32> to vector<32x128xf32>
    %293 = arith.mulf %288, %292 : vector<32x128xf32>
    %294 = vector.broadcast %273 : vector<1x128xf32> to vector<32x128xf32>
    %295 = arith.mulf %293, %294 : vector<32x128xf32>
    %296 = vector.broadcast %275 : vector<1x128xf32> to vector<32x128xf32>
    %297 = arith.addf %295, %296 : vector<32x128xf32>
    %cst_139 = arith.constant 5.000000e-01 : f32
    %298 = vector.broadcast %cst_139 : f32 to vector<32x128xf32>
    %299 = arith.mulf %298, %297 : vector<32x128xf32>
    %cst_140 = arith.constant 1.41421354 : f32
    %300 = vector.broadcast %cst_140 : f32 to vector<32x128xf32>
    %301 = arith.divf %297, %300 : vector<32x128xf32>
    %302 = math.erf %301 : vector<32x128xf32>
    %cst_141 = arith.constant 1.000000e+00 : f32
    %303 = vector.broadcast %cst_141 : f32 to vector<32x128xf32>
    %304 = arith.addf %303, %302 : vector<32x128xf32>
    %305 = arith.mulf %299, %304 : vector<32x128xf32>
    %306 = vector.broadcast %4 : vector<32x1xf32> to vector<32x128xf32>
    %307 = arith.mulf %305, %306 : vector<32x128xf32>
    %c1_142 = arith.constant 1 : index
    %c0_143 = arith.constant 0 : index
    %c0_144 = arith.constant 0 : index
    %308 = vector.load %arg10[%c1_142, %c0_143, %c0_144] : memref<2x1x128xf32, #tpu.memory_space<vmem>>, vector<1x1x128xf32>
    %309 = vector.shape_cast %308 : vector<1x1x128xf32> to vector<1x128xf32>
    %310 = vector.shape_cast %309 : vector<1x128xf32> to vector<1x128xf32>
    %311 = vector.broadcast %310 : vector<1x128xf32> to vector<32x128xf32>
    %c4_i32 = arith.constant 4 : i32
    %312 = tpu.dynamic_rotate %307 by %c4_i32 dim 0 : vector<32x128xf32>, i32 -> vector<32x128xf32>
    %c-4_i32 = arith.constant -4 : i32
    %313 = vector.broadcast %c-4_i32 : i32 to vector<32x1xi32>
    %314 = arith.addi %31, %313 : vector<32x1xi32>
    %c0_i32_145 = arith.constant 0 : i32
    %315 = vector.broadcast %c0_i32_145 : i32 to vector<32x1xi32>
    %316 = arith.cmpi sge, %314, %315 : vector<32x1xi32>
    %c-4_i32_146 = arith.constant -4 : i32
    %317 = vector.broadcast %c-4_i32_146 : i32 to vector<32x1xi32>
    %318 = arith.addi %31, %317 : vector<32x1xi32>
    %c16_i32_147 = arith.constant 16 : i32
    %319 = vector.broadcast %c16_i32_147 : i32 to vector<32x1xi32>
    %320 = arith.cmpi slt, %318, %319 : vector<32x1xi32>
    %321 = arith.andi %316, %320 : vector<32x1xi1>
    %cst_148 = arith.constant 0.000000e+00 : f32
    %322 = vector.shape_cast %321 : vector<32x1xi1> to vector<32x1xi1>
    %323 = vector.broadcast %322 : vector<32x1xi1> to vector<32x128xi1>
    %324 = vector.broadcast %cst_148 : f32 to vector<32x128xf32>
    %325 = arith.select %323, %312, %324 : vector<32x128xi1>, vector<32x128xf32>
    %c1_149 = arith.constant 1 : index
    %c0_150 = arith.constant 0 : index
    %c0_151 = arith.constant 0 : index
    %c0_152 = arith.constant 0 : index
    %326 = vector.load %arg9[%c1_149, %c0_150, %c0_151, %c0_152] : memref<2x5x128x128xf32, #tpu.memory_space<vmem>>, vector<1x1x128x128xf32>
    %327 = vector.shape_cast %326 : vector<1x1x128x128xf32> to vector<128x128xf32>
    %cst_153 = arith.constant dense<0.000000e+00> : vector<32x128xf32>
    %328 = tpu.matmul %325, %327, %cst_153 {dimension_numbers = #tpu.dot_dimension_numbers<[1], [0], [0], [1], [0, 0, 1, 1], [], []>} : vector<32x128xf32>, vector<128x128xf32>, vector<32x128xf32> -> vector<32x128xf32>
    %329 = arith.addf %311, %328 : vector<32x128xf32>
    %c2_i32_154 = arith.constant 2 : i32
    %330 = tpu.dynamic_rotate %307 by %c2_i32_154 dim 0 : vector<32x128xf32>, i32 -> vector<32x128xf32>
    %c-2_i32_155 = arith.constant -2 : i32
    %331 = vector.broadcast %c-2_i32_155 : i32 to vector<32x1xi32>
    %332 = arith.addi %31, %331 : vector<32x1xi32>
    %c0_i32_156 = arith.constant 0 : i32
    %333 = vector.broadcast %c0_i32_156 : i32 to vector<32x1xi32>
    %334 = arith.cmpi sge, %332, %333 : vector<32x1xi32>
    %c-2_i32_157 = arith.constant -2 : i32
    %335 = vector.broadcast %c-2_i32_157 : i32 to vector<32x1xi32>
    %336 = arith.addi %31, %335 : vector<32x1xi32>
    %c16_i32_158 = arith.constant 16 : i32
    %337 = vector.broadcast %c16_i32_158 : i32 to vector<32x1xi32>
    %338 = arith.cmpi slt, %336, %337 : vector<32x1xi32>
    %339 = arith.andi %334, %338 : vector<32x1xi1>
    %cst_159 = arith.constant 0.000000e+00 : f32
    %340 = vector.shape_cast %339 : vector<32x1xi1> to vector<32x1xi1>
    %341 = vector.broadcast %340 : vector<32x1xi1> to vector<32x128xi1>
    %342 = vector.broadcast %cst_159 : f32 to vector<32x128xf32>
    %343 = arith.select %341, %330, %342 : vector<32x128xi1>, vector<32x128xf32>
    %c1_160 = arith.constant 1 : index
    %c1_161 = arith.constant 1 : index
    %c0_162 = arith.constant 0 : index
    %c0_163 = arith.constant 0 : index
    %344 = vector.load %arg9[%c1_160, %c1_161, %c0_162, %c0_163] : memref<2x5x128x128xf32, #tpu.memory_space<vmem>>, vector<1x1x128x128xf32>
    %345 = vector.shape_cast %344 : vector<1x1x128x128xf32> to vector<128x128xf32>
    %cst_164 = arith.constant dense<0.000000e+00> : vector<32x128xf32>
    %346 = tpu.matmul %343, %345, %cst_164 {dimension_numbers = #tpu.dot_dimension_numbers<[1], [0], [0], [1], [0, 0, 1, 1], [], []>} : vector<32x128xf32>, vector<128x128xf32>, vector<32x128xf32> -> vector<32x128xf32>
    %347 = arith.addf %329, %346 : vector<32x128xf32>
    %c1_165 = arith.constant 1 : index
    %c2_166 = arith.constant 2 : index
    %c0_167 = arith.constant 0 : index
    %c0_168 = arith.constant 0 : index
    %348 = vector.load %arg9[%c1_165, %c2_166, %c0_167, %c0_168] : memref<2x5x128x128xf32, #tpu.memory_space<vmem>>, vector<1x1x128x128xf32>
    %349 = vector.shape_cast %348 : vector<1x1x128x128xf32> to vector<128x128xf32>
    %cst_169 = arith.constant dense<0.000000e+00> : vector<32x128xf32>
    %350 = tpu.matmul %307, %349, %cst_169 {dimension_numbers = #tpu.dot_dimension_numbers<[1], [0], [0], [1], [0, 0, 1, 1], [], []>} : vector<32x128xf32>, vector<128x128xf32>, vector<32x128xf32> -> vector<32x128xf32>
    %351 = arith.addf %347, %350 : vector<32x128xf32>
    %c30_i32_170 = arith.constant 30 : i32
    %352 = tpu.dynamic_rotate %307 by %c30_i32_170 dim 0 : vector<32x128xf32>, i32 -> vector<32x128xf32>
    %c2_i32_171 = arith.constant 2 : i32
    %353 = vector.broadcast %c2_i32_171 : i32 to vector<32x1xi32>
    %354 = arith.addi %31, %353 : vector<32x1xi32>
    %c0_i32_172 = arith.constant 0 : i32
    %355 = vector.broadcast %c0_i32_172 : i32 to vector<32x1xi32>
    %356 = arith.cmpi sge, %354, %355 : vector<32x1xi32>
    %c2_i32_173 = arith.constant 2 : i32
    %357 = vector.broadcast %c2_i32_173 : i32 to vector<32x1xi32>
    %358 = arith.addi %31, %357 : vector<32x1xi32>
    %c16_i32_174 = arith.constant 16 : i32
    %359 = vector.broadcast %c16_i32_174 : i32 to vector<32x1xi32>
    %360 = arith.cmpi slt, %358, %359 : vector<32x1xi32>
    %361 = arith.andi %356, %360 : vector<32x1xi1>
    %cst_175 = arith.constant 0.000000e+00 : f32
    %362 = vector.shape_cast %361 : vector<32x1xi1> to vector<32x1xi1>
    %363 = vector.broadcast %362 : vector<32x1xi1> to vector<32x128xi1>
    %364 = vector.broadcast %cst_175 : f32 to vector<32x128xf32>
    %365 = arith.select %363, %352, %364 : vector<32x128xi1>, vector<32x128xf32>
    %c1_176 = arith.constant 1 : index
    %c3_177 = arith.constant 3 : index
    %c0_178 = arith.constant 0 : index
    %c0_179 = arith.constant 0 : index
    %366 = vector.load %arg9[%c1_176, %c3_177, %c0_178, %c0_179] : memref<2x5x128x128xf32, #tpu.memory_space<vmem>>, vector<1x1x128x128xf32>
    %367 = vector.shape_cast %366 : vector<1x1x128x128xf32> to vector<128x128xf32>
    %cst_180 = arith.constant dense<0.000000e+00> : vector<32x128xf32>
    %368 = tpu.matmul %365, %367, %cst_180 {dimension_numbers = #tpu.dot_dimension_numbers<[1], [0], [0], [1], [0, 0, 1, 1], [], []>} : vector<32x128xf32>, vector<128x128xf32>, vector<32x128xf32> -> vector<32x128xf32>
    %369 = arith.addf %351, %368 : vector<32x128xf32>
    %c28_i32 = arith.constant 28 : i32
    %370 = tpu.dynamic_rotate %307 by %c28_i32 dim 0 : vector<32x128xf32>, i32 -> vector<32x128xf32>
    %c4_i32_181 = arith.constant 4 : i32
    %371 = vector.broadcast %c4_i32_181 : i32 to vector<32x1xi32>
    %372 = arith.addi %31, %371 : vector<32x1xi32>
    %c0_i32_182 = arith.constant 0 : i32
    %373 = vector.broadcast %c0_i32_182 : i32 to vector<32x1xi32>
    %374 = arith.cmpi sge, %372, %373 : vector<32x1xi32>
    %c4_i32_183 = arith.constant 4 : i32
    %375 = vector.broadcast %c4_i32_183 : i32 to vector<32x1xi32>
    %376 = arith.addi %31, %375 : vector<32x1xi32>
    %c16_i32_184 = arith.constant 16 : i32
    %377 = vector.broadcast %c16_i32_184 : i32 to vector<32x1xi32>
    %378 = arith.cmpi slt, %376, %377 : vector<32x1xi32>
    %379 = arith.andi %374, %378 : vector<32x1xi1>
    %cst_185 = arith.constant 0.000000e+00 : f32
    %380 = vector.shape_cast %379 : vector<32x1xi1> to vector<32x1xi1>
    %381 = vector.broadcast %380 : vector<32x1xi1> to vector<32x128xi1>
    %382 = vector.broadcast %cst_185 : f32 to vector<32x128xf32>
    %383 = arith.select %381, %370, %382 : vector<32x128xi1>, vector<32x128xf32>
    %c1_186 = arith.constant 1 : index
    %c4_187 = arith.constant 4 : index
    %c0_188 = arith.constant 0 : index
    %c0_189 = arith.constant 0 : index
    %384 = vector.load %arg9[%c1_186, %c4_187, %c0_188, %c0_189] : memref<2x5x128x128xf32, #tpu.memory_space<vmem>>, vector<1x1x128x128xf32>
    %385 = vector.shape_cast %384 : vector<1x1x128x128xf32> to vector<128x128xf32>
    %cst_190 = arith.constant dense<0.000000e+00> : vector<32x128xf32>
    %386 = tpu.matmul %383, %385, %cst_190 {dimension_numbers = #tpu.dot_dimension_numbers<[1], [0], [0], [1], [0, 0, 1, 1], [], []>} : vector<32x128xf32>, vector<128x128xf32>, vector<32x128xf32> -> vector<32x128xf32>
    %387 = arith.addf %369, %386 : vector<32x128xf32>
    %c1_191 = arith.constant 1 : index
    %c0_192 = arith.constant 0 : index
    %c0_193 = arith.constant 0 : index
    %388 = vector.load %arg11[%c1_191, %c0_192, %c0_193] : memref<2x1x128xf32, #tpu.memory_space<vmem>>, vector<1x1x128xf32>
    %389 = vector.shape_cast %388 : vector<1x1x128xf32> to vector<1x128xf32>
    %c1_194 = arith.constant 1 : index
    %c0_195 = arith.constant 0 : index
    %c0_196 = arith.constant 0 : index
    %390 = vector.load %arg12[%c1_194, %c0_195, %c0_196] : memref<2x1x128xf32, #tpu.memory_space<vmem>>, vector<1x1x128xf32>
    %391 = vector.shape_cast %390 : vector<1x1x128xf32> to vector<1x128xf32>
    %cst_197 = arith.constant dense<0.000000e+00> : vector<32xf32>
    %392 = vector.multi_reduction <add>, %387, %cst_197 [1] : vector<32x128xf32> to vector<32xf32>
    %393 = vector.shape_cast %392 : vector<32xf32> to vector<32x1xf32>
    %394 = arith.mulf %387, %387 : vector<32x128xf32>
    %cst_198 = arith.constant dense<0.000000e+00> : vector<32xf32>
    %395 = vector.multi_reduction <add>, %394, %cst_198 [1] : vector<32x128xf32> to vector<32xf32>
    %396 = vector.shape_cast %395 : vector<32xf32> to vector<32x1xf32>
    %cst_199 = arith.constant 1.600000e+01 : f32
    %397 = vector.broadcast %cst_199 : f32 to vector<32x1xf32>
    %398 = arith.divf %393, %397 : vector<32x1xf32>
    %cst_200 = arith.constant 1.600000e+01 : f32
    %399 = vector.broadcast %cst_200 : f32 to vector<32x1xf32>
    %400 = arith.divf %396, %399 : vector<32x1xf32>
    %401 = arith.mulf %398, %398 : vector<32x1xf32>
    %402 = arith.subf %400, %401 : vector<32x1xf32>
    %403 = vector.broadcast %398 : vector<32x1xf32> to vector<32x128xf32>
    %404 = arith.subf %387, %403 : vector<32x128xf32>
    %cst_201 = arith.constant 9.99999974E-6 : f32
    %405 = vector.broadcast %cst_201 : f32 to vector<32x1xf32>
    %406 = arith.addf %402, %405 : vector<32x1xf32>
    %407 = math.rsqrt %406 : vector<32x1xf32>
    %408 = vector.broadcast %407 : vector<32x1xf32> to vector<32x128xf32>
    %409 = arith.mulf %404, %408 : vector<32x128xf32>
    %410 = vector.broadcast %389 : vector<1x128xf32> to vector<32x128xf32>
    %411 = arith.mulf %409, %410 : vector<32x128xf32>
    %412 = vector.broadcast %391 : vector<1x128xf32> to vector<32x128xf32>
    %413 = arith.addf %411, %412 : vector<32x128xf32>
    %cst_202 = arith.constant 5.000000e-01 : f32
    %414 = vector.broadcast %cst_202 : f32 to vector<32x128xf32>
    %415 = arith.mulf %414, %413 : vector<32x128xf32>
    %cst_203 = arith.constant 1.41421354 : f32
    %416 = vector.broadcast %cst_203 : f32 to vector<32x128xf32>
    %417 = arith.divf %413, %416 : vector<32x128xf32>
    %418 = math.erf %417 : vector<32x128xf32>
    %cst_204 = arith.constant 1.000000e+00 : f32
    %419 = vector.broadcast %cst_204 : f32 to vector<32x128xf32>
    %420 = arith.addf %419, %418 : vector<32x128xf32>
    %421 = arith.mulf %415, %420 : vector<32x128xf32>
    %c1_205 = arith.constant 1 : index
    %c0_206 = arith.constant 0 : index
    %c0_207 = arith.constant 0 : index
    %422 = vector.load %arg13[%c1_205, %c0_206, %c0_207] : memref<2x128x128xf32, #tpu.memory_space<vmem>>, vector<1x128x128xf32>
    %423 = vector.shape_cast %422 : vector<1x128x128xf32> to vector<128x128xf32>
    %cst_208 = arith.constant dense<0.000000e+00> : vector<32x128xf32>
    %424 = tpu.matmul %421, %423, %cst_208 {dimension_numbers = #tpu.dot_dimension_numbers<[1], [0], [0], [1], [0, 0, 1, 1], [], []>} : vector<32x128xf32>, vector<128x128xf32>, vector<32x128xf32> -> vector<32x128xf32>
    %c1_209 = arith.constant 1 : index
    %c0_210 = arith.constant 0 : index
    %c0_211 = arith.constant 0 : index
    %425 = vector.load %arg14[%c1_209, %c0_210, %c0_211] : memref<2x1x128xf32, #tpu.memory_space<vmem>>, vector<1x1x128xf32>
    %426 = vector.shape_cast %425 : vector<1x1x128xf32> to vector<1x128xf32>
    %427 = vector.broadcast %426 : vector<1x128xf32> to vector<32x128xf32>
    %428 = arith.addf %424, %427 : vector<32x128xf32>
    %429 = arith.addf %230, %428 : vector<32x128xf32>
    %c0_212 = arith.constant 0 : index
    %c0_213 = arith.constant 0 : index
    %430 = vector.load %arg19[%c0_212, %c0_213] : memref<32x128xf32, #tpu.memory_space<vmem>>, vector<32x128xf32>
    tpu.vector_store %arg19[%c0_212, %c0_213], %429 {strides = array<i32>} : memref<32x128xf32, #tpu.memory_space<vmem>>, vector<32x128xf32>,
    return
  }
}

</mosaic_0001>

<llo_original>
// kernel: tpu_custom_call.1
$region0: #{tpu_custom_call.1}
  #allocation0 [shape = 'u32[]', space=smem, size = 0x4, offset = 0x4, fixed_abs, tag = 'smem constant byte address 0x4 - core index']
  #allocation1 [shape = 'u32[72,128]{1,0:T(1,128)}', space=vmem, size = 0x9000, scoped, tag = 'internal scratch']
  %s0 = inlined_call_operand.vmem [shape: s32[32,1], index: 0, kind: input, shape index: {}]
  %s1 = inlined_call_operand.hbm [shape: f32[128,128], index: 1, kind: input, shape index: {}]
  %s2 = inlined_call_operand.vmem [shape: f32[1,128], index: 2, kind: input, shape index: {}]
  %s3 = inlined_call_operand.vmem [shape: f32[2,1,128], index: 3, kind: input, shape index: {}]
  %s4 = inlined_call_operand.vmem [shape: f32[2,1,128], index: 4, kind: input, shape index: {}]
  %s5 = inlined_call_operand.hbm [shape: f32[2,128,128], index: 5, kind: input, shape index: {}]
  %s6 = inlined_call_operand.vmem [shape: f32[2,1,128], index: 6, kind: input, shape index: {}]
  %s7 = inlined_call_operand.vmem [shape: f32[2,1,128], index: 7, kind: input, shape index: {}]
  %s8 = inlined_call_operand.vmem [shape: f32[2,1,128], index: 8, kind: input, shape index: {}]
  %s9 = inlined_call_operand.hbm [shape: f32[2,5,128,128], index: 9, kind: input, shape index: {}]
  %s10 = inlined_call_operand.vmem [shape: f32[2,1,128], index: 10, kind: input, shape index: {}]
  %s11 = inlined_call_operand.vmem [shape: f32[2,1,128], index: 11, kind: input, shape index: {}]
  %s12 = inlined_call_operand.vmem [shape: f32[2,1,128], index: 12, kind: input, shape index: {}]
  %s13 = inlined_call_operand.hbm [shape: f32[2,128,128], index: 13, kind: input, shape index: {}]
  %s14 = inlined_call_operand.vmem [shape: f32[2,1,128], index: 14, kind: input, shape index: {}]
  %s15 = inlined_call_operand.vmem [shape: f32[1,128], index: 15, kind: input, shape index: {}]
  %s16 = inlined_call_operand.vmem [shape: f32[1,128], index: 16, kind: input, shape index: {}]
  %s17 = inlined_call_operand.hbm [shape: f32[128,128], index: 17, kind: input, shape index: {}]
  %s18 = inlined_call_operand.vmem [shape: f32[1,128], index: 18, kind: input, shape index: {}]
  %s19 = inlined_call_operand.hbm [shape: f32[32,128], index: 19, kind: output, shape index: {}]
  %s20 = sld [smem:[#allocation0]]
  $region106: #{tpu_custom_call.1} parent=0
    _
  %s22 = ssub.s32 1, %s20
  %s23 = scalar_select 0, %s22, %s20
  $region1: #{tpu_custom_call.1} parent=0
    #allocation2 [shape = 'u8[65536]{0}', space=vmem, size = 0x10000, scoped, tag = 'input window, operand 1, single buffered']
    #allocation3 [shape = 's32[1]{0}', space=sflag, size = 0x4, scoped, tag = 'scoped memory for tpu_custom_call.1']
    #allocation4 [shape = 's32[1]{0}', space=sflag, size = 0x4, scoped, tag = 'scoped memory for tpu_custom_call.1']
    #allocation5 [shape = 'u8[131072]{0}', space=vmem, size = 0x20000, scoped, tag = 'input window, operand 5, single buffered']
    #allocation6 [shape = 's32[1]{0}', space=sflag, size = 0x4, scoped, tag = 'scoped memory for tpu_custom_call.1']
    #allocation7 [shape = 'u8[655360]{0}', space=vmem, size = 0xa0000, scoped, tag = 'input window, operand 9, single buffered']
    #allocation8 [shape = 'u8[131072]{0}', space=vmem, size = 0x20000, scoped, tag = 'input window, operand 13, single buffered']
    #allocation9 [shape = 's32[1]{0}', space=sflag, size = 0x4, scoped, tag = 'scoped memory for tpu_custom_call.1']
    #allocation10 [shape = 'u8[65536]{0}', space=vmem, size = 0x10000, scoped, tag = 'input window, operand 17, single buffered']
    #allocation11 [shape = 'u8[16384]{0}', space=vmem, size = 0x4000, scoped, tag = 'output window, operand 0, single buffered']
    %24 = vsyncpa [#allocation3], 0
    %25 = vsyncpa [#allocation6], 0
    %26 = vsyncpa [#allocation9], 0
    %27 = vsyncpa [#allocation4], 0
    // Predicated region
    $region2: #{tpu_custom_call.1} parent=1 // pred_check
      _
    $region3: #{tpu_custom_call.1} parent=1 // pred_check_branch
      %29 = sbr.rel (0) target = $region5
    $region4: #{tpu_custom_call.1} parent=1 // pred_region
      _
    $region5: #{tpu_custom_call.1} parent=1 // pred_fallthru
      _
    // Predicated region
    $region6: #{tpu_custom_call.1} parent=1 // pred_check
      _
    $region7: #{tpu_custom_call.1} parent=1 // pred_check_branch
      %31 = sbr.rel (0) target = $region9
    $region8: #{tpu_custom_call.1} parent=1 // pred_region
      %33 = vsyncadd [#allocation3], 0
      %s34 = sshll.u32 %s1, 4
      %s35 = int_to_ptr.hbm [resolvable:$true] %s34
      %s36 = sshll.u32 [#allocation2], 4
      %s37 = int_to_ptr.vmem [resolvable:$true] %s36
      %42 = dma.hbm_to_vmem [thread:$0]  %s35, 2048, %s37, [#allocation3], 128, 128, 8
    $region9: #{tpu_custom_call.1} parent=1 // pred_fallthru
      _
    // Predicated region
    $region10: #{tpu_custom_call.1} parent=1 // pred_check
      _
    $region11: #{tpu_custom_call.1} parent=1 // pred_check_branch
      %44 = sbr.rel (0) target = $region13
    $region12: #{tpu_custom_call.1} parent=1 // pred_region
      _
    $region13: #{tpu_custom_call.1} parent=1 // pred_fallthru
      _
    // Predicated region
    $region14: #{tpu_custom_call.1} parent=1 // pred_check
      _
    $region15: #{tpu_custom_call.1} parent=1 // pred_check_branch
      %46 = sbr.rel (0) target = $region17
    $region16: #{tpu_custom_call.1} parent=1 // pred_region
      _
    $region17: #{tpu_custom_call.1} parent=1 // pred_fallthru
      _
    // Predicated region
    $region18: #{tpu_custom_call.1} parent=1 // pred_check
      _
    $region19: #{tpu_custom_call.1} parent=1 // pred_check_branch
      %48 = sbr.rel (0) target = $region21
    $region20: #{tpu_custom_call.1} parent=1 // pred_region
      _
    $region21: #{tpu_custom_call.1} parent=1 // pred_fallthru
      _
    // Predicated region
    $region22: #{tpu_custom_call.1} parent=1 // pred_check
      _
    $region23: #{tpu_custom_call.1} parent=1 // pred_check_branch
      %50 = sbr.rel (0) target = $region25
    $region24: #{tpu_custom_call.1} parent=1 // pred_region
      %52 = vsyncadd [#allocation6], 0
      %s53 = sshll.u32 %s5, 4
      %s54 = int_to_ptr.hbm [resolvable:$true] %s53
      %s55 = sshll.u32 [#allocation5], 4
      %s56 = int_to_ptr.vmem [resolvable:$true] %s55
      %61 = dma.hbm_to_vmem [thread:$0]  %s54, 4096, %s56, [#allocation6], 128, 128, 8
    $region25: #{tpu_custom_call.1} parent=1 // pred_fallthru
      _
    // Predicated region
    $region26: #{tpu_custom_call.1} parent=1 // pred_check
      _
    $region27: #{tpu_custom_call.1} parent=1 // pred_check_branch
      %63 = sbr.rel (0) target = $region29
    $region28: #{tpu_custom_call.1} parent=1 // pred_region
      _
    $region29: #{tpu_custom_call.1} parent=1 // pred_fallthru
      _
    // Predicated region
    $region30: #{tpu_custom_call.1} parent=1 // pred_check
      _
    $region31: #{tpu_custom_call.1} parent=1 // pred_check_branch
      %65 = sbr.rel (0) target = $region33
    $region32: #{tpu_custom_call.1} parent=1 // pred_region
      _
    $region33: #{tpu_custom_call.1} parent=1 // pred_fallthru
      _
    // Predicated region
    $region34: #{tpu_custom_call.1} parent=1 // pred_check
      _
    $region35: #{tpu_custom_call.1} parent=1 // pred_check_branch
      %67 = sbr.rel (0) target = $region37
    $region36: #{tpu_custom_call.1} parent=1 // pred_region
      _
    $region37: #{tpu_custom_call.1} parent=1 // pred_fallthru
      _
    // Predicated region
    $region38: #{tpu_custom_call.1} parent=1 // pred_check
      _
    $region39: #{tpu_custom_call.1} parent=1 // pred_check_branch
      %69 = sbr.rel (0) target = $region41
    $region40: #{tpu_custom_call.1} parent=1 // pred_region
      %71 = vsyncadd [#allocation6], 0
      %s72 = sshll.u32 %s9, 4
      %s73 = int_to_ptr.hbm [resolvable:$true] %s72
      %s74 = sshll.u32 [#allocation7], 4
      %s75 = int_to_ptr.vmem [resolvable:$true] %s74
      %80 = dma.hbm_to_vmem [thread:$0]  %s73, 20480, %s75, [#allocation6], 128, 128, 8
    $region41: #{tpu_custom_call.1} parent=1 // pred_fallthru
      _
    // Predicated region
    $region42: #{tpu_custom_call.1} parent=1 // pred_check
      _
    $region43: #{tpu_custom_call.1} parent=1 // pred_check_branch
      %82 = sbr.rel (0) target = $region45
    $region44: #{tpu_custom_call.1} parent=1 // pred_region
      _
    $region45: #{tpu_custom_call.1} parent=1 // pred_fallthru
      _
    // Predicated region
    $region46: #{tpu_custom_call.1} parent=1 // pred_check
      _
    $region47: #{tpu_custom_call.1} parent=1 // pred_check_branch
      %84 = sbr.rel (0) target = $region49
    $region48: #{tpu_custom_call.1} parent=1 // pred_region
      _
    $region49: #{tpu_custom_call.1} parent=1 // pred_fallthru
      _
    // Predicated region
    $region50: #{tpu_custom_call.1} parent=1 // pred_check
      _
    $region51: #{tpu_custom_call.1} parent=1 // pred_check_branch
      %86 = sbr.rel (0) target = $region53
    $region52: #{tpu_custom_call.1} parent=1 // pred_region
      _
    $region53: #{tpu_custom_call.1} parent=1 // pred_fallthru
      _
    // Predicated region
    $region54: #{tpu_custom_call.1} parent=1 // pred_check
      _
    $region55: #{tpu_custom_call.1} parent=1 // pred_check_branch
      %88 = sbr.rel (0) target = $region57
    $region56: #{tpu_custom_call.1} parent=1 // pred_region
      %90 = vsyncadd [#allocation9], 0
      %s91 = sshll.u32 %s13, 4
      %s92 = int_to_ptr.hbm [resolvable:$true] %s91
      %s93 = sshll.u32 [#allocation8], 4
      %s94 = int_to_ptr.vmem [resolvable:$true] %s93
      %99 = dma.hbm_to_vmem [thread:$0]  %s92, 4096, %s94, [#allocation9], 128, 128, 8
    $region57: #{tpu_custom_call.1} parent=1 // pred_fallthru
      _
    // Predicated region
    $region58: #{tpu_custom_call.1} parent=1 // pred_check
      _
    $region59: #{tpu_custom_call.1} parent=1 // pred_check_branch
      %101 = sbr.rel (0) target = $region61
    $region60: #{tpu_custom_call.1} parent=1 // pred_region
      _
    $region61: #{tpu_custom_call.1} parent=1 // pred_fallthru
      _
    // Predicated region
    $region62: #{tpu_custom_call.1} parent=1 // pred_check
      _
    $region63: #{tpu_custom_call.1} parent=1 // pred_check_branch
      %103 = sbr.rel (0) target = $region65
    $region64: #{tpu_custom_call.1} parent=1 // pred_region
      _
    $region65: #{tpu_custom_call.1} parent=1 // pred_fallthru
      _
    // Predicated region
    $region66: #{tpu_custom_call.1} parent=1 // pred_check
      _
    $region67: #{tpu_custom_call.1} parent=1 // pred_check_branch
      %105 = sbr.rel (0) target = $region69
    $region68: #{tpu_custom_call.1} parent=1 // pred_region
      _
    $region69: #{tpu_custom_call.1} parent=1 // pred_fallthru
      _
    // Predicated region
    $region70: #{tpu_custom_call.1} parent=1 // pred_check
      _
    $region71: #{tpu_custom_call.1} parent=1 // pred_check_branch
      %107 = sbr.rel (0) target = $region73
    $region72: #{tpu_custom_call.1} parent=1 // pred_region
      %109 = vsyncadd [#allocation9], 0
      %s110 = sshll.u32 %s17, 4
      %s111 = int_to_ptr.hbm [resolvable:$true] %s110
      %s112 = sshll.u32 [#allocation10], 4
      %s113 = int_to_ptr.vmem [resolvable:$true] %s112
      %118 = dma.hbm_to_vmem [thread:$0]  %s111, 2048, %s113, [#allocation9], 128, 128, 8
    $region73: #{tpu_custom_call.1} parent=1 // pred_fallthru
      _
    // Predicated region
    $region74: #{tpu_custom_call.1} parent=1 // pred_check
      _
    $region75: #{tpu_custom_call.1} parent=1 // pred_check_branch
      %120 = sbr.rel (0) target = $region77
    $region76: #{tpu_custom_call.1} parent=1 // pred_region
      _
    $region77: #{tpu_custom_call.1} parent=1 // pred_fallthru
      _
    // Predicated region
    $region78: #{tpu_custom_call.1} parent=1 // pred_check
      _
    $region79: #{tpu_custom_call.1} parent=1 // pred_check_branch
      %122 = sbr.rel (0) target = $region81
    $region80: #{tpu_custom_call.1} parent=1 // pred_region
      %124 = dma.done [#allocation3], 2048
    $region81: #{tpu_custom_call.1} parent=1 // pred_fallthru
      _
    // Predicated region
    $region82: #{tpu_custom_call.1} parent=1 // pred_check
      _
    $region83: #{tpu_custom_call.1} parent=1 // pred_check_branch
      %126 = sbr.rel (0) target = $region85
    $region84: #{tpu_custom_call.1} parent=1 // pred_region
      %128 = dma.done [#allocation6], 4096
    $region85: #{tpu_custom_call.1} parent=1 // pred_fallthru
      _
    // Predicated region
    $region86: #{tpu_custom_call.1} parent=1 // pred_check
      _
    $region87: #{tpu_custom_call.1} parent=1 // pred_check_branch
      %130 = sbr.rel (0) target = $region89
    $region88: #{tpu_custom_call.1} parent=1 // pred_region
      %132 = dma.done [#allocation6], 20480
    $region89: #{tpu_custom_call.1} parent=1 // pred_fallthru
      _
    // Predicated region
    $region90: #{tpu_custom_call.1} parent=1 // pred_check
      _
    $region91: #{tpu_custom_call.1} parent=1 // pred_check_branch
      %134 = sbr.rel (0) target = $region93
    $region92: #{tpu_custom_call.1} parent=1 // pred_region
      %136 = dma.done [#allocation9], 4096
    $region93: #{tpu_custom_call.1} parent=1 // pred_fallthru
      _
    // Predicated region
    $region94: #{tpu_custom_call.1} parent=1 // pred_check
      _
    $region95: #{tpu_custom_call.1} parent=1 // pred_check_branch
      %138 = sbr.rel (0) target = $region97
    $region96: #{tpu_custom_call.1} parent=1 // pred_region
      %140 = dma.done [#allocation9], 2048
    $region97: #{tpu_custom_call.1} parent=1 // pred_fallthru
      _
    %v141 = vld [vmem:[%s0] sm:$0xff]
    %v142 = vld [vmem:[%s0 + $0x8] sm:$0xff]
    %v143 = vld [vmem:[%s0 + $0x10] sm:$0xff]
    %v144 = vld [vmem:[%s0 + $0x18] sm:$0xff]
    %vm145 = vcmp.ne.s32.totalorder %v141, 26
    %vm146 = vcmp.ne.s32.totalorder %v142, 26
    %vm147 = vcmp.ne.s32.totalorder %v143, 26
    %vm148 = vcmp.ne.s32.totalorder %v144, 26
    %v149 = vsel %vm145, 1, 0
    %v150 = vsel %vm146, 1, 0
    %v151 = vsel %vm147, 1, 0
    %v152 = vsel %vm148, 1, 0
    %v153 = vcvt.s32.f32 %v149
    %v154 = vcvt.s32.f32 %v150
    %v155 = vcvt.s32.f32 %v151
    %v156 = vcvt.s32.f32 %v152
    %v157 = vlaneseq
    %v158 = vand.u32 %v157, 127
    %159 = vset.pattern.permute.xlu0 0
    %160 = vperm.xlu0 %159, %v141
    %v161 = vpop.permute.xlu0 %160
    %162 = vset.pattern.permute.xlu0 0
    %163 = vperm.xlu0 %162, %v142
    %v164 = vpop.permute.xlu0 %163
    %165 = vset.pattern.permute.xlu0 0
    %166 = vperm.xlu0 %165, %v143
    %v167 = vpop.permute.xlu0 %166
    %168 = vset.pattern.permute.xlu0 0
    %169 = vperm.xlu0 %168, %v144
    %v170 = vpop.permute.xlu0 %169
    %vm171 = vcmp.eq.s32.totalorder %v161, %v158
    %vm172 = vcmp.eq.s32.totalorder %v164, %v158
    %vm173 = vcmp.eq.s32.totalorder %v167, %v158
    %vm174 = vcmp.eq.s32.totalorder %v170, %v158
    %v175 = vsel %vm171, 1, 0
    %v176 = vsel %vm172, 1, 0
    %v177 = vsel %vm173, 1, 0
    %v178 = vsel %vm174, 1, 0
    %v179 = vcvt.s32.f32 %v175
    %v180 = vcvt.s32.f32 %v176
    %v181 = vcvt.s32.f32 %v177
    %v182 = vcvt.s32.f32 %v178
    %v183 = vld [vmem:[#allocation2] sm:$0xff]
    %v184 = vld [vmem:[#allocation2 + $0x8] sm:$0xff]
    %v185 = vld [vmem:[#allocation2 + $0x10] sm:$0xff]
    %v186 = vld [vmem:[#allocation2 + $0x18] sm:$0xff]
    %v187 = vld [vmem:[#allocation2 + $0x20] sm:$0xff]
    %v188 = vld [vmem:[#allocation2 + $0x28] sm:$0xff]
    %v189 = vld [vmem:[#allocation2 + $0x30] sm:$0xff]
    %v190 = vld [vmem:[#allocation2 + $0x38] sm:$0xff]
    %v191 = vld [vmem:[#allocation2 + $0x40] sm:$0xff]
    %v192 = vld [vmem:[#allocation2 + $0x48] sm:$0xff]
    %v193 = vld [vmem:[#allocation2 + $0x50] sm:$0xff]
    %v194 = vld [vmem:[#allocation2 + $0x58] sm:$0xff]
    %v195 = vld [vmem:[#allocation2 + $0x60] sm:$0xff]
    %v196 = vld [vmem:[#allocation2 + $0x68] sm:$0xff]
    %v197 = vld [vmem:[#allocation2 + $0x70] sm:$0xff]
    %v198 = vld [vmem:[#allocation2 + $0x78] sm:$0xff]
    %v199 = vld [vmem:[%s2] sm:$0x1]
    %v201 = vperm.slane %v199, 0
    %203 = vmatpush.msra.mxu0 %v198
    %204 = vmatpush.msra.mxu0 %v197
    %205 = vmatpush.msra.mxu0 %v196
    %206 = vmatpush.msra.mxu0 %v195
    %207 = vmatpush.msra.mxu0 %v194
    %208 = vmatpush.msra.mxu0 %v193
    %209 = vmatpush.msra.mxu0 %v192
    %210 = vmatpush.msra.mxu0 %v191
    %211 = vmatpush.msra.mxu0 %v190
    %212 = vmatpush.msra.mxu0 %v189
    %213 = vmatpush.msra.mxu0 %v188
    %214 = vmatpush.msra.mxu0 %v187
    %215 = vmatpush.msra.mxu0 %v186
    %216 = vmatpush.msra.mxu0 %v185
    %217 = vmatpush.msra.mxu0 %v184
    %218 = vmatpush.msra.mxu0 %v183
    %219 = vmatmul.f32.gmra.mxu0 %v179
    %v220 = vpop.f32.mrf.mxu0
    %v221 = vadd.f32 %v201, %v220
    %222 = vmatmul.f32.gmra.mxu0 %v180
    %v223 = vpop.f32.mrf.mxu0
    %v224 = vadd.f32 %v201, %v223
    %225 = vmatmul.f32.gmra.mxu0 %v181
    %v226 = vpop.f32.mrf.mxu0
    %v227 = vadd.f32 %v201, %v226
    %228 = vmatmul.f32.gmra.mxu0 %v182
    %v229 = vpop.f32.mrf.mxu0
    %v230 = vadd.f32 %v201, %v229
    %231 = vdwg.mxu0
    %v232 = vlaneseq
    %v233 = vshrl.u32 %v232, 7
    %v234 = vadd.s32 %v233, 8
    %v235 = vadd.s32 %v233, 16
    %v236 = vadd.s32 %v233, 24
    %vm237 = vcmp.lt.s32.totalorder %v233, 0
    %v238 = vsub.s32 0, %v233
    %v239 = vsel %vm237, %v238, %v233
    %v240 = vshrl.u32 %v239, 4
    %v241 = vand.u32 %v239, 15
    %v242 = vsub.s32 0, %v241
    %v243 = vsel %vm237, %v242, %v241
    %vm244 = vcmp.lt.s32.totalorder %v234, 0
    %v245 = vsub.s32 0, %v234
    %v246 = vsel %vm244, %v245, %v234
    %v247 = vshrl.u32 %v246, 4
    %v248 = vand.u32 %v246, 15
    %v249 = vsub.s32 0, %v248
    %v250 = vsel %vm244, %v249, %v248
    %vm251 = vcmp.lt.s32.totalorder %v235, 0
    %v252 = vsub.s32 0, %v235
    %v253 = vsel %vm251, %v252, %v235
    %v254 = vshrl.u32 %v253, 4
    %v255 = vand.u32 %v253, 15
    %v256 = vsub.s32 0, %v255
    %v257 = vsel %vm251, %v256, %v255
    %vm258 = vcmp.lt.s32.totalorder %v236, 0
    %v259 = vsub.s32 0, %v236
    %v260 = vsel %vm258, %v259, %v236
    %v261 = vshrl.u32 %v260, 4
    %v262 = vand.u32 %v260, 15
    %v263 = vsub.s32 0, %v262
    %v264 = vsel %vm258, %v263, %v262
    %vm265 = vcmp.ne.s32.totalorder %v243, 0
    %vm266 = vcmp.ne.s32.totalorder %v250, 0
    %vm267 = vcmp.ne.s32.totalorder %v257, 0
    %vm268 = vcmp.ne.s32.totalorder %v264, 0
    %vm269 = vcmp.lt.s32.totalorder %v243, 0
    %vm270 = vcmp.lt.s32.totalorder %v250, 0
    %vm271 = vcmp.lt.s32.totalorder %v257, 0
    %vm272 = vcmp.lt.s32.totalorder %v264, 0
    %vm273 = vmand %vm269, %vm265
    %vm274 = vmand %vm270, %vm266
    %vm275 = vmand %vm271, %vm267
    %vm276 = vmand %vm272, %vm268
    %v277 = vadd.s32 %v243, 16
    %v278 = vadd.s32 %v250, 16
    %v279 = vadd.s32 %v257, 16
    %v280 = vadd.s32 %v264, 16
    %v281 = vsel %vm273, %v277, %v243
    %v282 = vsel %vm274, %v278, %v250
    %v283 = vsel %vm275, %v279, %v257
    %v284 = vsel %vm276, %v280, %v264
    %v285 = vld [vmem:[%s3] sm:$0x1]
    %v286 = vld [vmem:[%s4] sm:$0x1]
    %287 = vadd.xlane.f32.xlu0 %v221
    %v288 = vpop.xlane.xlu0 %287
    %289 = vadd.xlane.f32.xlu0 %v224
    %v290 = vpop.xlane.xlu0 %289
    %291 = vadd.xlane.f32.xlu0 %v227
    %v292 = vpop.xlane.xlu0 %291
    %293 = vadd.xlane.f32.xlu0 %v230
    %v294 = vpop.xlane.xlu0 %293
    %v295 = vmul.f32 %v221, %v221
    %v296 = vmul.f32 %v224, %v224
    %v297 = vmul.f32 %v227, %v227
    %v298 = vmul.f32 %v230, %v230
    %299 = vadd.xlane.f32.xlu0 %v295
    %v300 = vpop.xlane.xlu0 %299
    %301 = vadd.xlane.f32.xlu0 %v296
    %v302 = vpop.xlane.xlu0 %301
    %303 = vadd.xlane.f32.xlu0 %v297
    %v304 = vpop.xlane.xlu0 %303
    %305 = vadd.xlane.f32.xlu0 %v298
    %v306 = vpop.xlane.xlu0 %305
    %v307 = vrcp.pop 32.0
    %v308 = vmul.f32 32.0, %v307
    %v309 = vsub.f32 1.0, %v308
    %v310 = vmul.f32 %v307, %v309
    %v311 = vadd.f32 %v307, %v310
    %vm312 = vweird.f32 %v307
    %v313 = vsel %vm312, %v307, %v311
    %v314 = vmul.f32 %v288, %v313
    %v315 = vmul.f32 %v290, %v313
    %v316 = vmul.f32 %v292, %v313
    %v317 = vmul.f32 %v294, %v313
    %v318 = vmul.f32 %v300, %v313
    %v319 = vmul.f32 %v302, %v313
    %v320 = vmul.f32 %v304, %v313
    %v321 = vmul.f32 %v306, %v313
    %v322 = vmul.f32 %v314, %v314
    %v323 = vmul.f32 %v315, %v315
    %v324 = vmul.f32 %v316, %v316
    %v325 = vmul.f32 %v317, %v317
    %v326 = vsub.f32 %v318, %v322
    %v327 = vsub.f32 %v319, %v323
    %v328 = vsub.f32 %v320, %v324
    %v329 = vsub.f32 %v321, %v325
    %v330 = vsub.f32 %v221, %v314
    %v331 = vsub.f32 %v224, %v315
    %v332 = vsub.f32 %v227, %v316
    %v333 = vsub.f32 %v230, %v317
    %v334 = vadd.f32 %v326, 1e-05
    %v335 = vadd.f32 %v327, 1e-05
    %v336 = vadd.f32 %v328, 1e-05
    %v337 = vadd.f32 %v329, 1e-05
    %v338 = vrsqrt.pop %v334
    %v339 = vmul.f32 %v338, %v334
    %v340 = vmul.f32 %v339, %v338
    %v341 = vmul.f32 0.5, %v340
    %v342 = vsub.f32 1.5, %v341
    %v343 = vmul.f32 %v338, %v342
    %vm344 = vweird.f32 %v334
    %vm345 = vweird.f32 %v338
    %vm346 = vmor %vm344, %vm345
    %v347 = vsel %vm346, %v338, %v343
    %v348 = vrsqrt.pop %v335
    %v349 = vmul.f32 %v348, %v335
    %v350 = vmul.f32 %v349, %v348
    %v351 = vmul.f32 0.5, %v350
    %v352 = vsub.f32 1.5, %v351
    %v353 = vmul.f32 %v348, %v352
    %vm354 = vweird.f32 %v335
    %vm355 = vweird.f32 %v348
    %vm356 = vmor %vm354, %vm355
    %v357 = vsel %vm356, %v348, %v353
    %v358 = vrsqrt.pop %v336
    %v359 = vmul.f32 %v358, %v336
    %v360 = vmul.f32 %v359, %v358
    %v361 = vmul.f32 0.5, %v360
    %v362 = vsub.f32 1.5, %v361
    %v363 = vmul.f32 %v358, %v362
    %vm364 = vweird.f32 %v336
    %vm365 = vweird.f32 %v358
    %vm366 = vmor %vm364, %vm365
    %v367 = vsel %vm366, %v358, %v363
    %v368 = vrsqrt.pop %v337
    %v369 = vmul.f32 %v368, %v337
    %v370 = vmul.f32 %v369, %v368
    %v371 = vmul.f32 0.5, %v370
    %v372 = vsub.f32 1.5, %v371
    %v373 = vmul.f32 %v368, %v372
    %vm374 = vweird.f32 %v337
    %vm375 = vweird.f32 %v368
    %vm376 = vmor %vm374, %vm375
    %v377 = vsel %vm376, %v368, %v373
    %v378 = vmul.f32 %v330, %v347
    %v379 = vmul.f32 %v331, %v357
    %v380 = vmul.f32 %v332, %v367
    %v381 = vmul.f32 %v333, %v377
    %v383 = vperm.slane %v285, 0
    %v385 = vmul.f32 %v378, %v383
    %v386 = vmul.f32 %v379, %v383
    %v387 = vmul.f32 %v380, %v383
    %v388 = vmul.f32 %v381, %v383
    %v390 = vperm.slane %v286, 0
    %v392 = vadd.f32 %v385, %v390
    %v393 = vadd.f32 %v386, %v390
    %v394 = vadd.f32 %v387, %v390
    %v395 = vadd.f32 %v388, %v390
    %v396 = vmul.f32 %v392, 0.5
    %v397 = vmul.f32 %v393, 0.5
    %v398 = vmul.f32 %v394, 0.5
    %v399 = vmul.f32 %v395, 0.5
    %v400 = vrcp.pop 1.4142135
    %v401 = vmul.f32 1.4142135, %v400
    %v402 = vsub.f32 1.0, %v401
    %v403 = vmul.f32 %v400, %v402
    %v404 = vadd.f32 %v400, %v403
    %vm405 = vweird.f32 %v400
    %v406 = vsel %vm405, %v400, %v404
    %v407 = vmul.f32 %v392, %v406
    %v408 = vmul.f32 %v393, %v406
    %v409 = vmul.f32 %v394, %v406
    %v410 = vmul.f32 %v395, %v406
    %v411 = vmul.f32 %v407, %v407
    %v412 = vmin.f32 16.0, %v411
    %v413 = vmul.f32 %v412, 2.1237322e-06
    %v414 = vadd.f32 %v413, 0.00028619796
    %v415 = vmul.f32 %v412, %v414
    %v416 = vadd.f32 %v415, 0.0036580483
    %v417 = vmul.f32 %v412, %v416
    %v418 = vadd.f32 %v417, 0.05243302
    %v419 = vmul.f32 %v412, %v418
    %v420 = vadd.f32 %v419, 0.18741608
    %v421 = vmul.f32 %v412, %v420
    %v422 = vadd.f32 %v421, 1.1283791
    %v423 = vmul.f32 %v407, %v422
    %v424 = vmul.f32 %v412, 3.8918573e-05
    %v425 = vadd.f32 %v424, 0.001143296
    %v426 = vmul.f32 %v412, %v425
    %v427 = vadd.f32 %v426, 0.014752088
    %v428 = vmul.f32 %v412, %v427
    %v429 = vadd.f32 %v428, 0.112945676
    %v430 = vmul.f32 %v412, %v429
    %v431 = vadd.f32 %v430, 0.4994258
    %v432 = vmul.f32 %v412, %v431
    %v433 = vadd.f32 %v432, 1.0
    %v434 = vrcp.pop %v433
    %v435 = vmul.f32 %v433, %v434
    %v436 = vsub.f32 1.0, %v435
    %v437 = vmul.f32 %v434, %v436
    %v438 = vadd.f32 %v434, %v437
    %vm439 = vweird.f32 %v433
    %vm440 = vweird.f32 %v434
    %vm441 = vmor %vm439, %vm440
    %v442 = vsel %vm441, %v434, %v438
    %v443 = vand.u32 2147483647, %v433
    %vm444 = vcmp.eq.f32.partialorder %v443, 8.507059e+37
    %v445 = vand.u32 %v433, 2147483648
    %v446 = vor.u32 1.1754944e-38, %v445
    %v447 = vsel %vm444, %v446, %v442
    %v448 = vmul.f32 %v423, %v447
    %v449 = vmin.f32 %v448, 1.0
    %v450 = vmax.f32 %v449, -1.0
    %v451 = vmul.f32 %v408, %v408
    %v452 = vmin.f32 16.0, %v451
    %v453 = vmul.f32 %v452, 2.1237322e-06
    %v454 = vadd.f32 %v453, 0.00028619796
    %v455 = vmul.f32 %v452, %v454
    %v456 = vadd.f32 %v455, 0.0036580483
    %v457 = vmul.f32 %v452, %v456
    %v458 = vadd.f32 %v457, 0.05243302
    %v459 = vmul.f32 %v452, %v458
    %v460 = vadd.f32 %v459, 0.18741608
    %v461 = vmul.f32 %v452, %v460
    %v462 = vadd.f32 %v461, 1.1283791
    %v463 = vmul.f32 %v408, %v462
    %v464 = vmul.f32 %v452, 3.8918573e-05
    %v465 = vadd.f32 %v464, 0.001143296
    %v466 = vmul.f32 %v452, %v465
    %v467 = vadd.f32 %v466, 0.014752088
    %v468 = vmul.f32 %v452, %v467
    %v469 = vadd.f32 %v468, 0.112945676
    %v470 = vmul.f32 %v452, %v469
    %v471 = vadd.f32 %v470, 0.4994258
    %v472 = vmul.f32 %v452, %v471
    %v473 = vadd.f32 %v472, 1.0
    %v474 = vrcp.pop %v473
    %v475 = vmul.f32 %v473, %v474
    %v476 = vsub.f32 1.0, %v475
    %v477 = vmul.f32 %v474, %v476
    %v478 = vadd.f32 %v474, %v477
    %vm479 = vweird.f32 %v473
    %vm480 = vweird.f32 %v474
    %vm481 = vmor %vm479, %vm480
    %v482 = vsel %vm481, %v474, %v478
    %v483 = vand.u32 2147483647, %v473
    %vm484 = vcmp.eq.f32.partialorder %v483, 8.507059e+37
    %v485 = vand.u32 %v473, 2147483648
    %v486 = vor.u32 1.1754944e-38, %v485
    %v487 = vsel %vm484, %v486, %v482
    %v488 = vmul.f32 %v463, %v487
    %v489 = vmin.f32 %v488, 1.0
    %v490 = vmax.f32 %v489, -1.0
    %v491 = vmul.f32 %v409, %v409
    %v492 = vmin.f32 16.0, %v491
    %v493 = vmul.f32 %v492, 2.1237322e-06
    %v494 = vadd.f32 %v493, 0.00028619796
    %v495 = vmul.f32 %v492, %v494
    %v496 = vadd.f32 %v495, 0.0036580483
    %v497 = vmul.f32 %v492, %v496
    %v498 = vadd.f32 %v497, 0.05243302
    %v499 = vmul.f32 %v492, %v498
    %v500 = vadd.f32 %v499, 0.18741608
    %v501 = vmul.f32 %v492, %v500
    %v502 = vadd.f32 %v501, 1.1283791
    %v503 = vmul.f32 %v409, %v502
    %v504 = vmul.f32 %v492, 3.8918573e-05
    %v505 = vadd.f32 %v504, 0.001143296
    %v506 = vmul.f32 %v492, %v505
    %v507 = vadd.f32 %v506, 0.014752088
    %v508 = vmul.f32 %v492, %v507
    %v509 = vadd.f32 %v508, 0.112945676
    %v510 = vmul.f32 %v492, %v509
    %v511 = vadd.f32 %v510, 0.4994258
    %v512 = vmul.f32 %v492, %v511
    %v513 = vadd.f32 %v512, 1.0
    %v514 = vrcp.pop %v513
    %v515 = vmul.f32 %v513, %v514
    %v516 = vsub.f32 1.0, %v515
    %v517 = vmul.f32 %v514, %v516
    %v518 = vadd.f32 %v514, %v517
    %vm519 = vweird.f32 %v513
    %vm520 = vweird.f32 %v514
    %vm521 = vmor %vm519, %vm520
    %v522 = vsel %vm521, %v514, %v518
    %v523 = vand.u32 2147483647, %v513
    %vm524 = vcmp.eq.f32.partialorder %v523, 8.507059e+37
    %v525 = vand.u32 %v513, 2147483648
    %v526 = vor.u32 1.1754944e-38, %v525
    %v527 = vsel %vm524, %v526, %v522
    %v528 = vmul.f32 %v503, %v527
    %v529 = vmin.f32 %v528, 1.0
    %v530 = vmax.f32 %v529, -1.0
    %v531 = vmul.f32 %v410, %v410
    %v532 = vmin.f32 16.0, %v531
    %v533 = vmul.f32 %v532, 2.1237322e-06
    %v534 = vadd.f32 %v533, 0.00028619796
    %v535 = vmul.f32 %v532, %v534
    %v536 = vadd.f32 %v535, 0.0036580483
    %v537 = vmul.f32 %v532, %v536
    %v538 = vadd.f32 %v537, 0.05243302
    %v539 = vmul.f32 %v532, %v538
    %v540 = vadd.f32 %v539, 0.18741608
    %v541 = vmul.f32 %v532, %v540
    %v542 = vadd.f32 %v541, 1.1283791
    %v543 = vmul.f32 %v410, %v542
    %v544 = vmul.f32 %v532, 3.8918573e-05
    %v545 = vadd.f32 %v544, 0.001143296
    %v546 = vmul.f32 %v532, %v545
    %v547 = vadd.f32 %v546, 0.014752088
    %v548 = vmul.f32 %v532, %v547
    %v549 = vadd.f32 %v548, 0.112945676
    %v550 = vmul.f32 %v532, %v549
    %v551 = vadd.f32 %v550, 0.4994258
    %v552 = vmul.f32 %v532, %v551
    %v553 = vadd.f32 %v552, 1.0
    %v554 = vrcp.pop %v553
    %v555 = vmul.f32 %v553, %v554
    %v556 = vsub.f32 1.0, %v555
    %v557 = vmul.f32 %v554, %v556
    %v558 = vadd.f32 %v554, %v557
    %vm559 = vweird.f32 %v553
    %vm560 = vweird.f32 %v554
    %vm561 = vmor %vm559, %vm560
    %v562 = vsel %vm561, %v554, %v558
    %v563 = vand.u32 2147483647, %v553
    %vm564 = vcmp.eq.f32.partialorder %v563, 8.507059e+37
    %v565 = vand.u32 %v553, 2147483648
    %v566 = vor.u32 1.1754944e-38, %v565
    %v567 = vsel %vm564, %v566, %v562
    %v568 = vmul.f32 %v543, %v567
    %v569 = vmin.f32 %v568, 1.0
    %v570 = vmax.f32 %v569, -1.0
    %v571 = vadd.f32 %v450, 1.0
    %v572 = vadd.f32 %v490, 1.0
    %v573 = vadd.f32 %v530, 1.0
    %v574 = vadd.f32 %v570, 1.0
    %v575 = vmul.f32 %v396, %v571
    %v576 = vmul.f32 %v397, %v572
    %v577 = vmul.f32 %v398, %v573
    %v578 = vmul.f32 %v399, %v574
    %v579 = vld [vmem:[#allocation5] sm:$0xff]
    %v580 = vld [vmem:[#allocation5 + $0x8] sm:$0xff]
    %v581 = vld [vmem:[#allocation5 + $0x10] sm:$0xff]
    %v582 = vld [vmem:[#allocation5 + $0x18] sm:$0xff]
    %v583 = vld [vmem:[#allocation5 + $0x20] sm:$0xff]
    %v584 = vld [vmem:[#allocation5 + $0x28] sm:$0xff]
    %v585 = vld [vmem:[#allocation5 + $0x30] sm:$0xff]
    %v586 = vld [vmem:[#allocation5 + $0x38] sm:$0xff]
    %v587 = vld [vmem:[#allocation5 + $0x40] sm:$0xff]
    %v588 = vld [vmem:[#allocation5 + $0x48] sm:$0xff]
    %v589 = vld [vmem:[#allocation5 + $0x50] sm:$0xff]
    %v590 = vld [vmem:[#allocation5 + $0x58] sm:$0xff]
    %v591 = vld [vmem:[#allocation5 + $0x60] sm:$0xff]
    %v592 = vld [vmem:[#allocation5 + $0x68] sm:$0xff]
    %v593 = vld [vmem:[#allocation5 + $0x70] sm:$0xff]
    %v594 = vld [vmem:[#allocation5 + $0x78] sm:$0xff]
    %v595 = vld [vmem:[%s6] sm:$0x1]
    %v597 = vperm.slane %v595, 0
    %599 = vmatpush.msra.mxu0 %v594
    %600 = vmatpush.msra.mxu0 %v593
    %601 = vmatpush.msra.mxu0 %v592
    %602 = vmatpush.msra.mxu0 %v591
    %603 = vmatpush.msra.mxu0 %v590
    %604 = vmatpush.msra.mxu0 %v589
    %605 = vmatpush.msra.mxu0 %v588
    %606 = vmatpush.msra.mxu0 %v587
    %607 = vmatpush.msra.mxu0 %v586
    %608 = vmatpush.msra.mxu0 %v585
    %609 = vmatpush.msra.mxu0 %v584
    %610 = vmatpush.msra.mxu0 %v583
    %611 = vmatpush.msra.mxu0 %v582
    %612 = vmatpush.msra.mxu0 %v581
    %613 = vmatpush.msra.mxu0 %v580
    %614 = vmatpush.msra.mxu0 %v579
    %615 = vmatmul.f32.gmra.mxu0 %v575
    %v616 = vpop.f32.mrf.mxu0
    %v617 = vadd.f32 %v597, %v616
    %618 = vmatmul.f32.gmra.mxu0 %v576
    %v619 = vpop.f32.mrf.mxu0
    %v620 = vadd.f32 %v597, %v619
    %621 = vmatmul.f32.gmra.mxu0 %v577
    %v622 = vpop.f32.mrf.mxu0
    %v623 = vadd.f32 %v597, %v622
    %624 = vmatmul.f32.gmra.mxu0 %v578
    %v625 = vpop.f32.mrf.mxu0
    %v626 = vadd.f32 %v597, %v625
    %627 = vdwg.mxu0
    %v628 = vld [vmem:[%s7] sm:$0x1]
    %v629 = vld [vmem:[%s8] sm:$0x1]
    %630 = vadd.xlane.f32.xlu0 %v617
    %v631 = vpop.xlane.xlu0 %630
    %632 = vadd.xlane.f32.xlu0 %v620
    %v633 = vpop.xlane.xlu0 %632
    %634 = vadd.xlane.f32.xlu0 %v623
    %v635 = vpop.xlane.xlu0 %634
    %636 = vadd.xlane.f32.xlu0 %v626
    %v637 = vpop.xlane.xlu0 %636
    %v638 = vmul.f32 %v617, %v617
    %v639 = vmul.f32 %v620, %v620
    %v640 = vmul.f32 %v623, %v623
    %v641 = vmul.f32 %v626, %v626
    %642 = vadd.xlane.f32.xlu0 %v638
    %v643 = vpop.xlane.xlu0 %642
    %644 = vadd.xlane.f32.xlu0 %v639
    %v645 = vpop.xlane.xlu0 %644
    %646 = vadd.xlane.f32.xlu0 %v640
    %v647 = vpop.xlane.xlu0 %646
    %648 = vadd.xlane.f32.xlu0 %v641
    %v649 = vpop.xlane.xlu0 %648
    %v650 = vrcp.pop 16.0
    %v651 = vmul.f32 16.0, %v650
    %v652 = vsub.f32 1.0, %v651
    %v653 = vmul.f32 %v650, %v652
    %v654 = vadd.f32 %v650, %v653
    %vm655 = vweird.f32 %v650
    %v656 = vsel %vm655, %v650, %v654
    %v657 = vmul.f32 %v631, %v656
    %v658 = vmul.f32 %v633, %v656
    %v659 = vmul.f32 %v635, %v656
    %v660 = vmul.f32 %v637, %v656
    %v661 = vmul.f32 %v643, %v656
    %v662 = vmul.f32 %v645, %v656
    %v663 = vmul.f32 %v647, %v656
    %v664 = vmul.f32 %v649, %v656
    %v665 = vmul.f32 %v657, %v657
    %v666 = vmul.f32 %v658, %v658
    %v667 = vmul.f32 %v659, %v659
    %v668 = vmul.f32 %v660, %v660
    %v669 = vsub.f32 %v661, %v665
    %v670 = vsub.f32 %v662, %v666
    %v671 = vsub.f32 %v663, %v667
    %v672 = vsub.f32 %v664, %v668
    %v673 = vsub.f32 %v617, %v657
    %v674 = vsub.f32 %v620, %v658
    %v675 = vsub.f32 %v623, %v659
    %v676 = vsub.f32 %v626, %v660
    %v677 = vadd.f32 %v669, 1e-05
    %v678 = vadd.f32 %v670, 1e-05
    %v679 = vadd.f32 %v671, 1e-05
    %v680 = vadd.f32 %v672, 1e-05
    %v681 = vrsqrt.pop %v677
    %v682 = vmul.f32 %v681, %v677
    %v683 = vmul.f32 %v682, %v681
    %v684 = vmul.f32 0.5, %v683
    %v685 = vsub.f32 1.5, %v684
    %v686 = vmul.f32 %v681, %v685
    %vm687 = vweird.f32 %v677
    %vm688 = vweird.f32 %v681
    %vm689 = vmor %vm687, %vm688
    %v690 = vsel %vm689, %v681, %v686
    %v691 = vrsqrt.pop %v678
    %v692 = vmul.f32 %v691, %v678
    %v693 = vmul.f32 %v692, %v691
    %v694 = vmul.f32 0.5, %v693
    %v695 = vsub.f32 1.5, %v694
    %v696 = vmul.f32 %v691, %v695
    %vm697 = vweird.f32 %v678
    %vm698 = vweird.f32 %v691
    %vm699 = vmor %vm697, %vm698
    %v700 = vsel %vm699, %v691, %v696
    %v701 = vrsqrt.pop %v679
    %v702 = vmul.f32 %v701, %v679
    %v703 = vmul.f32 %v702, %v701
    %v704 = vmul.f32 0.5, %v703
    %v705 = vsub.f32 1.5, %v704
    %v706 = vmul.f32 %v701, %v705
    %vm707 = vweird.f32 %v679
    %vm708 = vweird.f32 %v701
    %vm709 = vmor %vm707, %vm708
    %v710 = vsel %vm709, %v701, %v706
    %v711 = vrsqrt.pop %v680
    %v712 = vmul.f32 %v711, %v680
    %v713 = vmul.f32 %v712, %v711
    %v714 = vmul.f32 0.5, %v713
    %v715 = vsub.f32 1.5, %v714
    %v716 = vmul.f32 %v711, %v715
    %vm717 = vweird.f32 %v680
    %vm718 = vweird.f32 %v711
    %vm719 = vmor %vm717, %vm718
    %v720 = vsel %vm719, %v711, %v716
    %v721 = vmul.f32 %v673, %v690
    %v722 = vmul.f32 %v674, %v700
    %v723 = vmul.f32 %v675, %v710
    %v724 = vmul.f32 %v676, %v720
    %v726 = vperm.slane %v628, 0
    %v728 = vmul.f32 %v721, %v726
    %v729 = vmul.f32 %v722, %v726
    %v730 = vmul.f32 %v723, %v726
    %v731 = vmul.f32 %v724, %v726
    %v733 = vperm.slane %v629, 0
    %v735 = vadd.f32 %v728, %v733
    %v736 = vadd.f32 %v729, %v733
    %v737 = vadd.f32 %v730, %v733
    %v738 = vadd.f32 %v731, %v733
    %v739 = vmul.f32 %v735, 0.5
    %v740 = vmul.f32 %v736, 0.5
    %v741 = vmul.f32 %v737, 0.5
    %v742 = vmul.f32 %v738, 0.5
    %v743 = vmul.f32 %v735, %v406
    %v744 = vmul.f32 %v736, %v406
    %v745 = vmul.f32 %v737, %v406
    %v746 = vmul.f32 %v738, %v406
    %v747 = vmul.f32 %v743, %v743
    %v748 = vmin.f32 16.0, %v747
    %v749 = vmul.f32 %v748, 2.1237322e-06
    %v750 = vadd.f32 %v749, 0.00028619796
    %v751 = vmul.f32 %v748, %v750
    %v752 = vadd.f32 %v751, 0.0036580483
    %v753 = vmul.f32 %v748, %v752
    %v754 = vadd.f32 %v753, 0.05243302
    %v755 = vmul.f32 %v748, %v754
    %v756 = vadd.f32 %v755, 0.18741608
    %v757 = vmul.f32 %v748, %v756
    %v758 = vadd.f32 %v757, 1.1283791
    %v759 = vmul.f32 %v743, %v758
    %v760 = vmul.f32 %v748, 3.8918573e-05
    %v761 = vadd.f32 %v760, 0.001143296
    %v762 = vmul.f32 %v748, %v761
    %v763 = vadd.f32 %v762, 0.014752088
    %v764 = vmul.f32 %v748, %v763
    %v765 = vadd.f32 %v764, 0.112945676
    %v766 = vmul.f32 %v748, %v765
    %v767 = vadd.f32 %v766, 0.4994258
    %v768 = vmul.f32 %v748, %v767
    %v769 = vadd.f32 %v768, 1.0
    %v770 = vrcp.pop %v769
    %v771 = vmul.f32 %v769, %v770
    %v772 = vsub.f32 1.0, %v771
    %v773 = vmul.f32 %v770, %v772
    %v774 = vadd.f32 %v770, %v773
    %vm775 = vweird.f32 %v769
    %vm776 = vweird.f32 %v770
    %vm777 = vmor %vm775, %vm776
    %v778 = vsel %vm777, %v770, %v774
    %v779 = vand.u32 2147483647, %v769
    %vm780 = vcmp.eq.f32.partialorder %v779, 8.507059e+37
    %v781 = vand.u32 %v769, 2147483648
    %v782 = vor.u32 1.1754944e-38, %v781
    %v783 = vsel %vm780, %v782, %v778
    %v784 = vmul.f32 %v759, %v783
    %v785 = vmin.f32 %v784, 1.0
    %v786 = vmax.f32 %v785, -1.0
    %v787 = vmul.f32 %v744, %v744
    %v788 = vmin.f32 16.0, %v787
    %v789 = vmul.f32 %v788, 2.1237322e-06
    %v790 = vadd.f32 %v789, 0.00028619796
    %v791 = vmul.f32 %v788, %v790
    %v792 = vadd.f32 %v791, 0.0036580483
    %v793 = vmul.f32 %v788, %v792
    %v794 = vadd.f32 %v793, 0.05243302
    %v795 = vmul.f32 %v788, %v794
    %v796 = vadd.f32 %v795, 0.18741608
    %v797 = vmul.f32 %v788, %v796
    %v798 = vadd.f32 %v797, 1.1283791
    %v799 = vmul.f32 %v744, %v798
    %v800 = vmul.f32 %v788, 3.8918573e-05
    %v801 = vadd.f32 %v800, 0.001143296
    %v802 = vmul.f32 %v788, %v801
    %v803 = vadd.f32 %v802, 0.014752088
    %v804 = vmul.f32 %v788, %v803
    %v805 = vadd.f32 %v804, 0.112945676
    %v806 = vmul.f32 %v788, %v805
    %v807 = vadd.f32 %v806, 0.4994258
    %v808 = vmul.f32 %v788, %v807
    %v809 = vadd.f32 %v808, 1.0
    %v810 = vrcp.pop %v809
    %v811 = vmul.f32 %v809, %v810
    %v812 = vsub.f32 1.0, %v811
    %v813 = vmul.f32 %v810, %v812
    %v814 = vadd.f32 %v810, %v813
    %vm815 = vweird.f32 %v809
    %vm816 = vweird.f32 %v810
    %vm817 = vmor %vm815, %vm816
    %v818 = vsel %vm817, %v810, %v814
    %v819 = vand.u32 2147483647, %v809
    %vm820 = vcmp.eq.f32.partialorder %v819, 8.507059e+37
    %v821 = vand.u32 %v809, 2147483648
    %v822 = vor.u32 1.1754944e-38, %v821
    %v823 = vsel %vm820, %v822, %v818
    %v824 = vmul.f32 %v799, %v823
    %v825 = vmin.f32 %v824, 1.0
    %v826 = vmax.f32 %v825, -1.0
    %v827 = vmul.f32 %v745, %v745
    %v828 = vmin.f32 16.0, %v827
    %v829 = vmul.f32 %v828, 2.1237322e-06
    %v830 = vadd.f32 %v829, 0.00028619796
    %v831 = vmul.f32 %v828, %v830
    %v832 = vadd.f32 %v831, 0.0036580483
    %v833 = vmul.f32 %v828, %v832
    %v834 = vadd.f32 %v833, 0.05243302
    %v835 = vmul.f32 %v828, %v834
    %v836 = vadd.f32 %v835, 0.18741608
    %v837 = vmul.f32 %v828, %v836
    %v838 = vadd.f32 %v837, 1.1283791
    %v839 = vmul.f32 %v745, %v838
    %v840 = vmul.f32 %v828, 3.8918573e-05
    %v841 = vadd.f32 %v840, 0.001143296
    %v842 = vmul.f32 %v828, %v841
    %v843 = vadd.f32 %v842, 0.014752088
    %v844 = vmul.f32 %v828, %v843
    %v845 = vadd.f32 %v844, 0.112945676
    %v846 = vmul.f32 %v828, %v845
    %v847 = vadd.f32 %v846, 0.4994258
    %v848 = vmul.f32 %v828, %v847
    %v849 = vadd.f32 %v848, 1.0
    %v850 = vrcp.pop %v849
    %v851 = vmul.f32 %v849, %v850
    %v852 = vsub.f32 1.0, %v851
    %v853 = vmul.f32 %v850, %v852
    %v854 = vadd.f32 %v850, %v853
    %vm855 = vweird.f32 %v849
    %vm856 = vweird.f32 %v850
    %vm857 = vmor %vm855, %vm856
    %v858 = vsel %vm857, %v850, %v854
    %v859 = vand.u32 2147483647, %v849
    %vm860 = vcmp.eq.f32.partialorder %v859, 8.507059e+37
    %v861 = vand.u32 %v849, 2147483648
    %v862 = vor.u32 1.1754944e-38, %v861
    %v863 = vsel %vm860, %v862, %v858
    %v864 = vmul.f32 %v839, %v863
    %v865 = vmin.f32 %v864, 1.0
    %v866 = vmax.f32 %v865, -1.0
    %v867 = vmul.f32 %v746, %v746
    %v868 = vmin.f32 16.0, %v867
    %v869 = vmul.f32 %v868, 2.1237322e-06
    %v870 = vadd.f32 %v869, 0.00028619796
    %v871 = vmul.f32 %v868, %v870
    %v872 = vadd.f32 %v871, 0.0036580483
    %v873 = vmul.f32 %v868, %v872
    %v874 = vadd.f32 %v873, 0.05243302
    %v875 = vmul.f32 %v868, %v874
    %v876 = vadd.f32 %v875, 0.18741608
    %v877 = vmul.f32 %v868, %v876
    %v878 = vadd.f32 %v877, 1.1283791
    %v879 = vmul.f32 %v746, %v878
    %v880 = vmul.f32 %v868, 3.8918573e-05
    %v881 = vadd.f32 %v880, 0.001143296
    %v882 = vmul.f32 %v868, %v881
    %v883 = vadd.f32 %v882, 0.014752088
    %v884 = vmul.f32 %v868, %v883
    %v885 = vadd.f32 %v884, 0.112945676
    %v886 = vmul.f32 %v868, %v885
    %v887 = vadd.f32 %v886, 0.4994258
    %v888 = vmul.f32 %v868, %v887
    %v889 = vadd.f32 %v888, 1.0
    %v890 = vrcp.pop %v889
    %v891 = vmul.f32 %v889, %v890
    %v892 = vsub.f32 1.0, %v891
    %v893 = vmul.f32 %v890, %v892
    %v894 = vadd.f32 %v890, %v893
    %vm895 = vweird.f32 %v889
    %vm896 = vweird.f32 %v890
    %vm897 = vmor %vm895, %vm896
    %v898 = vsel %vm897, %v890, %v894
    %v899 = vand.u32 2147483647, %v889
    %vm900 = vcmp.eq.f32.partialorder %v899, 8.507059e+37
    %v901 = vand.u32 %v889, 2147483648
    %v902 = vor.u32 1.1754944e-38, %v901
    %v903 = vsel %vm900, %v902, %v898
    %v904 = vmul.f32 %v879, %v903
    %v905 = vmin.f32 %v904, 1.0
    %v906 = vmax.f32 %v905, -1.0
    %v907 = vadd.f32 %v786, 1.0
    %v908 = vadd.f32 %v826, 1.0
    %v909 = vadd.f32 %v866, 1.0
    %v910 = vadd.f32 %v906, 1.0
    %v911 = vmul.f32 %v739, %v907
    %v912 = vmul.f32 %v740, %v908
    %v913 = vmul.f32 %v741, %v909
    %v914 = vmul.f32 %v742, %v910
    %916 = vset.pattern.permute.xlu0 0
    %917 = vperm.xlu0 %916, %v153
    %v918 = vpop.permute.xlu0 %917
    %921 = vset.pattern.permute.xlu0 0
    %922 = vperm.xlu0 %921, %v154
    %v923 = vpop.permute.xlu0 %922
    %926 = vset.pattern.permute.xlu0 0
    %927 = vperm.xlu0 %926, %v155
    %v928 = vpop.permute.xlu0 %927
    %931 = vset.pattern.permute.xlu0 0
    %932 = vperm.xlu0 %931, %v156
    %v933 = vpop.permute.xlu0 %932
    %v935 = vmul.f32 %v911, %v918
    %v936 = vmul.f32 %v912, %v923
    %v937 = vmul.f32 %v913, %v928
    %v938 = vmul.f32 %v914, %v933
    %v939 = vld [vmem:[%s10] sm:$0x1]
    %v941 = vperm.slane %v939, 0
    %v943 = vrot.slane %v935, 6
    %v944 = vrot.slane %v936, 6
    %v945 = vrot.slane %v937, 6
    %v946 = vrot.slane %v938, 6
    %vm947 = vcmp.lt.s32.totalorder %v233, 2
    %v948 = vsel %vm947, %v945, %v946
    %v949 = vsel %vm947, %v944, %v945
    %v950 = vsel %vm947, %v943, %v944
    %v951 = vsel %vm947, %v946, %v943
    %v952 = vadd.s32 %v281, 4294967294
    %v953 = vadd.s32 %v282, 4294967294
    %v954 = vadd.s32 %v283, 4294967294
    %v955 = vadd.s32 %v284, 4294967294
    %vm956 = vcmp.ge.s32.totalorder %v952, 0
    %vm957 = vcmp.ge.s32.totalorder %v953, 0
    %vm958 = vcmp.ge.s32.totalorder %v954, 0
    %vm959 = vcmp.ge.s32.totalorder %v955, 0
    %vm960 = vcmp.lt.s32.totalorder %v952, 16
    %vm961 = vcmp.lt.s32.totalorder %v953, 16
    %vm962 = vcmp.lt.s32.totalorder %v954, 16
    %vm963 = vcmp.lt.s32.totalorder %v955, 16
    %vm964 = vmand %vm956, %vm960
    %vm965 = vmand %vm957, %vm961
    %vm966 = vmand %vm958, %vm962
    %vm967 = vmand %vm959, %vm963
    %v968 = vsel %vm964, 1, 0
    %v969 = vsel %vm965, 1, 0
    %v970 = vsel %vm966, 1, 0
    %v971 = vsel %vm967, 1, 0
    %vm972 = vcmp.eq.s32.totalorder %v968, 1
    %vm973 = vcmp.eq.s32.totalorder %v969, 1
    %vm974 = vcmp.eq.s32.totalorder %v970, 1
    %vm975 = vcmp.eq.s32.totalorder %v971, 1
    %v976 = vsel %vm972, %v951, 0.0
    %v977 = vsel %vm973, %v950, 0.0
    %v978 = vsel %vm974, %v949, 0.0
    %v979 = vsel %vm975, %v948, 0.0
    %v980 = vld [vmem:[#allocation7] sm:$0xff]
    %v981 = vld [vmem:[#allocation7 + $0x8] sm:$0xff]
    %v982 = vld [vmem:[#allocation7 + $0x10] sm:$0xff]
    %v983 = vld [vmem:[#allocation7 + $0x18] sm:$0xff]
    %v984 = vld [vmem:[#allocation7 + $0x20] sm:$0xff]
    %v985 = vld [vmem:[#allocation7 + $0x28] sm:$0xff]
    %v986 = vld [vmem:[#allocation7 + $0x30] sm:$0xff]
    %v987 = vld [vmem:[#allocation7 + $0x38] sm:$0xff]
    %v988 = vld [vmem:[#allocation7 + $0x40] sm:$0xff]
    %v989 = vld [vmem:[#allocation7 + $0x48] sm:$0xff]
    %v990 = vld [vmem:[#allocation7 + $0x50] sm:$0xff]
    %v991 = vld [vmem:[#allocation7 + $0x58] sm:$0xff]
    %v992 = vld [vmem:[#allocation7 + $0x60] sm:$0xff]
    %v993 = vld [vmem:[#allocation7 + $0x68] sm:$0xff]
    %v994 = vld [vmem:[#allocation7 + $0x70] sm:$0xff]
    %v995 = vld [vmem:[#allocation7 + $0x78] sm:$0xff]
    %996 = vmatpush.msra.mxu0 %v995
    %997 = vmatpush.msra.mxu0 %v994
    %998 = vmatpush.msra.mxu0 %v993
    %999 = vmatpush.msra.mxu0 %v992
    %1000 = vmatpush.msra.mxu0 %v991
    %1001 = vmatpush.msra.mxu0 %v990
    %1002 = vmatpush.msra.mxu0 %v989
    %1003 = vmatpush.msra.mxu0 %v988
    %1004 = vmatpush.msra.mxu0 %v987
    %1005 = vmatpush.msra.mxu0 %v986
    %1006 = vmatpush.msra.mxu0 %v985
    %1007 = vmatpush.msra.mxu0 %v984
    %1008 = vmatpush.msra.mxu0 %v983
    %1009 = vmatpush.msra.mxu0 %v982
    %1010 = vmatpush.msra.mxu0 %v981
    %1011 = vmatpush.msra.mxu0 %v980
    %1012 = vmatmul.f32.gmra.mxu0 %v976
    %v1013 = vpop.f32.mrf.mxu0
    %v1014 = vadd.f32 0.0, %v1013
    %1015 = vmatmul.f32.gmra.mxu0 %v977
    %v1016 = vpop.f32.mrf.mxu0
    %v1017 = vadd.f32 0.0, %v1016
    %1018 = vmatmul.f32.gmra.mxu0 %v978
    %v1019 = vpop.f32.mrf.mxu0
    %v1020 = vadd.f32 0.0, %v1019
    %1021 = vmatmul.f32.gmra.mxu0 %v979
    %v1022 = vpop.f32.mrf.mxu0
    %v1023 = vadd.f32 0.0, %v1022
    %1024 = vdwg.mxu0
    %v1025 = vadd.f32 %v941, %v1014
    %v1026 = vadd.f32 %v941, %v1017
    %v1027 = vadd.f32 %v941, %v1020
    %v1028 = vadd.f32 %v941, %v1023
    %v1029 = vrot.slane %v935, 7
    %v1030 = vrot.slane %v936, 7
    %v1031 = vrot.slane %v937, 7
    %v1032 = vrot.slane %v938, 7
    %vm1033 = vcmp.lt.s32.totalorder %v233, 1
    %v1034 = vsel %vm1033, %v1031, %v1032
    %v1035 = vsel %vm1033, %v1030, %v1031
    %v1036 = vsel %vm1033, %v1029, %v1030
    %v1037 = vsel %vm1033, %v1032, %v1029
    %v1038 = vadd.s32 %v281, 4294967295
    %v1039 = vadd.s32 %v282, 4294967295
    %v1040 = vadd.s32 %v283, 4294967295
    %v1041 = vadd.s32 %v284, 4294967295
    %vm1042 = vcmp.ge.s32.totalorder %v1038, 0
    %vm1043 = vcmp.ge.s32.totalorder %v1039, 0
    %vm1044 = vcmp.ge.s32.totalorder %v1040, 0
    %vm1045 = vcmp.ge.s32.totalorder %v1041, 0
    %vm1046 = vcmp.lt.s32.totalorder %v1038, 16
    %vm1047 = vcmp.lt.s32.totalorder %v1039, 16
    %vm1048 = vcmp.lt.s32.totalorder %v1040, 16
    %vm1049 = vcmp.lt.s32.totalorder %v1041, 16
    %vm1050 = vmand %vm1042, %vm1046
    %vm1051 = vmand %vm1043, %vm1047
    %vm1052 = vmand %vm1044, %vm1048
    %vm1053 = vmand %vm1045, %vm1049
    %v1054 = vsel %vm1050, 1, 0
    %v1055 = vsel %vm1051, 1, 0
    %v1056 = vsel %vm1052, 1, 0
    %v1057 = vsel %vm1053, 1, 0
    %vm1058 = vcmp.eq.s32.totalorder %v1054, 1
    %vm1059 = vcmp.eq.s32.totalorder %v1055, 1
    %vm1060 = vcmp.eq.s32.totalorder %v1056, 1
    %vm1061 = vcmp.eq.s32.totalorder %v1057, 1
    %v1062 = vsel %vm1058, %v1037, 0.0
    %v1063 = vsel %vm1059, %v1036, 0.0
    %v1064 = vsel %vm1060, %v1035, 0.0
    %v1065 = vsel %vm1061, %v1034, 0.0
    %s1066 = scalar_lea.vmem [#allocation7], 128
    %v1067 = vld [vmem:[%s1066] sm:$0xff]
    %v1068 = vld [vmem:[%s1066 + $0x8] sm:$0xff]
    %v1069 = vld [vmem:[%s1066 + $0x10] sm:$0xff]
    %v1070 = vld [vmem:[%s1066 + $0x18] sm:$0xff]
    %v1071 = vld [vmem:[%s1066 + $0x20] sm:$0xff]
    %v1072 = vld [vmem:[%s1066 + $0x28] sm:$0xff]
    %v1073 = vld [vmem:[%s1066 + $0x30] sm:$0xff]
    %v1074 = vld [vmem:[%s1066 + $0x38] sm:$0xff]
    %v1075 = vld [vmem:[%s1066 + $0x40] sm:$0xff]
    %v1076 = vld [vmem:[%s1066 + $0x48] sm:$0xff]
    %v1077 = vld [vmem:[%s1066 + $0x50] sm:$0xff]
    %v1078 = vld [vmem:[%s1066 + $0x58] sm:$0xff]
    %v1079 = vld [vmem:[%s1066 + $0x60] sm:$0xff]
    %v1080 = vld [vmem:[%s1066 + $0x68] sm:$0xff]
    %v1081 = vld [vmem:[%s1066 + $0x70] sm:$0xff]
    %v1082 = vld [vmem:[%s1066 + $0x78] sm:$0xff]
    %1083 = vmatpush.msra.mxu0 %v1082
    %1084 = vmatpush.msra.mxu0 %v1081
    %1085 = vmatpush.msra.mxu0 %v1080
    %1086 = vmatpush.msra.mxu0 %v1079
    %1087 = vmatpush.msra.mxu0 %v1078
    %1088 = vmatpush.msra.mxu0 %v1077
    %1089 = vmatpush.msra.mxu0 %v1076
    %1090 = vmatpush.msra.mxu0 %v1075
    %1091 = vmatpush.msra.mxu0 %v1074
    %1092 = vmatpush.msra.mxu0 %v1073
    %1093 = vmatpush.msra.mxu0 %v1072
    %1094 = vmatpush.msra.mxu0 %v1071
    %1095 = vmatpush.msra.mxu0 %v1070
    %1096 = vmatpush.msra.mxu0 %v1069
    %1097 = vmatpush.msra.mxu0 %v1068
    %1098 = vmatpush.msra.mxu0 %v1067
    %1099 = vmatmul.f32.gmra.mxu0 %v1062
    %v1100 = vpop.f32.mrf.mxu0
    %v1101 = vadd.f32 0.0, %v1100
    %1102 = vmatmul.f32.gmra.mxu0 %v1063
    %v1103 = vpop.f32.mrf.mxu0
    %v1104 = vadd.f32 0.0, %v1103
    %1105 = vmatmul.f32.gmra.mxu0 %v1064
    %v1106 = vpop.f32.mrf.mxu0
    %v1107 = vadd.f32 0.0, %v1106
    %1108 = vmatmul.f32.gmra.mxu0 %v1065
    %v1109 = vpop.f32.mrf.mxu0
    %v1110 = vadd.f32 0.0, %v1109
    %1111 = vdwg.mxu0
    %v1112 = vadd.f32 %v1025, %v1101
    %v1113 = vadd.f32 %v1026, %v1104
    %v1114 = vadd.f32 %v1027, %v1107
    %v1115 = vadd.f32 %v1028, %v1110
    %s1116 = scalar_lea.vmem [#allocation7], 256
    %v1117 = vld [vmem:[%s1116] sm:$0xff]
    %v1118 = vld [vmem:[%s1116 + $0x8] sm:$0xff]
    %v1119 = vld [vmem:[%s1116 + $0x10] sm:$0xff]
    %v1120 = vld [vmem:[%s1116 + $0x18] sm:$0xff]
    %v1121 = vld [vmem:[%s1116 + $0x20] sm:$0xff]
    %v1122 = vld [vmem:[%s1116 + $0x28] sm:$0xff]
    %v1123 = vld [vmem:[%s1116 + $0x30] sm:$0xff]
    %v1124 = vld [vmem:[%s1116 + $0x38] sm:$0xff]
    %v1125 = vld [vmem:[%s1116 + $0x40] sm:$0xff]
    %v1126 = vld [vmem:[%s1116 + $0x48] sm:$0xff]
    %v1127 = vld [vmem:[%s1116 + $0x50] sm:$0xff]
    %v1128 = vld [vmem:[%s1116 + $0x58] sm:$0xff]
    %v1129 = vld [vmem:[%s1116 + $0x60] sm:$0xff]
    %v1130 = vld [vmem:[%s1116 + $0x68] sm:$0xff]
    %v1131 = vld [vmem:[%s1116 + $0x70] sm:$0xff]
    %v1132 = vld [vmem:[%s1116 + $0x78] sm:$0xff]
    %1133 = vmatpush.msra.mxu0 %v1132
    %1134 = vmatpush.msra.mxu0 %v1131
    %1135 = vmatpush.msra.mxu0 %v1130
    %1136 = vmatpush.msra.mxu0 %v1129
    %1137 = vmatpush.msra.mxu0 %v1128
    %1138 = vmatpush.msra.mxu0 %v1127
    %1139 = vmatpush.msra.mxu0 %v1126
    %1140 = vmatpush.msra.mxu0 %v1125
    %1141 = vmatpush.msra.mxu0 %v1124
    %1142 = vmatpush.msra.mxu0 %v1123
    %1143 = vmatpush.msra.mxu0 %v1122
    %1144 = vmatpush.msra.mxu0 %v1121
    %1145 = vmatpush.msra.mxu0 %v1120
    %1146 = vmatpush.msra.mxu0 %v1119
    %1147 = vmatpush.msra.mxu0 %v1118
    %1148 = vmatpush.msra.mxu0 %v1117
    %1149 = vmatmul.f32.gmra.mxu0 %v935
    %v1150 = vpop.f32.mrf.mxu0
    %v1151 = vadd.f32 0.0, %v1150
    %1152 = vmatmul.f32.gmra.mxu0 %v936
    %v1153 = vpop.f32.mrf.mxu0
    %v1154 = vadd.f32 0.0, %v1153
    %1155 = vmatmul.f32.gmra.mxu0 %v937
    %v1156 = vpop.f32.mrf.mxu0
    %v1157 = vadd.f32 0.0, %v1156
    %1158 = vmatmul.f32.gmra.mxu0 %v938
    %v1159 = vpop.f32.mrf.mxu0
    %v1160 = vadd.f32 0.0, %v1159
    %1161 = vdwg.mxu0
    %v1162 = vadd.f32 %v1112, %v1151
    %v1163 = vadd.f32 %v1113, %v1154
    %v1164 = vadd.f32 %v1114, %v1157
    %v1165 = vadd.f32 %v1115, %v1160
    %v1166 = vrot.slane %v935, 1
    %v1167 = vrot.slane %v936, 1
    %v1168 = vrot.slane %v937, 1
    %v1169 = vrot.slane %v938, 1
    %vm1170 = vcmp.lt.s32.totalorder %v233, 7
    %v1171 = vsel %vm1170, %v1168, %v1169
    %v1172 = vsel %vm1170, %v1167, %v1168
    %v1173 = vsel %vm1170, %v1166, %v1167
    %v1174 = vsel %vm1170, %v1169, %v1166
    %v1175 = vadd.s32 %v281, 1
    %v1176 = vadd.s32 %v282, 1
    %v1177 = vadd.s32 %v283, 1
    %v1178 = vadd.s32 %v284, 1
    %vm1179 = vcmp.ge.s32.totalorder %v1175, 0
    %vm1180 = vcmp.ge.s32.totalorder %v1176, 0
    %vm1181 = vcmp.ge.s32.totalorder %v1177, 0
    %vm1182 = vcmp.ge.s32.totalorder %v1178, 0
    %vm1183 = vcmp.lt.s32.totalorder %v1175, 16
    %vm1184 = vcmp.lt.s32.totalorder %v1176, 16
    %vm1185 = vcmp.lt.s32.totalorder %v1177, 16
    %vm1186 = vcmp.lt.s32.totalorder %v1178, 16
    %vm1187 = vmand %vm1179, %vm1183
    %vm1188 = vmand %vm1180, %vm1184
    %vm1189 = vmand %vm1181, %vm1185
    %vm1190 = vmand %vm1182, %vm1186
    %v1191 = vsel %vm1187, 1, 0
    %v1192 = vsel %vm1188, 1, 0
    %v1193 = vsel %vm1189, 1, 0
    %v1194 = vsel %vm1190, 1, 0
    %vm1195 = vcmp.eq.s32.totalorder %v1191, 1
    %vm1196 = vcmp.eq.s32.totalorder %v1192, 1
    %vm1197 = vcmp.eq.s32.totalorder %v1193, 1
    %vm1198 = vcmp.eq.s32.totalorder %v1194, 1
    %v1199 = vsel %vm1195, %v1173, 0.0
    %v1200 = vsel %vm1196, %v1172, 0.0
    %v1201 = vsel %vm1197, %v1171, 0.0
    %v1202 = vsel %vm1198, %v1174, 0.0
    %s1203 = scalar_lea.vmem [#allocation7], 384
    %v1204 = vld [vmem:[%s1203] sm:$0xff]
    %v1205 = vld [vmem:[%s1203 + $0x8] sm:$0xff]
    %v1206 = vld [vmem:[%s1203 + $0x10] sm:$0xff]
    %v1207 = vld [vmem:[%s1203 + $0x18] sm:$0xff]
    %v1208 = vld [vmem:[%s1203 + $0x20] sm:$0xff]
    %v1209 = vld [vmem:[%s1203 + $0x28] sm:$0xff]
    %v1210 = vld [vmem:[%s1203 + $0x30] sm:$0xff]
    %v1211 = vld [vmem:[%s1203 + $0x38] sm:$0xff]
    %v1212 = vld [vmem:[%s1203 + $0x40] sm:$0xff]
    %v1213 = vld [vmem:[%s1203 + $0x48] sm:$0xff]
    %v1214 = vld [vmem:[%s1203 + $0x50] sm:$0xff]
    %v1215 = vld [vmem:[%s1203 + $0x58] sm:$0xff]
    %v1216 = vld [vmem:[%s1203 + $0x60] sm:$0xff]
    %v1217 = vld [vmem:[%s1203 + $0x68] sm:$0xff]
    %v1218 = vld [vmem:[%s1203 + $0x70] sm:$0xff]
    %v1219 = vld [vmem:[%s1203 + $0x78] sm:$0xff]
    %1220 = vmatpush.msra.mxu0 %v1219
    %1221 = vmatpush.msra.mxu0 %v1218
    %1222 = vmatpush.msra.mxu0 %v1217
    %1223 = vmatpush.msra.mxu0 %v1216
    %1224 = vmatpush.msra.mxu0 %v1215
    %1225 = vmatpush.msra.mxu0 %v1214
    %1226 = vmatpush.msra.mxu0 %v1213
    %1227 = vmatpush.msra.mxu0 %v1212
    %1228 = vmatpush.msra.mxu0 %v1211
    %1229 = vmatpush.msra.mxu0 %v1210
    %1230 = vmatpush.msra.mxu0 %v1209
    %1231 = vmatpush.msra.mxu0 %v1208
    %1232 = vmatpush.msra.mxu0 %v1207
    %1233 = vmatpush.msra.mxu0 %v1206
    %1234 = vmatpush.msra.mxu0 %v1205
    %1235 = vmatpush.msra.mxu0 %v1204
    %1236 = vmatmul.f32.gmra.mxu0 %v1199
    %v1237 = vpop.f32.mrf.mxu0
    %v1238 = vadd.f32 0.0, %v1237
    %1239 = vmatmul.f32.gmra.mxu0 %v1200
    %v1240 = vpop.f32.mrf.mxu0
    %v1241 = vadd.f32 0.0, %v1240
    %1242 = vmatmul.f32.gmra.mxu0 %v1201
    %v1243 = vpop.f32.mrf.mxu0
    %v1244 = vadd.f32 0.0, %v1243
    %1245 = vmatmul.f32.gmra.mxu0 %v1202
    %v1246 = vpop.f32.mrf.mxu0
    %v1247 = vadd.f32 0.0, %v1246
    %1248 = vdwg.mxu0
    %v1249 = vadd.f32 %v1162, %v1238
    %v1250 = vadd.f32 %v1163, %v1241
    %v1251 = vadd.f32 %v1164, %v1244
    %v1252 = vadd.f32 %v1165, %v1247
    %v1253 = vrot.slane %v935, 2
    %v1254 = vrot.slane %v936, 2
    %v1255 = vrot.slane %v937, 2
    %v1256 = vrot.slane %v938, 2
    %vm1257 = vcmp.lt.s32.totalorder %v233, 6
    %v1258 = vsel %vm1257, %v1255, %v1256
    %v1259 = vsel %vm1257, %v1254, %v1255
    %v1260 = vsel %vm1257, %v1253, %v1254
    %v1261 = vsel %vm1257, %v1256, %v1253
    %v1262 = vadd.s32 %v281, 2
    %v1263 = vadd.s32 %v282, 2
    %v1264 = vadd.s32 %v283, 2
    %v1265 = vadd.s32 %v284, 2
    %vm1266 = vcmp.ge.s32.totalorder %v1262, 0
    %vm1267 = vcmp.ge.s32.totalorder %v1263, 0
    %vm1268 = vcmp.ge.s32.totalorder %v1264, 0
    %vm1269 = vcmp.ge.s32.totalorder %v1265, 0
    %vm1270 = vcmp.lt.s32.totalorder %v1262, 16
    %vm1271 = vcmp.lt.s32.totalorder %v1263, 16
    %vm1272 = vcmp.lt.s32.totalorder %v1264, 16
    %vm1273 = vcmp.lt.s32.totalorder %v1265, 16
    %vm1274 = vmand %vm1266, %vm1270
    %vm1275 = vmand %vm1267, %vm1271
    %vm1276 = vmand %vm1268, %vm1272
    %vm1277 = vmand %vm1269, %vm1273
    %v1278 = vsel %vm1274, 1, 0
    %v1279 = vsel %vm1275, 1, 0
    %v1280 = vsel %vm1276, 1, 0
    %v1281 = vsel %vm1277, 1, 0
    %vm1282 = vcmp.eq.s32.totalorder %v1278, 1
    %vm1283 = vcmp.eq.s32.totalorder %v1279, 1
    %vm1284 = vcmp.eq.s32.totalorder %v1280, 1
    %vm1285 = vcmp.eq.s32.totalorder %v1281, 1
    %v1286 = vsel %vm1282, %v1260, 0.0
    %v1287 = vsel %vm1283, %v1259, 0.0
    %v1288 = vsel %vm1284, %v1258, 0.0
    %v1289 = vsel %vm1285, %v1261, 0.0
    %s1290 = scalar_lea.vmem [#allocation7], 512
    %v1291 = vld [vmem:[%s1290] sm:$0xff]
    %v1292 = vld [vmem:[%s1290 + $0x8] sm:$0xff]
    %v1293 = vld [vmem:[%s1290 + $0x10] sm:$0xff]
    %v1294 = vld [vmem:[%s1290 + $0x18] sm:$0xff]
    %v1295 = vld [vmem:[%s1290 + $0x20] sm:$0xff]
    %v1296 = vld [vmem:[%s1290 + $0x28] sm:$0xff]
    %v1297 = vld [vmem:[%s1290 + $0x30] sm:$0xff]
    %v1298 = vld [vmem:[%s1290 + $0x38] sm:$0xff]
    %v1299 = vld [vmem:[%s1290 + $0x40] sm:$0xff]
    %v1300 = vld [vmem:[%s1290 + $0x48] sm:$0xff]
    %v1301 = vld [vmem:[%s1290 + $0x50] sm:$0xff]
    %v1302 = vld [vmem:[%s1290 + $0x58] sm:$0xff]
    %v1303 = vld [vmem:[%s1290 + $0x60] sm:$0xff]
    %v1304 = vld [vmem:[%s1290 + $0x68] sm:$0xff]
    %v1305 = vld [vmem:[%s1290 + $0x70] sm:$0xff]
    %v1306 = vld [vmem:[%s1290 + $0x78] sm:$0xff]
    %1307 = vmatpush.msra.mxu0 %v1306
    %1308 = vmatpush.msra.mxu0 %v1305
    %1309 = vmatpush.msra.mxu0 %v1304
    %1310 = vmatpush.msra.mxu0 %v1303
    %1311 = vmatpush.msra.mxu0 %v1302
    %1312 = vmatpush.msra.mxu0 %v1301
    %1313 = vmatpush.msra.mxu0 %v1300
    %1314 = vmatpush.msra.mxu0 %v1299
    %1315 = vmatpush.msra.mxu0 %v1298
    %1316 = vmatpush.msra.mxu0 %v1297
    %1317 = vmatpush.msra.mxu0 %v1296
    %1318 = vmatpush.msra.mxu0 %v1295
    %1319 = vmatpush.msra.mxu0 %v1294
    %1320 = vmatpush.msra.mxu0 %v1293
    %1321 = vmatpush.msra.mxu0 %v1292
    %1322 = vmatpush.msra.mxu0 %v1291
    %1323 = vmatmul.f32.gmra.mxu0 %v1286
    %v1324 = vpop.f32.mrf.mxu0
    %v1325 = vadd.f32 0.0, %v1324
    %1326 = vmatmul.f32.gmra.mxu0 %v1287
    %v1327 = vpop.f32.mrf.mxu0
    %v1328 = vadd.f32 0.0, %v1327
    %1329 = vmatmul.f32.gmra.mxu0 %v1288
    %v1330 = vpop.f32.mrf.mxu0
    %v1331 = vadd.f32 0.0, %v1330
    %1332 = vmatmul.f32.gmra.mxu0 %v1289
    %v1333 = vpop.f32.mrf.mxu0
    %v1334 = vadd.f32 0.0, %v1333
    %1335 = vdwg.mxu0
    %v1336 = vadd.f32 %v1249, %v1325
    %v1337 = vadd.f32 %v1250, %v1328
    %v1338 = vadd.f32 %v1251, %v1331
    %v1339 = vadd.f32 %v1252, %v1334
    %v1340 = vld [vmem:[%s11] sm:$0x1]
    %v1341 = vld [vmem:[%s12] sm:$0x1]
    %1342 = vadd.xlane.f32.xlu0 %v1336
    %v1343 = vpop.xlane.xlu0 %1342
    %1344 = vadd.xlane.f32.xlu0 %v1337
    %v1345 = vpop.xlane.xlu0 %1344
    %1346 = vadd.xlane.f32.xlu0 %v1338
    %v1347 = vpop.xlane.xlu0 %1346
    %1348 = vadd.xlane.f32.xlu0 %v1339
    %v1349 = vpop.xlane.xlu0 %1348
    %v1350 = vmul.f32 %v1336, %v1336
    %v1351 = vmul.f32 %v1337, %v1337
    %v1352 = vmul.f32 %v1338, %v1338
    %v1353 = vmul.f32 %v1339, %v1339
    %1354 = vadd.xlane.f32.xlu0 %v1350
    %v1355 = vpop.xlane.xlu0 %1354
    %1356 = vadd.xlane.f32.xlu0 %v1351
    %v1357 = vpop.xlane.xlu0 %1356
    %1358 = vadd.xlane.f32.xlu0 %v1352
    %v1359 = vpop.xlane.xlu0 %1358
    %1360 = vadd.xlane.f32.xlu0 %v1353
    %v1361 = vpop.xlane.xlu0 %1360
    %v1362 = vmul.f32 %v1343, %v656
    %v1363 = vmul.f32 %v1345, %v656
    %v1364 = vmul.f32 %v1347, %v656
    %v1365 = vmul.f32 %v1349, %v656
    %v1366 = vmul.f32 %v1355, %v656
    %v1367 = vmul.f32 %v1357, %v656
    %v1368 = vmul.f32 %v1359, %v656
    %v1369 = vmul.f32 %v1361, %v656
    %v1370 = vmul.f32 %v1362, %v1362
    %v1371 = vmul.f32 %v1363, %v1363
    %v1372 = vmul.f32 %v1364, %v1364
    %v1373 = vmul.f32 %v1365, %v1365
    %v1374 = vsub.f32 %v1366, %v1370
    %v1375 = vsub.f32 %v1367, %v1371
    %v1376 = vsub.f32 %v1368, %v1372
    %v1377 = vsub.f32 %v1369, %v1373
    %v1378 = vsub.f32 %v1336, %v1362
    %v1379 = vsub.f32 %v1337, %v1363
    %v1380 = vsub.f32 %v1338, %v1364
    %v1381 = vsub.f32 %v1339, %v1365
    %v1382 = vadd.f32 %v1374, 1e-05
    %v1383 = vadd.f32 %v1375, 1e-05
    %v1384 = vadd.f32 %v1376, 1e-05
    %v1385 = vadd.f32 %v1377, 1e-05
    %v1386 = vrsqrt.pop %v1382
    %v1387 = vmul.f32 %v1386, %v1382
    %v1388 = vmul.f32 %v1387, %v1386
    %v1389 = vmul.f32 0.5, %v1388
    %v1390 = vsub.f32 1.5, %v1389
    %v1391 = vmul.f32 %v1386, %v1390
    %vm1392 = vweird.f32 %v1382
    %vm1393 = vweird.f32 %v1386
    %vm1394 = vmor %vm1392, %vm1393
    %v1395 = vsel %vm1394, %v1386, %v1391
    %v1396 = vrsqrt.pop %v1383
    %v1397 = vmul.f32 %v1396, %v1383
    %v1398 = vmul.f32 %v1397, %v1396
    %v1399 = vmul.f32 0.5, %v1398
    %v1400 = vsub.f32 1.5, %v1399
    %v1401 = vmul.f32 %v1396, %v1400
    %vm1402 = vweird.f32 %v1383
    %vm1403 = vweird.f32 %v1396
    %vm1404 = vmor %vm1402, %vm1403
    %v1405 = vsel %vm1404, %v1396, %v1401
    %v1406 = vrsqrt.pop %v1384
    %v1407 = vmul.f32 %v1406, %v1384
    %v1408 = vmul.f32 %v1407, %v1406
    %v1409 = vmul.f32 0.5, %v1408
    %v1410 = vsub.f32 1.5, %v1409
    %v1411 = vmul.f32 %v1406, %v1410
    %vm1412 = vweird.f32 %v1384
    %vm1413 = vweird.f32 %v1406
    %vm1414 = vmor %vm1412, %vm1413
    %v1415 = vsel %vm1414, %v1406, %v1411
    %v1416 = vrsqrt.pop %v1385
    %v1417 = vmul.f32 %v1416, %v1385
    %v1418 = vmul.f32 %v1417, %v1416
    %v1419 = vmul.f32 0.5, %v1418
    %v1420 = vsub.f32 1.5, %v1419
    %v1421 = vmul.f32 %v1416, %v1420
    %vm1422 = vweird.f32 %v1385
    %vm1423 = vweird.f32 %v1416
    %vm1424 = vmor %vm1422, %vm1423
    %v1425 = vsel %vm1424, %v1416, %v1421
    %v1426 = vmul.f32 %v1378, %v1395
    %v1427 = vmul.f32 %v1379, %v1405
    %v1428 = vmul.f32 %v1380, %v1415
    %v1429 = vmul.f32 %v1381, %v1425
    %v1431 = vperm.slane %v1340, 0
    %v1433 = vmul.f32 %v1426, %v1431
    %v1434 = vmul.f32 %v1427, %v1431
    %v1435 = vmul.f32 %v1428, %v1431
    %v1436 = vmul.f32 %v1429, %v1431
    %v1438 = vperm.slane %v1341, 0
    %v1440 = vadd.f32 %v1433, %v1438
    %v1441 = vadd.f32 %v1434, %v1438
    %v1442 = vadd.f32 %v1435, %v1438
    %v1443 = vadd.f32 %v1436, %v1438
    %v1444 = vmul.f32 %v1440, 0.5
    %v1445 = vmul.f32 %v1441, 0.5
    %v1446 = vmul.f32 %v1442, 0.5
    %v1447 = vmul.f32 %v1443, 0.5
    %v1448 = vmul.f32 %v1440, %v406
    %v1449 = vmul.f32 %v1441, %v406
    %v1450 = vmul.f32 %v1442, %v406
    %v1451 = vmul.f32 %v1443, %v406
    %v1452 = vmul.f32 %v1448, %v1448
    %v1453 = vmin.f32 16.0, %v1452
    %v1454 = vmul.f32 %v1453, 2.1237322e-06
    %v1455 = vadd.f32 %v1454, 0.00028619796
    %v1456 = vmul.f32 %v1453, %v1455
    %v1457 = vadd.f32 %v1456, 0.0036580483
    %v1458 = vmul.f32 %v1453, %v1457
    %v1459 = vadd.f32 %v1458, 0.05243302
    %v1460 = vmul.f32 %v1453, %v1459
    %v1461 = vadd.f32 %v1460, 0.18741608
    %v1462 = vmul.f32 %v1453, %v1461
    %v1463 = vadd.f32 %v1462, 1.1283791
    %v1464 = vmul.f32 %v1448, %v1463
    %v1465 = vmul.f32 %v1453, 3.8918573e-05
    %v1466 = vadd.f32 %v1465, 0.001143296
    %v1467 = vmul.f32 %v1453, %v1466
    %v1468 = vadd.f32 %v1467, 0.014752088
    %v1469 = vmul.f32 %v1453, %v1468
    %v1470 = vadd.f32 %v1469, 0.112945676
    %v1471 = vmul.f32 %v1453, %v1470
    %v1472 = vadd.f32 %v1471, 0.4994258
    %v1473 = vmul.f32 %v1453, %v1472
    %v1474 = vadd.f32 %v1473, 1.0
    %v1475 = vrcp.pop %v1474
    %v1476 = vmul.f32 %v1474, %v1475
    %v1477 = vsub.f32 1.0, %v1476
    %v1478 = vmul.f32 %v1475, %v1477
    %v1479 = vadd.f32 %v1475, %v1478
    %vm1480 = vweird.f32 %v1474
    %vm1481 = vweird.f32 %v1475
    %vm1482 = vmor %vm1480, %vm1481
    %v1483 = vsel %vm1482, %v1475, %v1479
    %v1484 = vand.u32 2147483647, %v1474
    %vm1485 = vcmp.eq.f32.partialorder %v1484, 8.507059e+37
    %v1486 = vand.u32 %v1474, 2147483648
    %v1487 = vor.u32 1.1754944e-38, %v1486
    %v1488 = vsel %vm1485, %v1487, %v1483
    %v1489 = vmul.f32 %v1464, %v1488
    %v1490 = vmin.f32 %v1489, 1.0
    %v1491 = vmax.f32 %v1490, -1.0
    %v1492 = vmul.f32 %v1449, %v1449
    %v1493 = vmin.f32 16.0, %v1492
    %v1494 = vmul.f32 %v1493, 2.1237322e-06
    %v1495 = vadd.f32 %v1494, 0.00028619796
    %v1496 = vmul.f32 %v1493, %v1495
    %v1497 = vadd.f32 %v1496, 0.0036580483
    %v1498 = vmul.f32 %v1493, %v1497
    %v1499 = vadd.f32 %v1498, 0.05243302
    %v1500 = vmul.f32 %v1493, %v1499
    %v1501 = vadd.f32 %v1500, 0.18741608
    %v1502 = vmul.f32 %v1493, %v1501
    %v1503 = vadd.f32 %v1502, 1.1283791
    %v1504 = vmul.f32 %v1449, %v1503
    %v1505 = vmul.f32 %v1493, 3.8918573e-05
    %v1506 = vadd.f32 %v1505, 0.001143296
    %v1507 = vmul.f32 %v1493, %v1506
    %v1508 = vadd.f32 %v1507, 0.014752088
    %v1509 = vmul.f32 %v1493, %v1508
    %v1510 = vadd.f32 %v1509, 0.112945676
    %v1511 = vmul.f32 %v1493, %v1510
    %v1512 = vadd.f32 %v1511, 0.4994258
    %v1513 = vmul.f32 %v1493, %v1512
    %v1514 = vadd.f32 %v1513, 1.0
    %v1515 = vrcp.pop %v1514
    %v1516 = vmul.f32 %v1514, %v1515
    %v1517 = vsub.f32 1.0, %v1516
    %v1518 = vmul.f32 %v1515, %v1517
    %v1519 = vadd.f32 %v1515, %v1518
    %vm1520 = vweird.f32 %v1514
    %vm1521 = vweird.f32 %v1515
    %vm1522 = vmor %vm1520, %vm1521
    %v1523 = vsel %vm1522, %v1515, %v1519
    %v1524 = vand.u32 2147483647, %v1514
    %vm1525 = vcmp.eq.f32.partialorder %v1524, 8.507059e+37
    %v1526 = vand.u32 %v1514, 2147483648
    %v1527 = vor.u32 1.1754944e-38, %v1526
    %v1528 = vsel %vm1525, %v1527, %v1523
    %v1529 = vmul.f32 %v1504, %v1528
    %v1530 = vmin.f32 %v1529, 1.0
    %v1531 = vmax.f32 %v1530, -1.0
    %v1532 = vmul.f32 %v1450, %v1450
    %v1533 = vmin.f32 16.0, %v1532
    %v1534 = vmul.f32 %v1533, 2.1237322e-06
    %v1535 = vadd.f32 %v1534, 0.00028619796
    %v1536 = vmul.f32 %v1533, %v1535
    %v1537 = vadd.f32 %v1536, 0.0036580483
    %v1538 = vmul.f32 %v1533, %v1537
    %v1539 = vadd.f32 %v1538, 0.05243302
    %v1540 = vmul.f32 %v1533, %v1539
    %v1541 = vadd.f32 %v1540, 0.18741608
    %v1542 = vmul.f32 %v1533, %v1541
    %v1543 = vadd.f32 %v1542, 1.1283791
    %v1544 = vmul.f32 %v1450, %v1543
    %v1545 = vmul.f32 %v1533, 3.8918573e-05
    %v1546 = vadd.f32 %v1545, 0.001143296
    %v1547 = vmul.f32 %v1533, %v1546
    %v1548 = vadd.f32 %v1547, 0.014752088
    %v1549 = vmul.f32 %v1533, %v1548
    %v1550 = vadd.f32 %v1549, 0.112945676
    %v1551 = vmul.f32 %v1533, %v1550
    %v1552 = vadd.f32 %v1551, 0.4994258
    %v1553 = vmul.f32 %v1533, %v1552
    %v1554 = vadd.f32 %v1553, 1.0
    %v1555 = vrcp.pop %v1554
    %v1556 = vmul.f32 %v1554, %v1555
    %v1557 = vsub.f32 1.0, %v1556
    %v1558 = vmul.f32 %v1555, %v1557
    %v1559 = vadd.f32 %v1555, %v1558
    %vm1560 = vweird.f32 %v1554
    %vm1561 = vweird.f32 %v1555
    %vm1562 = vmor %vm1560, %vm1561
    %v1563 = vsel %vm1562, %v1555, %v1559
    %v1564 = vand.u32 2147483647, %v1554
    %vm1565 = vcmp.eq.f32.partialorder %v1564, 8.507059e+37
    %v1566 = vand.u32 %v1554, 2147483648
    %v1567 = vor.u32 1.1754944e-38, %v1566
    %v1568 = vsel %vm1565, %v1567, %v1563
    %v1569 = vmul.f32 %v1544, %v1568
    %v1570 = vmin.f32 %v1569, 1.0
    %v1571 = vmax.f32 %v1570, -1.0
    %v1572 = vmul.f32 %v1451, %v1451
    %v1573 = vmin.f32 16.0, %v1572
    %v1574 = vmul.f32 %v1573, 2.1237322e-06
    %v1575 = vadd.f32 %v1574, 0.00028619796
    %v1576 = vmul.f32 %v1573, %v1575
    %v1577 = vadd.f32 %v1576, 0.0036580483
    %v1578 = vmul.f32 %v1573, %v1577
    %v1579 = vadd.f32 %v1578, 0.05243302
    %v1580 = vmul.f32 %v1573, %v1579
    %v1581 = vadd.f32 %v1580, 0.18741608
    %v1582 = vmul.f32 %v1573, %v1581
    %v1583 = vadd.f32 %v1582, 1.1283791
    %v1584 = vmul.f32 %v1451, %v1583
    %v1585 = vmul.f32 %v1573, 3.8918573e-05
    %v1586 = vadd.f32 %v1585, 0.001143296
    %v1587 = vmul.f32 %v1573, %v1586
    %v1588 = vadd.f32 %v1587, 0.014752088
    %v1589 = vmul.f32 %v1573, %v1588
    %v1590 = vadd.f32 %v1589, 0.112945676
    %v1591 = vmul.f32 %v1573, %v1590
    %v1592 = vadd.f32 %v1591, 0.4994258
    %v1593 = vmul.f32 %v1573, %v1592
    %v1594 = vadd.f32 %v1593, 1.0
    %v1595 = vrcp.pop %v1594
    %v1596 = vmul.f32 %v1594, %v1595
    %v1597 = vsub.f32 1.0, %v1596
    %v1598 = vmul.f32 %v1595, %v1597
    %v1599 = vadd.f32 %v1595, %v1598
    %vm1600 = vweird.f32 %v1594
    %vm1601 = vweird.f32 %v1595
    %vm1602 = vmor %vm1600, %vm1601
    %v1603 = vsel %vm1602, %v1595, %v1599
    %v1604 = vand.u32 2147483647, %v1594
    %vm1605 = vcmp.eq.f32.partialorder %v1604, 8.507059e+37
    %v1606 = vand.u32 %v1594, 2147483648
    %v1607 = vor.u32 1.1754944e-38, %v1606
    %v1608 = vsel %vm1605, %v1607, %v1603
    %v1609 = vmul.f32 %v1584, %v1608
    %v1610 = vmin.f32 %v1609, 1.0
    %v1611 = vmax.f32 %v1610, -1.0
    %v1612 = vadd.f32 %v1491, 1.0
    %v1613 = vadd.f32 %v1531, 1.0
    %v1614 = vadd.f32 %v1571, 1.0
    %v1615 = vadd.f32 %v1611, 1.0
    %v1616 = vmul.f32 %v1444, %v1612
    %v1617 = vmul.f32 %v1445, %v1613
    %v1618 = vmul.f32 %v1446, %v1614
    %v1619 = vmul.f32 %v1447, %v1615
    %v1620 = vld [vmem:[#allocation8] sm:$0xff]
    %v1621 = vld [vmem:[#allocation8 + $0x8] sm:$0xff]
    %v1622 = vld [vmem:[#allocation8 + $0x10] sm:$0xff]
    %v1623 = vld [vmem:[#allocation8 + $0x18] sm:$0xff]
    %v1624 = vld [vmem:[#allocation8 + $0x20] sm:$0xff]
    %v1625 = vld [vmem:[#allocation8 + $0x28] sm:$0xff]
    %v1626 = vld [vmem:[#allocation8 + $0x30] sm:$0xff]
    %v1627 = vld [vmem:[#allocation8 + $0x38] sm:$0xff]
    %v1628 = vld [vmem:[#allocation8 + $0x40] sm:$0xff]
    %v1629 = vld [vmem:[#allocation8 + $0x48] sm:$0xff]
    %v1630 = vld [vmem:[#allocation8 + $0x50] sm:$0xff]
    %v1631 = vld [vmem:[#allocation8 + $0x58] sm:$0xff]
    %v1632 = vld [vmem:[#allocation8 + $0x60] sm:$0xff]
    %v1633 = vld [vmem:[#allocation8 + $0x68] sm:$0xff]
    %v1634 = vld [vmem:[#allocation8 + $0x70] sm:$0xff]
    %v1635 = vld [vmem:[#allocation8 + $0x78] sm:$0xff]
    %v1636 = vld [vmem:[%s14] sm:$0x1]
    %v1638 = vperm.slane %v1636, 0
    %1640 = vmatpush.msra.mxu0 %v1635
    %1641 = vmatpush.msra.mxu0 %v1634
    %1642 = vmatpush.msra.mxu0 %v1633
    %1643 = vmatpush.msra.mxu0 %v1632
    %1644 = vmatpush.msra.mxu0 %v1631
    %1645 = vmatpush.msra.mxu0 %v1630
    %1646 = vmatpush.msra.mxu0 %v1629
    %1647 = vmatpush.msra.mxu0 %v1628
    %1648 = vmatpush.msra.mxu0 %v1627
    %1649 = vmatpush.msra.mxu0 %v1626
    %1650 = vmatpush.msra.mxu0 %v1625
    %1651 = vmatpush.msra.mxu0 %v1624
    %1652 = vmatpush.msra.mxu0 %v1623
    %1653 = vmatpush.msra.mxu0 %v1622
    %1654 = vmatpush.msra.mxu0 %v1621
    %1655 = vmatpush.msra.mxu0 %v1620
    %1656 = vmatmul.f32.gmra.mxu0 %v1616
    %v1657 = vpop.f32.mrf.mxu0
    %v1658 = vadd.f32 %v1638, %v1657
    %1659 = vmatmul.f32.gmra.mxu0 %v1617
    %v1660 = vpop.f32.mrf.mxu0
    %v1661 = vadd.f32 %v1638, %v1660
    %1662 = vmatmul.f32.gmra.mxu0 %v1618
    %v1663 = vpop.f32.mrf.mxu0
    %v1664 = vadd.f32 %v1638, %v1663
    %1665 = vmatmul.f32.gmra.mxu0 %v1619
    %v1666 = vpop.f32.mrf.mxu0
    %v1667 = vadd.f32 %v1638, %v1666
    %1668 = vdwg.mxu0
    %v1669 = vadd.f32 %v221, %v1658
    %v1670 = vadd.f32 %v224, %v1661
    %v1671 = vadd.f32 %v227, %v1664
    %v1672 = vadd.f32 %v230, %v1667
    %s1673 = scalar_lea.vmem %s3, 1
    %v1674 = vld [vmem:[%s1673] sm:$0x1]
    %s1675 = scalar_lea.vmem %s4, 1
    %v1676 = vld [vmem:[%s1675] sm:$0x1]
    %1677 = vadd.xlane.f32.xlu0 %v1669
    %v1678 = vpop.xlane.xlu0 %1677
    %1679 = vadd.xlane.f32.xlu0 %v1670
    %v1680 = vpop.xlane.xlu0 %1679
    %1681 = vadd.xlane.f32.xlu0 %v1671
    %v1682 = vpop.xlane.xlu0 %1681
    %1683 = vadd.xlane.f32.xlu0 %v1672
    %v1684 = vpop.xlane.xlu0 %1683
    %v1685 = vmul.f32 %v1669, %v1669
    %v1686 = vmul.f32 %v1670, %v1670
    %v1687 = vmul.f32 %v1671, %v1671
    %v1688 = vmul.f32 %v1672, %v1672
    %1689 = vadd.xlane.f32.xlu0 %v1685
    %v1690 = vpop.xlane.xlu0 %1689
    %1691 = vadd.xlane.f32.xlu0 %v1686
    %v1692 = vpop.xlane.xlu0 %1691
    %1693 = vadd.xlane.f32.xlu0 %v1687
    %v1694 = vpop.xlane.xlu0 %1693
    %1695 = vadd.xlane.f32.xlu0 %v1688
    %v1696 = vpop.xlane.xlu0 %1695
    %v1697 = vmul.f32 %v1678, %v313
    %v1698 = vmul.f32 %v1680, %v313
    %v1699 = vmul.f32 %v1682, %v313
    %v1700 = vmul.f32 %v1684, %v313
    %v1701 = vmul.f32 %v1690, %v313
    %v1702 = vmul.f32 %v1692, %v313
    %v1703 = vmul.f32 %v1694, %v313
    %v1704 = vmul.f32 %v1696, %v313
    %v1705 = vmul.f32 %v1697, %v1697
    %v1706 = vmul.f32 %v1698, %v1698
    %v1707 = vmul.f32 %v1699, %v1699
    %v1708 = vmul.f32 %v1700, %v1700
    %v1709 = vsub.f32 %v1701, %v1705
    %v1710 = vsub.f32 %v1702, %v1706
    %v1711 = vsub.f32 %v1703, %v1707
    %v1712 = vsub.f32 %v1704, %v1708
    %v1713 = vsub.f32 %v1669, %v1697
    %v1714 = vsub.f32 %v1670, %v1698
    %v1715 = vsub.f32 %v1671, %v1699
    %v1716 = vsub.f32 %v1672, %v1700
    %v1717 = vadd.f32 %v1709, 1e-05
    %v1718 = vadd.f32 %v1710, 1e-05
    %v1719 = vadd.f32 %v1711, 1e-05
    %v1720 = vadd.f32 %v1712, 1e-05
    %v1721 = vrsqrt.pop %v1717
    %v1722 = vmul.f32 %v1721, %v1717
    %v1723 = vmul.f32 %v1722, %v1721
    %v1724 = vmul.f32 0.5, %v1723
    %v1725 = vsub.f32 1.5, %v1724
    %v1726 = vmul.f32 %v1721, %v1725
    %vm1727 = vweird.f32 %v1717
    %vm1728 = vweird.f32 %v1721
    %vm1729 = vmor %vm1727, %vm1728
    %v1730 = vsel %vm1729, %v1721, %v1726
    %v1731 = vrsqrt.pop %v1718
    %v1732 = vmul.f32 %v1731, %v1718
    %v1733 = vmul.f32 %v1732, %v1731
    %v1734 = vmul.f32 0.5, %v1733
    %v1735 = vsub.f32 1.5, %v1734
    %v1736 = vmul.f32 %v1731, %v1735
    %vm1737 = vweird.f32 %v1718
    %vm1738 = vweird.f32 %v1731
    %vm1739 = vmor %vm1737, %vm1738
    %v1740 = vsel %vm1739, %v1731, %v1736
    %v1741 = vrsqrt.pop %v1719
    %v1742 = vmul.f32 %v1741, %v1719
    %v1743 = vmul.f32 %v1742, %v1741
    %v1744 = vmul.f32 0.5, %v1743
    %v1745 = vsub.f32 1.5, %v1744
    %v1746 = vmul.f32 %v1741, %v1745
    %vm1747 = vweird.f32 %v1719
    %vm1748 = vweird.f32 %v1741
    %vm1749 = vmor %vm1747, %vm1748
    %v1750 = vsel %vm1749, %v1741, %v1746
    %v1751 = vrsqrt.pop %v1720
    %v1752 = vmul.f32 %v1751, %v1720
    %v1753 = vmul.f32 %v1752, %v1751
    %v1754 = vmul.f32 0.5, %v1753
    %v1755 = vsub.f32 1.5, %v1754
    %v1756 = vmul.f32 %v1751, %v1755
    %vm1757 = vweird.f32 %v1720
    %vm1758 = vweird.f32 %v1751
    %vm1759 = vmor %vm1757, %vm1758
    %v1760 = vsel %vm1759, %v1751, %v1756
    %v1761 = vmul.f32 %v1713, %v1730
    %v1762 = vmul.f32 %v1714, %v1740
    %v1763 = vmul.f32 %v1715, %v1750
    %v1764 = vmul.f32 %v1716, %v1760
    %v1766 = vperm.slane %v1674, 0
    %v1768 = vmul.f32 %v1761, %v1766
    %v1769 = vmul.f32 %v1762, %v1766
    %v1770 = vmul.f32 %v1763, %v1766
    %v1771 = vmul.f32 %v1764, %v1766
    %v1773 = vperm.slane %v1676, 0
    %v1775 = vadd.f32 %v1768, %v1773
    %v1776 = vadd.f32 %v1769, %v1773
    %v1777 = vadd.f32 %v1770, %v1773
    %v1778 = vadd.f32 %v1771, %v1773
    %v1779 = vmul.f32 %v1775, 0.5
    %v1780 = vmul.f32 %v1776, 0.5
    %v1781 = vmul.f32 %v1777, 0.5
    %v1782 = vmul.f32 %v1778, 0.5
    %v1783 = vmul.f32 %v1775, %v406
    %v1784 = vmul.f32 %v1776, %v406
    %v1785 = vmul.f32 %v1777, %v406
    %v1786 = vmul.f32 %v1778, %v406
    %v1787 = vmul.f32 %v1783, %v1783
    %v1788 = vmin.f32 16.0, %v1787
    %v1789 = vmul.f32 %v1788, 2.1237322e-06
    %v1790 = vadd.f32 %v1789, 0.00028619796
    %v1791 = vmul.f32 %v1788, %v1790
    %v1792 = vadd.f32 %v1791, 0.0036580483
    %v1793 = vmul.f32 %v1788, %v1792
    %v1794 = vadd.f32 %v1793, 0.05243302
    %v1795 = vmul.f32 %v1788, %v1794
    %v1796 = vadd.f32 %v1795, 0.18741608
    %v1797 = vmul.f32 %v1788, %v1796
    %v1798 = vadd.f32 %v1797, 1.1283791
    %v1799 = vmul.f32 %v1783, %v1798
    %v1800 = vmul.f32 %v1788, 3.8918573e-05
    %v1801 = vadd.f32 %v1800, 0.001143296
    %v1802 = vmul.f32 %v1788, %v1801
    %v1803 = vadd.f32 %v1802, 0.014752088
    %v1804 = vmul.f32 %v1788, %v1803
    %v1805 = vadd.f32 %v1804, 0.112945676
    %v1806 = vmul.f32 %v1788, %v1805
    %v1807 = vadd.f32 %v1806, 0.4994258
    %v1808 = vmul.f32 %v1788, %v1807
    %v1809 = vadd.f32 %v1808, 1.0
    %v1810 = vrcp.pop %v1809
    %v1811 = vmul.f32 %v1809, %v1810
    %v1812 = vsub.f32 1.0, %v1811
    %v1813 = vmul.f32 %v1810, %v1812
    %v1814 = vadd.f32 %v1810, %v1813
    %vm1815 = vweird.f32 %v1809
    %vm1816 = vweird.f32 %v1810
    %vm1817 = vmor %vm1815, %vm1816
    %v1818 = vsel %vm1817, %v1810, %v1814
    %v1819 = vand.u32 2147483647, %v1809
    %vm1820 = vcmp.eq.f32.partialorder %v1819, 8.507059e+37
    %v1821 = vand.u32 %v1809, 2147483648
    %v1822 = vor.u32 1.1754944e-38, %v1821
    %v1823 = vsel %vm1820, %v1822, %v1818
    %v1824 = vmul.f32 %v1799, %v1823
    %v1825 = vmin.f32 %v1824, 1.0
    %v1826 = vmax.f32 %v1825, -1.0
    %v1827 = vmul.f32 %v1784, %v1784
    %v1828 = vmin.f32 16.0, %v1827
    %v1829 = vmul.f32 %v1828, 2.1237322e-06
    %v1830 = vadd.f32 %v1829, 0.00028619796
    %v1831 = vmul.f32 %v1828, %v1830
    %v1832 = vadd.f32 %v1831, 0.0036580483
    %v1833 = vmul.f32 %v1828, %v1832
    %v1834 = vadd.f32 %v1833, 0.05243302
    %v1835 = vmul.f32 %v1828, %v1834
    %v1836 = vadd.f32 %v1835, 0.18741608
    %v1837 = vmul.f32 %v1828, %v1836
    %v1838 = vadd.f32 %v1837, 1.1283791
    %v1839 = vmul.f32 %v1784, %v1838
    %v1840 = vmul.f32 %v1828, 3.8918573e-05
    %v1841 = vadd.f32 %v1840, 0.001143296
    %v1842 = vmul.f32 %v1828, %v1841
    %v1843 = vadd.f32 %v1842, 0.014752088
    %v1844 = vmul.f32 %v1828, %v1843
    %v1845 = vadd.f32 %v1844, 0.112945676
    %v1846 = vmul.f32 %v1828, %v1845
    %v1847 = vadd.f32 %v1846, 0.4994258
    %v1848 = vmul.f32 %v1828, %v1847
    %v1849 = vadd.f32 %v1848, 1.0
    %v1850 = vrcp.pop %v1849
    %v1851 = vmul.f32 %v1849, %v1850
    %v1852 = vsub.f32 1.0, %v1851
    %v1853 = vmul.f32 %v1850, %v1852
    %v1854 = vadd.f32 %v1850, %v1853
    %vm1855 = vweird.f32 %v1849
    %vm1856 = vweird.f32 %v1850
    %vm1857 = vmor %vm1855, %vm1856
    %v1858 = vsel %vm1857, %v1850, %v1854
    %v1859 = vand.u32 2147483647, %v1849
    %vm1860 = vcmp.eq.f32.partialorder %v1859, 8.507059e+37
    %v1861 = vand.u32 %v1849, 2147483648
    %v1862 = vor.u32 1.1754944e-38, %v1861
    %v1863 = vsel %vm1860, %v1862, %v1858
    %v1864 = vmul.f32 %v1839, %v1863
    %v1865 = vmin.f32 %v1864, 1.0
    %v1866 = vmax.f32 %v1865, -1.0
    %v1867 = vmul.f32 %v1785, %v1785
    %v1868 = vmin.f32 16.0, %v1867
    %v1869 = vmul.f32 %v1868, 2.1237322e-06
    %v1870 = vadd.f32 %v1869, 0.00028619796
    %v1871 = vmul.f32 %v1868, %v1870
    %v1872 = vadd.f32 %v1871, 0.0036580483
    %v1873 = vmul.f32 %v1868, %v1872
    %v1874 = vadd.f32 %v1873, 0.05243302
    %v1875 = vmul.f32 %v1868, %v1874
    %v1876 = vadd.f32 %v1875, 0.18741608
    %v1877 = vmul.f32 %v1868, %v1876
    %v1878 = vadd.f32 %v1877, 1.1283791
    %v1879 = vmul.f32 %v1785, %v1878
    %v1880 = vmul.f32 %v1868, 3.8918573e-05
    %v1881 = vadd.f32 %v1880, 0.001143296
    %v1882 = vmul.f32 %v1868, %v1881
    %v1883 = vadd.f32 %v1882, 0.014752088
    %v1884 = vmul.f32 %v1868, %v1883
    %v1885 = vadd.f32 %v1884, 0.112945676
    %v1886 = vmul.f32 %v1868, %v1885
    %v1887 = vadd.f32 %v1886, 0.4994258
    %v1888 = vmul.f32 %v1868, %v1887
    %v1889 = vadd.f32 %v1888, 1.0
    %v1890 = vrcp.pop %v1889
    %v1891 = vmul.f32 %v1889, %v1890
    %v1892 = vsub.f32 1.0, %v1891
    %v1893 = vmul.f32 %v1890, %v1892
    %v1894 = vadd.f32 %v1890, %v1893
    %vm1895 = vweird.f32 %v1889
    %vm1896 = vweird.f32 %v1890
    %vm1897 = vmor %vm1895, %vm1896
    %v1898 = vsel %vm1897, %v1890, %v1894
    %v1899 = vand.u32 2147483647, %v1889
    %vm1900 = vcmp.eq.f32.partialorder %v1899, 8.507059e+37
    %v1901 = vand.u32 %v1889, 2147483648
    %v1902 = vor.u32 1.1754944e-38, %v1901
    %v1903 = vsel %vm1900, %v1902, %v1898
    %v1904 = vmul.f32 %v1879, %v1903
    %v1905 = vmin.f32 %v1904, 1.0
    %v1906 = vmax.f32 %v1905, -1.0
    %v1907 = vmul.f32 %v1786, %v1786
    %v1908 = vmin.f32 16.0, %v1907
    %v1909 = vmul.f32 %v1908, 2.1237322e-06
    %v1910 = vadd.f32 %v1909, 0.00028619796
    %v1911 = vmul.f32 %v1908, %v1910
    %v1912 = vadd.f32 %v1911, 0.0036580483
    %v1913 = vmul.f32 %v1908, %v1912
    %v1914 = vadd.f32 %v1913, 0.05243302
    %v1915 = vmul.f32 %v1908, %v1914
    %v1916 = vadd.f32 %v1915, 0.18741608
    %v1917 = vmul.f32 %v1908, %v1916
    %v1918 = vadd.f32 %v1917, 1.1283791
    %v1919 = vmul.f32 %v1786, %v1918
    %v1920 = vmul.f32 %v1908, 3.8918573e-05
    %v1921 = vadd.f32 %v1920, 0.001143296
    %v1922 = vmul.f32 %v1908, %v1921
    %v1923 = vadd.f32 %v1922, 0.014752088
    %v1924 = vmul.f32 %v1908, %v1923
    %v1925 = vadd.f32 %v1924, 0.112945676
    %v1926 = vmul.f32 %v1908, %v1925
    %v1927 = vadd.f32 %v1926, 0.4994258
    %v1928 = vmul.f32 %v1908, %v1927
    %v1929 = vadd.f32 %v1928, 1.0
    %v1930 = vrcp.pop %v1929
    %v1931 = vmul.f32 %v1929, %v1930
    %v1932 = vsub.f32 1.0, %v1931
    %v1933 = vmul.f32 %v1930, %v1932
    %v1934 = vadd.f32 %v1930, %v1933
    %vm1935 = vweird.f32 %v1929
    %vm1936 = vweird.f32 %v1930
    %vm1937 = vmor %vm1935, %vm1936
    %v1938 = vsel %vm1937, %v1930, %v1934
    %v1939 = vand.u32 2147483647, %v1929
    %vm1940 = vcmp.eq.f32.partialorder %v1939, 8.507059e+37
    %v1941 = vand.u32 %v1929, 2147483648
    %v1942 = vor.u32 1.1754944e-38, %v1941
    %v1943 = vsel %vm1940, %v1942, %v1938
    %v1944 = vmul.f32 %v1919, %v1943
    %v1945 = vmin.f32 %v1944, 1.0
    %v1946 = vmax.f32 %v1945, -1.0
    %v1947 = vadd.f32 %v1826, 1.0
    %v1948 = vadd.f32 %v1866, 1.0
    %v1949 = vadd.f32 %v1906, 1.0
    %v1950 = vadd.f32 %v1946, 1.0
    %v1951 = vmul.f32 %v1779, %v1947
    %v1952 = vmul.f32 %v1780, %v1948
    %v1953 = vmul.f32 %v1781, %v1949
    %v1954 = vmul.f32 %v1782, %v1950
    %s1955 = scalar_lea.vmem [#allocation5], 128
    %v1956 = vld [vmem:[%s1955] sm:$0xff]
    %v1957 = vld [vmem:[%s1955 + $0x8] sm:$0xff]
    %v1958 = vld [vmem:[%s1955 + $0x10] sm:$0xff]
    %v1959 = vld [vmem:[%s1955 + $0x18] sm:$0xff]
    %v1960 = vld [vmem:[%s1955 + $0x20] sm:$0xff]
    %v1961 = vld [vmem:[%s1955 + $0x28] sm:$0xff]
    %v1962 = vld [vmem:[%s1955 + $0x30] sm:$0xff]
    %v1963 = vld [vmem:[%s1955 + $0x38] sm:$0xff]
    %v1964 = vld [vmem:[%s1955 + $0x40] sm:$0xff]
    %v1965 = vld [vmem:[%s1955 + $0x48] sm:$0xff]
    %v1966 = vld [vmem:[%s1955 + $0x50] sm:$0xff]
    %v1967 = vld [vmem:[%s1955 + $0x58] sm:$0xff]
    %v1968 = vld [vmem:[%s1955 + $0x60] sm:$0xff]
    %v1969 = vld [vmem:[%s1955 + $0x68] sm:$0xff]
    %v1970 = vld [vmem:[%s1955 + $0x70] sm:$0xff]
    %v1971 = vld [vmem:[%s1955 + $0x78] sm:$0xff]
    %s1972 = scalar_lea.vmem %s6, 1
    %v1973 = vld [vmem:[%s1972] sm:$0x1]
    %v1975 = vperm.slane %v1973, 0
    %1977 = vmatpush.msra.mxu0 %v1971
    %1978 = vmatpush.msra.mxu0 %v1970
    %1979 = vmatpush.msra.mxu0 %v1969
    %1980 = vmatpush.msra.mxu0 %v1968
    %1981 = vmatpush.msra.mxu0 %v1967
    %1982 = vmatpush.msra.mxu0 %v1966
    %1983 = vmatpush.msra.mxu0 %v1965
    %1984 = vmatpush.msra.mxu0 %v1964
    %1985 = vmatpush.msra.mxu0 %v1963
    %1986 = vmatpush.msra.mxu0 %v1962
    %1987 = vmatpush.msra.mxu0 %v1961
    %1988 = vmatpush.msra.mxu0 %v1960
    %1989 = vmatpush.msra.mxu0 %v1959
    %1990 = vmatpush.msra.mxu0 %v1958
    %1991 = vmatpush.msra.mxu0 %v1957
    %1992 = vmatpush.msra.mxu0 %v1956
    %1993 = vmatmul.f32.gmra.mxu0 %v1951
    %v1994 = vpop.f32.mrf.mxu0
    %v1995 = vadd.f32 %v1975, %v1994
    %1996 = vmatmul.f32.gmra.mxu0 %v1952
    %v1997 = vpop.f32.mrf.mxu0
    %v1998 = vadd.f32 %v1975, %v1997
    %1999 = vmatmul.f32.gmra.mxu0 %v1953
    %v2000 = vpop.f32.mrf.mxu0
    %v2001 = vadd.f32 %v1975, %v2000
    %2002 = vmatmul.f32.gmra.mxu0 %v1954
    %v2003 = vpop.f32.mrf.mxu0
    %v2004 = vadd.f32 %v1975, %v2003
    %2005 = vdwg.mxu0
    %s2006 = scalar_lea.vmem %s7, 1
    %v2007 = vld [vmem:[%s2006] sm:$0x1]
    %s2008 = scalar_lea.vmem %s8, 1
    %v2009 = vld [vmem:[%s2008] sm:$0x1]
    %2010 = vadd.xlane.f32.xlu0 %v1995
    %v2011 = vpop.xlane.xlu0 %2010
    %2012 = vadd.xlane.f32.xlu0 %v1998
    %v2013 = vpop.xlane.xlu0 %2012
    %2014 = vadd.xlane.f32.xlu0 %v2001
    %v2015 = vpop.xlane.xlu0 %2014
    %2016 = vadd.xlane.f32.xlu0 %v2004
    %v2017 = vpop.xlane.xlu0 %2016
    %v2018 = vmul.f32 %v1995, %v1995
    %v2019 = vmul.f32 %v1998, %v1998
    %v2020 = vmul.f32 %v2001, %v2001
    %v2021 = vmul.f32 %v2004, %v2004
    %2022 = vadd.xlane.f32.xlu0 %v2018
    %v2023 = vpop.xlane.xlu0 %2022
    %2024 = vadd.xlane.f32.xlu0 %v2019
    %v2025 = vpop.xlane.xlu0 %2024
    %2026 = vadd.xlane.f32.xlu0 %v2020
    %v2027 = vpop.xlane.xlu0 %2026
    %2028 = vadd.xlane.f32.xlu0 %v2021
    %v2029 = vpop.xlane.xlu0 %2028
    %v2030 = vmul.f32 %v2011, %v656
    %v2031 = vmul.f32 %v2013, %v656
    %v2032 = vmul.f32 %v2015, %v656
    %v2033 = vmul.f32 %v2017, %v656
    %v2034 = vmul.f32 %v2023, %v656
    %v2035 = vmul.f32 %v2025, %v656
    %v2036 = vmul.f32 %v2027, %v656
    %v2037 = vmul.f32 %v2029, %v656
    %v2038 = vmul.f32 %v2030, %v2030
    %v2039 = vmul.f32 %v2031, %v2031
    %v2040 = vmul.f32 %v2032, %v2032
    %v2041 = vmul.f32 %v2033, %v2033
    %v2042 = vsub.f32 %v2034, %v2038
    %v2043 = vsub.f32 %v2035, %v2039
    %v2044 = vsub.f32 %v2036, %v2040
    %v2045 = vsub.f32 %v2037, %v2041
    %v2046 = vsub.f32 %v1995, %v2030
    %v2047 = vsub.f32 %v1998, %v2031
    %v2048 = vsub.f32 %v2001, %v2032
    %v2049 = vsub.f32 %v2004, %v2033
    %v2050 = vadd.f32 %v2042, 1e-05
    %v2051 = vadd.f32 %v2043, 1e-05
    %v2052 = vadd.f32 %v2044, 1e-05
    %v2053 = vadd.f32 %v2045, 1e-05
    %v2054 = vrsqrt.pop %v2050
    %v2055 = vmul.f32 %v2054, %v2050
    %v2056 = vmul.f32 %v2055, %v2054
    %v2057 = vmul.f32 0.5, %v2056
    %v2058 = vsub.f32 1.5, %v2057
    %v2059 = vmul.f32 %v2054, %v2058
    %vm2060 = vweird.f32 %v2050
    %vm2061 = vweird.f32 %v2054
    %vm2062 = vmor %vm2060, %vm2061
    %v2063 = vsel %vm2062, %v2054, %v2059
    %v2064 = vrsqrt.pop %v2051
    %v2065 = vmul.f32 %v2064, %v2051
    %v2066 = vmul.f32 %v2065, %v2064
    %v2067 = vmul.f32 0.5, %v2066
    %v2068 = vsub.f32 1.5, %v2067
    %v2069 = vmul.f32 %v2064, %v2068
    %vm2070 = vweird.f32 %v2051
    %vm2071 = vweird.f32 %v2064
    %vm2072 = vmor %vm2070, %vm2071
    %v2073 = vsel %vm2072, %v2064, %v2069
    %v2074 = vrsqrt.pop %v2052
    %v2075 = vmul.f32 %v2074, %v2052
    %v2076 = vmul.f32 %v2075, %v2074
    %v2077 = vmul.f32 0.5, %v2076
    %v2078 = vsub.f32 1.5, %v2077
    %v2079 = vmul.f32 %v2074, %v2078
    %vm2080 = vweird.f32 %v2052
    %vm2081 = vweird.f32 %v2074
    %vm2082 = vmor %vm2080, %vm2081
    %v2083 = vsel %vm2082, %v2074, %v2079
    %v2084 = vrsqrt.pop %v2053
    %v2085 = vmul.f32 %v2084, %v2053
    %v2086 = vmul.f32 %v2085, %v2084
    %v2087 = vmul.f32 0.5, %v2086
    %v2088 = vsub.f32 1.5, %v2087
    %v2089 = vmul.f32 %v2084, %v2088
    %vm2090 = vweird.f32 %v2053
    %vm2091 = vweird.f32 %v2084
    %vm2092 = vmor %vm2090, %vm2091
    %v2093 = vsel %vm2092, %v2084, %v2089
    %v2094 = vmul.f32 %v2046, %v2063
    %v2095 = vmul.f32 %v2047, %v2073
    %v2096 = vmul.f32 %v2048, %v2083
    %v2097 = vmul.f32 %v2049, %v2093
    %v2099 = vperm.slane %v2007, 0
    %v2101 = vmul.f32 %v2094, %v2099
    %v2102 = vmul.f32 %v2095, %v2099
    %v2103 = vmul.f32 %v2096, %v2099
    %v2104 = vmul.f32 %v2097, %v2099
    %v2106 = vperm.slane %v2009, 0
    %v2108 = vadd.f32 %v2101, %v2106
    %v2109 = vadd.f32 %v2102, %v2106
    %v2110 = vadd.f32 %v2103, %v2106
    %v2111 = vadd.f32 %v2104, %v2106
    %v2112 = vmul.f32 %v2108, 0.5
    %v2113 = vmul.f32 %v2109, 0.5
    %v2114 = vmul.f32 %v2110, 0.5
    %v2115 = vmul.f32 %v2111, 0.5
    %v2116 = vmul.f32 %v2108, %v406
    %v2117 = vmul.f32 %v2109, %v406
    %v2118 = vmul.f32 %v2110, %v406
    %v2119 = vmul.f32 %v2111, %v406
    %v2120 = vmul.f32 %v2116, %v2116
    %v2121 = vmin.f32 16.0, %v2120
    %v2122 = vmul.f32 %v2121, 2.1237322e-06
    %v2123 = vadd.f32 %v2122, 0.00028619796
    %v2124 = vmul.f32 %v2121, %v2123
    %v2125 = vadd.f32 %v2124, 0.0036580483
    %v2126 = vmul.f32 %v2121, %v2125
    %v2127 = vadd.f32 %v2126, 0.05243302
    %v2128 = vmul.f32 %v2121, %v2127
    %v2129 = vadd.f32 %v2128, 0.18741608
    %v2130 = vmul.f32 %v2121, %v2129
    %v2131 = vadd.f32 %v2130, 1.1283791
    %v2132 = vmul.f32 %v2116, %v2131
    %v2133 = vmul.f32 %v2121, 3.8918573e-05
    %v2134 = vadd.f32 %v2133, 0.001143296
    %v2135 = vmul.f32 %v2121, %v2134
    %v2136 = vadd.f32 %v2135, 0.014752088
    %v2137 = vmul.f32 %v2121, %v2136
    %v2138 = vadd.f32 %v2137, 0.112945676
    %v2139 = vmul.f32 %v2121, %v2138
    %v2140 = vadd.f32 %v2139, 0.4994258
    %v2141 = vmul.f32 %v2121, %v2140
    %v2142 = vadd.f32 %v2141, 1.0
    %v2143 = vrcp.pop %v2142
    %v2144 = vmul.f32 %v2142, %v2143
    %v2145 = vsub.f32 1.0, %v2144
    %v2146 = vmul.f32 %v2143, %v2145
    %v2147 = vadd.f32 %v2143, %v2146
    %vm2148 = vweird.f32 %v2142
    %vm2149 = vweird.f32 %v2143
    %vm2150 = vmor %vm2148, %vm2149
    %v2151 = vsel %vm2150, %v2143, %v2147
    %v2152 = vand.u32 2147483647, %v2142
    %vm2153 = vcmp.eq.f32.partialorder %v2152, 8.507059e+37
    %v2154 = vand.u32 %v2142, 2147483648
    %v2155 = vor.u32 1.1754944e-38, %v2154
    %v2156 = vsel %vm2153, %v2155, %v2151
    %v2157 = vmul.f32 %v2132, %v2156
    %v2158 = vmin.f32 %v2157, 1.0
    %v2159 = vmax.f32 %v2158, -1.0
    %v2160 = vmul.f32 %v2117, %v2117
    %v2161 = vmin.f32 16.0, %v2160
    %v2162 = vmul.f32 %v2161, 2.1237322e-06
    %v2163 = vadd.f32 %v2162, 0.00028619796
    %v2164 = vmul.f32 %v2161, %v2163
    %v2165 = vadd.f32 %v2164, 0.0036580483
    %v2166 = vmul.f32 %v2161, %v2165
    %v2167 = vadd.f32 %v2166, 0.05243302
    %v2168 = vmul.f32 %v2161, %v2167
    %v2169 = vadd.f32 %v2168, 0.18741608
    %v2170 = vmul.f32 %v2161, %v2169
    %v2171 = vadd.f32 %v2170, 1.1283791
    %v2172 = vmul.f32 %v2117, %v2171
    %v2173 = vmul.f32 %v2161, 3.8918573e-05
    %v2174 = vadd.f32 %v2173, 0.001143296
    %v2175 = vmul.f32 %v2161, %v2174
    %v2176 = vadd.f32 %v2175, 0.014752088
    %v2177 = vmul.f32 %v2161, %v2176
    %v2178 = vadd.f32 %v2177, 0.112945676
    %v2179 = vmul.f32 %v2161, %v2178
    %v2180 = vadd.f32 %v2179, 0.4994258
    %v2181 = vmul.f32 %v2161, %v2180
    %v2182 = vadd.f32 %v2181, 1.0
    %v2183 = vrcp.pop %v2182
    %v2184 = vmul.f32 %v2182, %v2183
    %v2185 = vsub.f32 1.0, %v2184
    %v2186 = vmul.f32 %v2183, %v2185
    %v2187 = vadd.f32 %v2183, %v2186
    %vm2188 = vweird.f32 %v2182
    %vm2189 = vweird.f32 %v2183
    %vm2190 = vmor %vm2188, %vm2189
    %v2191 = vsel %vm2190, %v2183, %v2187
    %v2192 = vand.u32 2147483647, %v2182
    %vm2193 = vcmp.eq.f32.partialorder %v2192, 8.507059e+37
    %v2194 = vand.u32 %v2182, 2147483648
    %v2195 = vor.u32 1.1754944e-38, %v2194
    %v2196 = vsel %vm2193, %v2195, %v2191
    %v2197 = vmul.f32 %v2172, %v2196
    %v2198 = vmin.f32 %v2197, 1.0
    %v2199 = vmax.f32 %v2198, -1.0
    %v2200 = vmul.f32 %v2118, %v2118
    %v2201 = vmin.f32 16.0, %v2200
    %v2202 = vmul.f32 %v2201, 2.1237322e-06
    %v2203 = vadd.f32 %v2202, 0.00028619796
    %v2204 = vmul.f32 %v2201, %v2203
    %v2205 = vadd.f32 %v2204, 0.0036580483
    %v2206 = vmul.f32 %v2201, %v2205
    %v2207 = vadd.f32 %v2206, 0.05243302
    %v2208 = vmul.f32 %v2201, %v2207
    %v2209 = vadd.f32 %v2208, 0.18741608
    %v2210 = vmul.f32 %v2201, %v2209
    %v2211 = vadd.f32 %v2210, 1.1283791
    %v2212 = vmul.f32 %v2118, %v2211
    %v2213 = vmul.f32 %v2201, 3.8918573e-05
    %v2214 = vadd.f32 %v2213, 0.001143296
    %v2215 = vmul.f32 %v2201, %v2214
    %v2216 = vadd.f32 %v2215, 0.014752088
    %v2217 = vmul.f32 %v2201, %v2216
    %v2218 = vadd.f32 %v2217, 0.112945676
    %v2219 = vmul.f32 %v2201, %v2218
    %v2220 = vadd.f32 %v2219, 0.4994258
    %v2221 = vmul.f32 %v2201, %v2220
    %v2222 = vadd.f32 %v2221, 1.0
    %v2223 = vrcp.pop %v2222
    %v2224 = vmul.f32 %v2222, %v2223
    %v2225 = vsub.f32 1.0, %v2224
    %v2226 = vmul.f32 %v2223, %v2225
    %v2227 = vadd.f32 %v2223, %v2226
    %vm2228 = vweird.f32 %v2222
    %vm2229 = vweird.f32 %v2223
    %vm2230 = vmor %vm2228, %vm2229
    %v2231 = vsel %vm2230, %v2223, %v2227
    %v2232 = vand.u32 2147483647, %v2222
    %vm2233 = vcmp.eq.f32.partialorder %v2232, 8.507059e+37
    %v2234 = vand.u32 %v2222, 2147483648
    %v2235 = vor.u32 1.1754944e-38, %v2234
    %v2236 = vsel %vm2233, %v2235, %v2231
    %v2237 = vmul.f32 %v2212, %v2236
    %v2238 = vmin.f32 %v2237, 1.0
    %v2239 = vmax.f32 %v2238, -1.0
    %v2240 = vmul.f32 %v2119, %v2119
    %v2241 = vmin.f32 16.0, %v2240
    %v2242 = vmul.f32 %v2241, 2.1237322e-06
    %v2243 = vadd.f32 %v2242, 0.00028619796
    %v2244 = vmul.f32 %v2241, %v2243
    %v2245 = vadd.f32 %v2244, 0.0036580483
    %v2246 = vmul.f32 %v2241, %v2245
    %v2247 = vadd.f32 %v2246, 0.05243302
    %v2248 = vmul.f32 %v2241, %v2247
    %v2249 = vadd.f32 %v2248, 0.18741608
    %v2250 = vmul.f32 %v2241, %v2249
    %v2251 = vadd.f32 %v2250, 1.1283791
    %v2252 = vmul.f32 %v2119, %v2251
    %v2253 = vmul.f32 %v2241, 3.8918573e-05
    %v2254 = vadd.f32 %v2253, 0.001143296
    %v2255 = vmul.f32 %v2241, %v2254
    %v2256 = vadd.f32 %v2255, 0.014752088
    %v2257 = vmul.f32 %v2241, %v2256
    %v2258 = vadd.f32 %v2257, 0.112945676
    %v2259 = vmul.f32 %v2241, %v2258
    %v2260 = vadd.f32 %v2259, 0.4994258
    %v2261 = vmul.f32 %v2241, %v2260
    %v2262 = vadd.f32 %v2261, 1.0
    %v2263 = vrcp.pop %v2262
    %v2264 = vmul.f32 %v2262, %v2263
    %v2265 = vsub.f32 1.0, %v2264
    %v2266 = vmul.f32 %v2263, %v2265
    %v2267 = vadd.f32 %v2263, %v2266
    %vm2268 = vweird.f32 %v2262
    %vm2269 = vweird.f32 %v2263
    %vm2270 = vmor %vm2268, %vm2269
    %v2271 = vsel %vm2270, %v2263, %v2267
    %v2272 = vand.u32 2147483647, %v2262
    %vm2273 = vcmp.eq.f32.partialorder %v2272, 8.507059e+37
    %v2274 = vand.u32 %v2262, 2147483648
    %v2275 = vor.u32 1.1754944e-38, %v2274
    %v2276 = vsel %vm2273, %v2275, %v2271
    %v2277 = vmul.f32 %v2252, %v2276
    %v2278 = vmin.f32 %v2277, 1.0
    %v2279 = vmax.f32 %v2278, -1.0
    %v2280 = vadd.f32 %v2159, 1.0
    %v2281 = vadd.f32 %v2199, 1.0
    %v2282 = vadd.f32 %v2239, 1.0
    %v2283 = vadd.f32 %v2279, 1.0
    %v2284 = vmul.f32 %v2112, %v2280
    %v2285 = vmul.f32 %v2113, %v2281
    %v2286 = vmul.f32 %v2114, %v2282
    %v2287 = vmul.f32 %v2115, %v2283
    %v2288 = vmul.f32 %v2284, %v918
    %v2289 = vmul.f32 %v2285, %v923
    %v2290 = vmul.f32 %v2286, %v928
    %v2291 = vmul.f32 %v2287, %v933
    %s2292 = scalar_lea.vmem %s10, 1
    %v2293 = vld [vmem:[%s2292] sm:$0x1]
    %v2295 = vperm.slane %v2293, 0
    %v2297 = vrot.slane %v2288, 4
    %v2298 = vrot.slane %v2289, 4
    %v2299 = vrot.slane %v2290, 4
    %v2300 = vrot.slane %v2291, 4
    %vm2301 = vcmp.lt.s32.totalorder %v233, 4
    %v2302 = vsel %vm2301, %v2299, %v2300
    %v2303 = vsel %vm2301, %v2298, %v2299
    %v2304 = vsel %vm2301, %v2297, %v2298
    %v2305 = vsel %vm2301, %v2300, %v2297
    %v2306 = vadd.s32 %v281, 4294967292
    %v2307 = vadd.s32 %v282, 4294967292
    %v2308 = vadd.s32 %v283, 4294967292
    %v2309 = vadd.s32 %v284, 4294967292
    %vm2310 = vcmp.ge.s32.totalorder %v2306, 0
    %vm2311 = vcmp.ge.s32.totalorder %v2307, 0
    %vm2312 = vcmp.ge.s32.totalorder %v2308, 0
    %vm2313 = vcmp.ge.s32.totalorder %v2309, 0
    %vm2314 = vcmp.lt.s32.totalorder %v2306, 16
    %vm2315 = vcmp.lt.s32.totalorder %v2307, 16
    %vm2316 = vcmp.lt.s32.totalorder %v2308, 16
    %vm2317 = vcmp.lt.s32.totalorder %v2309, 16
    %vm2318 = vmand %vm2310, %vm2314
    %vm2319 = vmand %vm2311, %vm2315
    %vm2320 = vmand %vm2312, %vm2316
    %vm2321 = vmand %vm2313, %vm2317
    %v2322 = vsel %vm2318, 1, 0
    %v2323 = vsel %vm2319, 1, 0
    %v2324 = vsel %vm2320, 1, 0
    %v2325 = vsel %vm2321, 1, 0
    %vm2326 = vcmp.eq.s32.totalorder %v2322, 1
    %vm2327 = vcmp.eq.s32.totalorder %v2323, 1
    %vm2328 = vcmp.eq.s32.totalorder %v2324, 1
    %vm2329 = vcmp.eq.s32.totalorder %v2325, 1
    %v2330 = vsel %vm2326, %v2305, 0.0
    %v2331 = vsel %vm2327, %v2304, 0.0
    %v2332 = vsel %vm2328, %v2303, 0.0
    %v2333 = vsel %vm2329, %v2302, 0.0
    %s2334 = scalar_lea.vmem [#allocation7], 640
    %v2335 = vld [vmem:[%s2334] sm:$0xff]
    %v2336 = vld [vmem:[%s2334 + $0x8] sm:$0xff]
    %v2337 = vld [vmem:[%s2334 + $0x10] sm:$0xff]
    %v2338 = vld [vmem:[%s2334 + $0x18] sm:$0xff]
    %v2339 = vld [vmem:[%s2334 + $0x20] sm:$0xff]
    %v2340 = vld [vmem:[%s2334 + $0x28] sm:$0xff]
    %v2341 = vld [vmem:[%s2334 + $0x30] sm:$0xff]
    %v2342 = vld [vmem:[%s2334 + $0x38] sm:$0xff]
    %v2343 = vld [vmem:[%s2334 + $0x40] sm:$0xff]
    %v2344 = vld [vmem:[%s2334 + $0x48] sm:$0xff]
    %v2345 = vld [vmem:[%s2334 + $0x50] sm:$0xff]
    %v2346 = vld [vmem:[%s2334 + $0x58] sm:$0xff]
    %v2347 = vld [vmem:[%s2334 + $0x60] sm:$0xff]
    %v2348 = vld [vmem:[%s2334 + $0x68] sm:$0xff]
    %v2349 = vld [vmem:[%s2334 + $0x70] sm:$0xff]
    %v2350 = vld [vmem:[%s2334 + $0x78] sm:$0xff]
    %2351 = vmatpush.msra.mxu0 %v2350
    %2352 = vmatpush.msra.mxu0 %v2349
    %2353 = vmatpush.msra.mxu0 %v2348
    %2354 = vmatpush.msra.mxu0 %v2347
    %2355 = vmatpush.msra.mxu0 %v2346
    %2356 = vmatpush.msra.mxu0 %v2345
    %2357 = vmatpush.msra.mxu0 %v2344
    %2358 = vmatpush.msra.mxu0 %v2343
    %2359 = vmatpush.msra.mxu0 %v2342
    %2360 = vmatpush.msra.mxu0 %v2341
    %2361 = vmatpush.msra.mxu0 %v2340
    %2362 = vmatpush.msra.mxu0 %v2339
    %2363 = vmatpush.msra.mxu0 %v2338
    %2364 = vmatpush.msra.mxu0 %v2337
    %2365 = vmatpush.msra.mxu0 %v2336
    %2366 = vmatpush.msra.mxu0 %v2335
    %2367 = vmatmul.f32.gmra.mxu0 %v2330
    %v2368 = vpop.f32.mrf.mxu0
    %v2369 = vadd.f32 0.0, %v2368
    %2370 = vmatmul.f32.gmra.mxu0 %v2331
    %v2371 = vpop.f32.mrf.mxu0
    %v2372 = vadd.f32 0.0, %v2371
    %2373 = vmatmul.f32.gmra.mxu0 %v2332
    %v2374 = vpop.f32.mrf.mxu0
    %v2375 = vadd.f32 0.0, %v2374
    %2376 = vmatmul.f32.gmra.mxu0 %v2333
    %v2377 = vpop.f32.mrf.mxu0
    %v2378 = vadd.f32 0.0, %v2377
    %2379 = vdwg.mxu0
    %v2380 = vadd.f32 %v2295, %v2369
    %v2381 = vadd.f32 %v2295, %v2372
    %v2382 = vadd.f32 %v2295, %v2375
    %v2383 = vadd.f32 %v2295, %v2378
    %v2384 = vrot.slane %v2288, 6
    %v2385 = vrot.slane %v2289, 6
    %v2386 = vrot.slane %v2290, 6
    %v2387 = vrot.slane %v2291, 6
    %v2388 = vsel %vm947, %v2386, %v2387
    %v2389 = vsel %vm947, %v2385, %v2386
    %v2390 = vsel %vm947, %v2384, %v2385
    %v2391 = vsel %vm947, %v2387, %v2384
    %v2392 = vsel %vm972, %v2391, 0.0
    %v2393 = vsel %vm973, %v2390, 0.0
    %v2394 = vsel %vm974, %v2389, 0.0
    %v2395 = vsel %vm975, %v2388, 0.0
    %s2396 = scalar_lea.vmem [#allocation7], 768
    %v2397 = vld [vmem:[%s2396] sm:$0xff]
    %v2398 = vld [vmem:[%s2396 + $0x8] sm:$0xff]
    %v2399 = vld [vmem:[%s2396 + $0x10] sm:$0xff]
    %v2400 = vld [vmem:[%s2396 + $0x18] sm:$0xff]
    %v2401 = vld [vmem:[%s2396 + $0x20] sm:$0xff]
    %v2402 = vld [vmem:[%s2396 + $0x28] sm:$0xff]
    %v2403 = vld [vmem:[%s2396 + $0x30] sm:$0xff]
    %v2404 = vld [vmem:[%s2396 + $0x38] sm:$0xff]
    %v2405 = vld [vmem:[%s2396 + $0x40] sm:$0xff]
    %v2406 = vld [vmem:[%s2396 + $0x48] sm:$0xff]
    %v2407 = vld [vmem:[%s2396 + $0x50] sm:$0xff]
    %v2408 = vld [vmem:[%s2396 + $0x58] sm:$0xff]
    %v2409 = vld [vmem:[%s2396 + $0x60] sm:$0xff]
    %v2410 = vld [vmem:[%s2396 + $0x68] sm:$0xff]
    %v2411 = vld [vmem:[%s2396 + $0x70] sm:$0xff]
    %v2412 = vld [vmem:[%s2396 + $0x78] sm:$0xff]
    %2413 = vmatpush.msra.mxu0 %v2412
    %2414 = vmatpush.msra.mxu0 %v2411
    %2415 = vmatpush.msra.mxu0 %v2410
    %2416 = vmatpush.msra.mxu0 %v2409
    %2417 = vmatpush.msra.mxu0 %v2408
    %2418 = vmatpush.msra.mxu0 %v2407
    %2419 = vmatpush.msra.mxu0 %v2406
    %2420 = vmatpush.msra.mxu0 %v2405
    %2421 = vmatpush.msra.mxu0 %v2404
    %2422 = vmatpush.msra.mxu0 %v2403
    %2423 = vmatpush.msra.mxu0 %v2402
    %2424 = vmatpush.msra.mxu0 %v2401
    %2425 = vmatpush.msra.mxu0 %v2400
    %2426 = vmatpush.msra.mxu0 %v2399
    %2427 = vmatpush.msra.mxu0 %v2398
    %2428 = vmatpush.msra.mxu0 %v2397
    %2429 = vmatmul.f32.gmra.mxu0 %v2392
    %v2430 = vpop.f32.mrf.mxu0
    %v2431 = vadd.f32 0.0, %v2430
    %2432 = vmatmul.f32.gmra.mxu0 %v2393
    %v2433 = vpop.f32.mrf.mxu0
    %v2434 = vadd.f32 0.0, %v2433
    %2435 = vmatmul.f32.gmra.mxu0 %v2394
    %v2436 = vpop.f32.mrf.mxu0
    %v2437 = vadd.f32 0.0, %v2436
    %2438 = vmatmul.f32.gmra.mxu0 %v2395
    %v2439 = vpop.f32.mrf.mxu0
    %v2440 = vadd.f32 0.0, %v2439
    %2441 = vdwg.mxu0
    %v2442 = vadd.f32 %v2380, %v2431
    %v2443 = vadd.f32 %v2381, %v2434
    %v2444 = vadd.f32 %v2382, %v2437
    %v2445 = vadd.f32 %v2383, %v2440
    %s2446 = scalar_lea.vmem [#allocation7], 896
    %v2447 = vld [vmem:[%s2446] sm:$0xff]
    %v2448 = vld [vmem:[%s2446 + $0x8] sm:$0xff]
    %v2449 = vld [vmem:[%s2446 + $0x10] sm:$0xff]
    %v2450 = vld [vmem:[%s2446 + $0x18] sm:$0xff]
    %v2451 = vld [vmem:[%s2446 + $0x20] sm:$0xff]
    %v2452 = vld [vmem:[%s2446 + $0x28] sm:$0xff]
    %v2453 = vld [vmem:[%s2446 + $0x30] sm:$0xff]
    %v2454 = vld [vmem:[%s2446 + $0x38] sm:$0xff]
    %v2455 = vld [vmem:[%s2446 + $0x40] sm:$0xff]
    %v2456 = vld [vmem:[%s2446 + $0x48] sm:$0xff]
    %v2457 = vld [vmem:[%s2446 + $0x50] sm:$0xff]
    %v2458 = vld [vmem:[%s2446 + $0x58] sm:$0xff]
    %v2459 = vld [vmem:[%s2446 + $0x60] sm:$0xff]
    %v2460 = vld [vmem:[%s2446 + $0x68] sm:$0xff]
    %v2461 = vld [vmem:[%s2446 + $0x70] sm:$0xff]
    %v2462 = vld [vmem:[%s2446 + $0x78] sm:$0xff]
    %2463 = vmatpush.msra.mxu0 %v2462
    %2464 = vmatpush.msra.mxu0 %v2461
    %2465 = vmatpush.msra.mxu0 %v2460
    %2466 = vmatpush.msra.mxu0 %v2459
    %2467 = vmatpush.msra.mxu0 %v2458
    %2468 = vmatpush.msra.mxu0 %v2457
    %2469 = vmatpush.msra.mxu0 %v2456
    %2470 = vmatpush.msra.mxu0 %v2455
    %2471 = vmatpush.msra.mxu0 %v2454
    %2472 = vmatpush.msra.mxu0 %v2453
    %2473 = vmatpush.msra.mxu0 %v2452
    %2474 = vmatpush.msra.mxu0 %v2451
    %2475 = vmatpush.msra.mxu0 %v2450
    %2476 = vmatpush.msra.mxu0 %v2449
    %2477 = vmatpush.msra.mxu0 %v2448
    %2478 = vmatpush.msra.mxu0 %v2447
    %2479 = vmatmul.f32.gmra.mxu0 %v2288
    %v2480 = vpop.f32.mrf.mxu0
    %v2481 = vadd.f32 0.0, %v2480
    %2482 = vmatmul.f32.gmra.mxu0 %v2289
    %v2483 = vpop.f32.mrf.mxu0
    %v2484 = vadd.f32 0.0, %v2483
    %2485 = vmatmul.f32.gmra.mxu0 %v2290
    %v2486 = vpop.f32.mrf.mxu0
    %v2487 = vadd.f32 0.0, %v2486
    %2488 = vmatmul.f32.gmra.mxu0 %v2291
    %v2489 = vpop.f32.mrf.mxu0
    %v2490 = vadd.f32 0.0, %v2489
    %2491 = vdwg.mxu0
    %v2492 = vadd.f32 %v2442, %v2481
    %v2493 = vadd.f32 %v2443, %v2484
    %v2494 = vadd.f32 %v2444, %v2487
    %v2495 = vadd.f32 %v2445, %v2490
    %v2496 = vrot.slane %v2288, 2
    %v2497 = vrot.slane %v2289, 2
    %v2498 = vrot.slane %v2290, 2
    %v2499 = vrot.slane %v2291, 2
    %v2500 = vsel %vm1257, %v2498, %v2499
    %v2501 = vsel %vm1257, %v2497, %v2498
    %v2502 = vsel %vm1257, %v2496, %v2497
    %v2503 = vsel %vm1257, %v2499, %v2496
    %v2504 = vsel %vm1282, %v2502, 0.0
    %v2505 = vsel %vm1283, %v2501, 0.0
    %v2506 = vsel %vm1284, %v2500, 0.0
    %v2507 = vsel %vm1285, %v2503, 0.0
    %s2508 = scalar_lea.vmem [#allocation7], 1024
    %v2509 = vld [vmem:[%s2508] sm:$0xff]
    %v2510 = vld [vmem:[%s2508 + $0x8] sm:$0xff]
    %v2511 = vld [vmem:[%s2508 + $0x10] sm:$0xff]
    %v2512 = vld [vmem:[%s2508 + $0x18] sm:$0xff]
    %v2513 = vld [vmem:[%s2508 + $0x20] sm:$0xff]
    %v2514 = vld [vmem:[%s2508 + $0x28] sm:$0xff]
    %v2515 = vld [vmem:[%s2508 + $0x30] sm:$0xff]
    %v2516 = vld [vmem:[%s2508 + $0x38] sm:$0xff]
    %v2517 = vld [vmem:[%s2508 + $0x40] sm:$0xff]
    %v2518 = vld [vmem:[%s2508 + $0x48] sm:$0xff]
    %v2519 = vld [vmem:[%s2508 + $0x50] sm:$0xff]
    %v2520 = vld [vmem:[%s2508 + $0x58] sm:$0xff]
    %v2521 = vld [vmem:[%s2508 + $0x60] sm:$0xff]
    %v2522 = vld [vmem:[%s2508 + $0x68] sm:$0xff]
    %v2523 = vld [vmem:[%s2508 + $0x70] sm:$0xff]
    %v2524 = vld [vmem:[%s2508 + $0x78] sm:$0xff]
    %2525 = vmatpush.msra.mxu0 %v2524
    %2526 = vmatpush.msra.mxu0 %v2523
    %2527 = vmatpush.msra.mxu0 %v2522
    %2528 = vmatpush.msra.mxu0 %v2521
    %2529 = vmatpush.msra.mxu0 %v2520
    %2530 = vmatpush.msra.mxu0 %v2519
    %2531 = vmatpush.msra.mxu0 %v2518
    %2532 = vmatpush.msra.mxu0 %v2517
    %2533 = vmatpush.msra.mxu0 %v2516
    %2534 = vmatpush.msra.mxu0 %v2515
    %2535 = vmatpush.msra.mxu0 %v2514
    %2536 = vmatpush.msra.mxu0 %v2513
    %2537 = vmatpush.msra.mxu0 %v2512
    %2538 = vmatpush.msra.mxu0 %v2511
    %2539 = vmatpush.msra.mxu0 %v2510
    %2540 = vmatpush.msra.mxu0 %v2509
    %2541 = vmatmul.f32.gmra.mxu0 %v2504
    %v2542 = vpop.f32.mrf.mxu0
    %v2543 = vadd.f32 0.0, %v2542
    %2544 = vmatmul.f32.gmra.mxu0 %v2505
    %v2545 = vpop.f32.mrf.mxu0
    %v2546 = vadd.f32 0.0, %v2545
    %2547 = vmatmul.f32.gmra.mxu0 %v2506
    %v2548 = vpop.f32.mrf.mxu0
    %v2549 = vadd.f32 0.0, %v2548
    %2550 = vmatmul.f32.gmra.mxu0 %v2507
    %v2551 = vpop.f32.mrf.mxu0
    %v2552 = vadd.f32 0.0, %v2551
    %2553 = vdwg.mxu0
    %v2554 = vadd.f32 %v2492, %v2543
    %v2555 = vadd.f32 %v2493, %v2546
    %v2556 = vadd.f32 %v2494, %v2549
    %v2557 = vadd.f32 %v2495, %v2552
    %v2558 = vadd.s32 %v281, 4
    %v2559 = vadd.s32 %v282, 4
    %v2560 = vadd.s32 %v283, 4
    %v2561 = vadd.s32 %v284, 4
    %vm2562 = vcmp.ge.s32.totalorder %v2558, 0
    %vm2563 = vcmp.ge.s32.totalorder %v2559, 0
    %vm2564 = vcmp.ge.s32.totalorder %v2560, 0
    %vm2565 = vcmp.ge.s32.totalorder %v2561, 0
    %vm2566 = vcmp.lt.s32.totalorder %v2558, 16
    %vm2567 = vcmp.lt.s32.totalorder %v2559, 16
    %vm2568 = vcmp.lt.s32.totalorder %v2560, 16
    %vm2569 = vcmp.lt.s32.totalorder %v2561, 16
    %vm2570 = vmand %vm2562, %vm2566
    %vm2571 = vmand %vm2563, %vm2567
    %vm2572 = vmand %vm2564, %vm2568
    %vm2573 = vmand %vm2565, %vm2569
    %v2574 = vsel %vm2570, 1, 0
    %v2575 = vsel %vm2571, 1, 0
    %v2576 = vsel %vm2572, 1, 0
    %v2577 = vsel %vm2573, 1, 0
    %vm2578 = vcmp.eq.s32.totalorder %v2574, 1
    %vm2579 = vcmp.eq.s32.totalorder %v2575, 1
    %vm2580 = vcmp.eq.s32.totalorder %v2576, 1
    %vm2581 = vcmp.eq.s32.totalorder %v2577, 1
    %v2582 = vsel %vm2578, %v2304, 0.0
    %v2583 = vsel %vm2579, %v2303, 0.0
    %v2584 = vsel %vm2580, %v2302, 0.0
    %v2585 = vsel %vm2581, %v2305, 0.0
    %s2586 = scalar_lea.vmem [#allocation7], 1152
    %v2587 = vld [vmem:[%s2586] sm:$0xff]
    %v2588 = vld [vmem:[%s2586 + $0x8] sm:$0xff]
    %v2589 = vld [vmem:[%s2586 + $0x10] sm:$0xff]
    %v2590 = vld [vmem:[%s2586 + $0x18] sm:$0xff]
    %v2591 = vld [vmem:[%s2586 + $0x20] sm:$0xff]
    %v2592 = vld [vmem:[%s2586 + $0x28] sm:$0xff]
    %v2593 = vld [vmem:[%s2586 + $0x30] sm:$0xff]
    %v2594 = vld [vmem:[%s2586 + $0x38] sm:$0xff]
    %v2595 = vld [vmem:[%s2586 + $0x40] sm:$0xff]
    %v2596 = vld [vmem:[%s2586 + $0x48] sm:$0xff]
    %v2597 = vld [vmem:[%s2586 + $0x50] sm:$0xff]
    %v2598 = vld [vmem:[%s2586 + $0x58] sm:$0xff]
    %v2599 = vld [vmem:[%s2586 + $0x60] sm:$0xff]
    %v2600 = vld [vmem:[%s2586 + $0x68] sm:$0xff]
    %v2601 = vld [vmem:[%s2586 + $0x70] sm:$0xff]
    %v2602 = vld [vmem:[%s2586 + $0x78] sm:$0xff]
    %2603 = vmatpush.msra.mxu0 %v2602
    %2604 = vmatpush.msra.mxu0 %v2601
    %2605 = vmatpush.msra.mxu0 %v2600
    %2606 = vmatpush.msra.mxu0 %v2599
    %2607 = vmatpush.msra.mxu0 %v2598
    %2608 = vmatpush.msra.mxu0 %v2597
    %2609 = vmatpush.msra.mxu0 %v2596
    %2610 = vmatpush.msra.mxu0 %v2595
    %2611 = vmatpush.msra.mxu0 %v2594
    %2612 = vmatpush.msra.mxu0 %v2593
    %2613 = vmatpush.msra.mxu0 %v2592
    %2614 = vmatpush.msra.mxu0 %v2591
    %2615 = vmatpush.msra.mxu0 %v2590
    %2616 = vmatpush.msra.mxu0 %v2589
    %2617 = vmatpush.msra.mxu0 %v2588
    %2618 = vmatpush.msra.mxu0 %v2587
    %2619 = vmatmul.f32.gmra.mxu0 %v2582
    %v2620 = vpop.f32.mrf.mxu0
    %v2621 = vadd.f32 0.0, %v2620
    %2622 = vmatmul.f32.gmra.mxu0 %v2583
    %v2623 = vpop.f32.mrf.mxu0
    %v2624 = vadd.f32 0.0, %v2623
    %2625 = vmatmul.f32.gmra.mxu0 %v2584
    %v2626 = vpop.f32.mrf.mxu0
    %v2627 = vadd.f32 0.0, %v2626
    %2628 = vmatmul.f32.gmra.mxu0 %v2585
    %v2629 = vpop.f32.mrf.mxu0
    %v2630 = vadd.f32 0.0, %v2629
    %2631 = vdwg.mxu0
    %v2632 = vadd.f32 %v2554, %v2621
    %v2633 = vadd.f32 %v2555, %v2624
    %v2634 = vadd.f32 %v2556, %v2627
    %v2635 = vadd.f32 %v2557, %v2630
    %s2636 = scalar_lea.vmem %s11, 1
    %v2637 = vld [vmem:[%s2636] sm:$0x1]
    %s2638 = scalar_lea.vmem %s12, 1
    %v2639 = vld [vmem:[%s2638] sm:$0x1]
    %2640 = vadd.xlane.f32.xlu0 %v2632
    %v2641 = vpop.xlane.xlu0 %2640
    %2642 = vadd.xlane.f32.xlu0 %v2633
    %v2643 = vpop.xlane.xlu0 %2642
    %2644 = vadd.xlane.f32.xlu0 %v2634
    %v2645 = vpop.xlane.xlu0 %2644
    %2646 = vadd.xlane.f32.xlu0 %v2635
    %v2647 = vpop.xlane.xlu0 %2646
    %v2648 = vmul.f32 %v2632, %v2632
    %v2649 = vmul.f32 %v2633, %v2633
    %v2650 = vmul.f32 %v2634, %v2634
    %v2651 = vmul.f32 %v2635, %v2635
    %2652 = vadd.xlane.f32.xlu0 %v2648
    %v2653 = vpop.xlane.xlu0 %2652
    %2654 = vadd.xlane.f32.xlu0 %v2649
    %v2655 = vpop.xlane.xlu0 %2654
    %2656 = vadd.xlane.f32.xlu0 %v2650
    %v2657 = vpop.xlane.xlu0 %2656
    %2658 = vadd.xlane.f32.xlu0 %v2651
    %v2659 = vpop.xlane.xlu0 %2658
    %v2660 = vmul.f32 %v2641, %v656
    %v2661 = vmul.f32 %v2643, %v656
    %v2662 = vmul.f32 %v2645, %v656
    %v2663 = vmul.f32 %v2647, %v656
    %v2664 = vmul.f32 %v2653, %v656
    %v2665 = vmul.f32 %v2655, %v656
    %v2666 = vmul.f32 %v2657, %v656
    %v2667 = vmul.f32 %v2659, %v656
    %v2668 = vmul.f32 %v2660, %v2660
    %v2669 = vmul.f32 %v2661, %v2661
    %v2670 = vmul.f32 %v2662, %v2662
    %v2671 = vmul.f32 %v2663, %v2663
    %v2672 = vsub.f32 %v2664, %v2668
    %v2673 = vsub.f32 %v2665, %v2669
    %v2674 = vsub.f32 %v2666, %v2670
    %v2675 = vsub.f32 %v2667, %v2671
    %v2676 = vsub.f32 %v2632, %v2660
    %v2677 = vsub.f32 %v2633, %v2661
    %v2678 = vsub.f32 %v2634, %v2662
    %v2679 = vsub.f32 %v2635, %v2663
    %v2680 = vadd.f32 %v2672, 1e-05
    %v2681 = vadd.f32 %v2673, 1e-05
    %v2682 = vadd.f32 %v2674, 1e-05
    %v2683 = vadd.f32 %v2675, 1e-05
    %v2684 = vrsqrt.pop %v2680
    %v2685 = vmul.f32 %v2684, %v2680
    %v2686 = vmul.f32 %v2685, %v2684
    %v2687 = vmul.f32 0.5, %v2686
    %v2688 = vsub.f32 1.5, %v2687
    %v2689 = vmul.f32 %v2684, %v2688
    %vm2690 = vweird.f32 %v2680
    %vm2691 = vweird.f32 %v2684
    %vm2692 = vmor %vm2690, %vm2691
    %v2693 = vsel %vm2692, %v2684, %v2689
    %v2694 = vrsqrt.pop %v2681
    %v2695 = vmul.f32 %v2694, %v2681
    %v2696 = vmul.f32 %v2695, %v2694
    %v2697 = vmul.f32 0.5, %v2696
    %v2698 = vsub.f32 1.5, %v2697
    %v2699 = vmul.f32 %v2694, %v2698
    %vm2700 = vweird.f32 %v2681
    %vm2701 = vweird.f32 %v2694
    %vm2702 = vmor %vm2700, %vm2701
    %v2703 = vsel %vm2702, %v2694, %v2699
    %v2704 = vrsqrt.pop %v2682
    %v2705 = vmul.f32 %v2704, %v2682
    %v2706 = vmul.f32 %v2705, %v2704
    %v2707 = vmul.f32 0.5, %v2706
    %v2708 = vsub.f32 1.5, %v2707
    %v2709 = vmul.f32 %v2704, %v2708
    %vm2710 = vweird.f32 %v2682
    %vm2711 = vweird.f32 %v2704
    %vm2712 = vmor %vm2710, %vm2711
    %v2713 = vsel %vm2712, %v2704, %v2709
    %v2714 = vrsqrt.pop %v2683
    %v2715 = vmul.f32 %v2714, %v2683
    %v2716 = vmul.f32 %v2715, %v2714
    %v2717 = vmul.f32 0.5, %v2716
    %v2718 = vsub.f32 1.5, %v2717
    %v2719 = vmul.f32 %v2714, %v2718
    %vm2720 = vweird.f32 %v2683
    %vm2721 = vweird.f32 %v2714
    %vm2722 = vmor %vm2720, %vm2721
    %v2723 = vsel %vm2722, %v2714, %v2719
    %v2724 = vmul.f32 %v2676, %v2693
    %v2725 = vmul.f32 %v2677, %v2703
    %v2726 = vmul.f32 %v2678, %v2713
    %v2727 = vmul.f32 %v2679, %v2723
    %v2729 = vperm.slane %v2637, 0
    %v2731 = vmul.f32 %v2724, %v2729
    %v2732 = vmul.f32 %v2725, %v2729
    %v2733 = vmul.f32 %v2726, %v2729
    %v2734 = vmul.f32 %v2727, %v2729
    %v2736 = vperm.slane %v2639, 0
    %v2738 = vadd.f32 %v2731, %v2736
    %v2739 = vadd.f32 %v2732, %v2736
    %v2740 = vadd.f32 %v2733, %v2736
    %v2741 = vadd.f32 %v2734, %v2736
    %v2742 = vmul.f32 %v2738, 0.5
    %v2743 = vmul.f32 %v2739, 0.5
    %v2744 = vmul.f32 %v2740, 0.5
    %v2745 = vmul.f32 %v2741, 0.5
    %v2746 = vmul.f32 %v2738, %v406
    %v2747 = vmul.f32 %v2739, %v406
    %v2748 = vmul.f32 %v2740, %v406
    %v2749 = vmul.f32 %v2741, %v406
    %v2750 = vmul.f32 %v2746, %v2746
    %v2751 = vmin.f32 16.0, %v2750
    %v2752 = vmul.f32 %v2751, 2.1237322e-06
    %v2753 = vadd.f32 %v2752, 0.00028619796
    %v2754 = vmul.f32 %v2751, %v2753
    %v2755 = vadd.f32 %v2754, 0.0036580483
    %v2756 = vmul.f32 %v2751, %v2755
    %v2757 = vadd.f32 %v2756, 0.05243302
    %v2758 = vmul.f32 %v2751, %v2757
    %v2759 = vadd.f32 %v2758, 0.18741608
    %v2760 = vmul.f32 %v2751, %v2759
    %v2761 = vadd.f32 %v2760, 1.1283791
    %v2762 = vmul.f32 %v2746, %v2761
    %v2763 = vmul.f32 %v2751, 3.8918573e-05
    %v2764 = vadd.f32 %v2763, 0.001143296
    %v2765 = vmul.f32 %v2751, %v2764
    %v2766 = vadd.f32 %v2765, 0.014752088
    %v2767 = vmul.f32 %v2751, %v2766
    %v2768 = vadd.f32 %v2767, 0.112945676
    %v2769 = vmul.f32 %v2751, %v2768
    %v2770 = vadd.f32 %v2769, 0.4994258
    %v2771 = vmul.f32 %v2751, %v2770
    %v2772 = vadd.f32 %v2771, 1.0
    %v2773 = vrcp.pop %v2772
    %v2774 = vmul.f32 %v2772, %v2773
    %v2775 = vsub.f32 1.0, %v2774
    %v2776 = vmul.f32 %v2773, %v2775
    %v2777 = vadd.f32 %v2773, %v2776
    %vm2778 = vweird.f32 %v2772
    %vm2779 = vweird.f32 %v2773
    %vm2780 = vmor %vm2778, %vm2779
    %v2781 = vsel %vm2780, %v2773, %v2777
    %v2782 = vand.u32 2147483647, %v2772
    %vm2783 = vcmp.eq.f32.partialorder %v2782, 8.507059e+37
    %v2784 = vand.u32 %v2772, 2147483648
    %v2785 = vor.u32 1.1754944e-38, %v2784
    %v2786 = vsel %vm2783, %v2785, %v2781
    %v2787 = vmul.f32 %v2762, %v2786
    %v2788 = vmin.f32 %v2787, 1.0
    %v2789 = vmax.f32 %v2788, -1.0
    %v2790 = vmul.f32 %v2747, %v2747
    %v2791 = vmin.f32 16.0, %v2790
    %v2792 = vmul.f32 %v2791, 2.1237322e-06
    %v2793 = vadd.f32 %v2792, 0.00028619796
    %v2794 = vmul.f32 %v2791, %v2793
    %v2795 = vadd.f32 %v2794, 0.0036580483
    %v2796 = vmul.f32 %v2791, %v2795
    %v2797 = vadd.f32 %v2796, 0.05243302
    %v2798 = vmul.f32 %v2791, %v2797
    %v2799 = vadd.f32 %v2798, 0.18741608
    %v2800 = vmul.f32 %v2791, %v2799
    %v2801 = vadd.f32 %v2800, 1.1283791
    %v2802 = vmul.f32 %v2747, %v2801
    %v2803 = vmul.f32 %v2791, 3.8918573e-05
    %v2804 = vadd.f32 %v2803, 0.001143296
    %v2805 = vmul.f32 %v2791, %v2804
    %v2806 = vadd.f32 %v2805, 0.014752088
    %v2807 = vmul.f32 %v2791, %v2806
    %v2808 = vadd.f32 %v2807, 0.112945676
    %v2809 = vmul.f32 %v2791, %v2808
    %v2810 = vadd.f32 %v2809, 0.4994258
    %v2811 = vmul.f32 %v2791, %v2810
    %v2812 = vadd.f32 %v2811, 1.0
    %v2813 = vrcp.pop %v2812
    %v2814 = vmul.f32 %v2812, %v2813
    %v2815 = vsub.f32 1.0, %v2814
    %v2816 = vmul.f32 %v2813, %v2815
    %v2817 = vadd.f32 %v2813, %v2816
    %vm2818 = vweird.f32 %v2812
    %vm2819 = vweird.f32 %v2813
    %vm2820 = vmor %vm2818, %vm2819
    %v2821 = vsel %vm2820, %v2813, %v2817
    %v2822 = vand.u32 2147483647, %v2812
    %vm2823 = vcmp.eq.f32.partialorder %v2822, 8.507059e+37
    %v2824 = vand.u32 %v2812, 2147483648
    %v2825 = vor.u32 1.1754944e-38, %v2824
    %v2826 = vsel %vm2823, %v2825, %v2821
    %v2827 = vmul.f32 %v2802, %v2826
    %v2828 = vmin.f32 %v2827, 1.0
    %v2829 = vmax.f32 %v2828, -1.0
    %v2830 = vmul.f32 %v2748, %v2748
    %v2831 = vmin.f32 16.0, %v2830
    %v2832 = vmul.f32 %v2831, 2.1237322e-06
    %v2833 = vadd.f32 %v2832, 0.00028619796
    %v2834 = vmul.f32 %v2831, %v2833
    %v2835 = vadd.f32 %v2834, 0.0036580483
    %v2836 = vmul.f32 %v2831, %v2835
    %v2837 = vadd.f32 %v2836, 0.05243302
    %v2838 = vmul.f32 %v2831, %v2837
    %v2839 = vadd.f32 %v2838, 0.18741608
    %v2840 = vmul.f32 %v2831, %v2839
    %v2841 = vadd.f32 %v2840, 1.1283791
    %v2842 = vmul.f32 %v2748, %v2841
    %v2843 = vmul.f32 %v2831, 3.8918573e-05
    %v2844 = vadd.f32 %v2843, 0.001143296
    %v2845 = vmul.f32 %v2831, %v2844
    %v2846 = vadd.f32 %v2845, 0.014752088
    %v2847 = vmul.f32 %v2831, %v2846
    %v2848 = vadd.f32 %v2847, 0.112945676
    %v2849 = vmul.f32 %v2831, %v2848
    %v2850 = vadd.f32 %v2849, 0.4994258
    %v2851 = vmul.f32 %v2831, %v2850
    %v2852 = vadd.f32 %v2851, 1.0
    %v2853 = vrcp.pop %v2852
    %v2854 = vmul.f32 %v2852, %v2853
    %v2855 = vsub.f32 1.0, %v2854
    %v2856 = vmul.f32 %v2853, %v2855
    %v2857 = vadd.f32 %v2853, %v2856
    %vm2858 = vweird.f32 %v2852
    %vm2859 = vweird.f32 %v2853
    %vm2860 = vmor %vm2858, %vm2859
    %v2861 = vsel %vm2860, %v2853, %v2857
    %v2862 = vand.u32 2147483647, %v2852
    %vm2863 = vcmp.eq.f32.partialorder %v2862, 8.507059e+37
    %v2864 = vand.u32 %v2852, 2147483648
    %v2865 = vor.u32 1.1754944e-38, %v2864
    %v2866 = vsel %vm2863, %v2865, %v2861
    %v2867 = vmul.f32 %v2842, %v2866
    %v2868 = vmin.f32 %v2867, 1.0
    %v2869 = vmax.f32 %v2868, -1.0
    %v2870 = vmul.f32 %v2749, %v2749
    %v2871 = vmin.f32 16.0, %v2870
    %v2872 = vmul.f32 %v2871, 2.1237322e-06
    %v2873 = vadd.f32 %v2872, 0.00028619796
    %v2874 = vmul.f32 %v2871, %v2873
    %v2875 = vadd.f32 %v2874, 0.0036580483
    %v2876 = vmul.f32 %v2871, %v2875
    %v2877 = vadd.f32 %v2876, 0.05243302
    %v2878 = vmul.f32 %v2871, %v2877
    %v2879 = vadd.f32 %v2878, 0.18741608
    %v2880 = vmul.f32 %v2871, %v2879
    %v2881 = vadd.f32 %v2880, 1.1283791
    %v2882 = vmul.f32 %v2749, %v2881
    %v2883 = vmul.f32 %v2871, 3.8918573e-05
    %v2884 = vadd.f32 %v2883, 0.001143296
    %v2885 = vmul.f32 %v2871, %v2884
    %v2886 = vadd.f32 %v2885, 0.014752088
    %v2887 = vmul.f32 %v2871, %v2886
    %v2888 = vadd.f32 %v2887, 0.112945676
    %v2889 = vmul.f32 %v2871, %v2888
    %v2890 = vadd.f32 %v2889, 0.4994258
    %v2891 = vmul.f32 %v2871, %v2890
    %v2892 = vadd.f32 %v2891, 1.0
    %v2893 = vrcp.pop %v2892
    %v2894 = vmul.f32 %v2892, %v2893
    %v2895 = vsub.f32 1.0, %v2894
    %v2896 = vmul.f32 %v2893, %v2895
    %v2897 = vadd.f32 %v2893, %v2896
    %vm2898 = vweird.f32 %v2892
    %vm2899 = vweird.f32 %v2893
    %vm2900 = vmor %vm2898, %vm2899
    %v2901 = vsel %vm2900, %v2893, %v2897
    %v2902 = vand.u32 2147483647, %v2892
    %vm2903 = vcmp.eq.f32.partialorder %v2902, 8.507059e+37
    %v2904 = vand.u32 %v2892, 2147483648
    %v2905 = vor.u32 1.1754944e-38, %v2904
    %v2906 = vsel %vm2903, %v2905, %v2901
    %v2907 = vmul.f32 %v2882, %v2906
    %v2908 = vmin.f32 %v2907, 1.0
    %v2909 = vmax.f32 %v2908, -1.0
    %v2910 = vadd.f32 %v2789, 1.0
    %v2911 = vadd.f32 %v2829, 1.0
    %v2912 = vadd.f32 %v2869, 1.0
    %v2913 = vadd.f32 %v2909, 1.0
    %v2914 = vmul.f32 %v2742, %v2910
    %v2915 = vmul.f32 %v2743, %v2911
    %v2916 = vmul.f32 %v2744, %v2912
    %v2917 = vmul.f32 %v2745, %v2913
    %s2918 = scalar_lea.vmem [#allocation8], 128
    %v2919 = vld [vmem:[%s2918] sm:$0xff]
    %v2920 = vld [vmem:[%s2918 + $0x8] sm:$0xff]
    %v2921 = vld [vmem:[%s2918 + $0x10] sm:$0xff]
    %v2922 = vld [vmem:[%s2918 + $0x18] sm:$0xff]
    %v2923 = vld [vmem:[%s2918 + $0x20] sm:$0xff]
    %v2924 = vld [vmem:[%s2918 + $0x28] sm:$0xff]
    %v2925 = vld [vmem:[%s2918 + $0x30] sm:$0xff]
    %v2926 = vld [vmem:[%s2918 + $0x38] sm:$0xff]
    %v2927 = vld [vmem:[%s2918 + $0x40] sm:$0xff]
    %v2928 = vld [vmem:[%s2918 + $0x48] sm:$0xff]
    %v2929 = vld [vmem:[%s2918 + $0x50] sm:$0xff]
    %v2930 = vld [vmem:[%s2918 + $0x58] sm:$0xff]
    %v2931 = vld [vmem:[%s2918 + $0x60] sm:$0xff]
    %v2932 = vld [vmem:[%s2918 + $0x68] sm:$0xff]
    %v2933 = vld [vmem:[%s2918 + $0x70] sm:$0xff]
    %v2934 = vld [vmem:[%s2918 + $0x78] sm:$0xff]
    %s2935 = scalar_lea.vmem %s14, 1
    %v2936 = vld [vmem:[%s2935] sm:$0x1]
    %v2938 = vperm.slane %v2936, 0
    %2940 = vmatpush.msra.mxu0 %v2934
    %2941 = vmatpush.msra.mxu0 %v2933
    %2942 = vmatpush.msra.mxu0 %v2932
    %2943 = vmatpush.msra.mxu0 %v2931
    %2944 = vmatpush.msra.mxu0 %v2930
    %2945 = vmatpush.msra.mxu0 %v2929
    %2946 = vmatpush.msra.mxu0 %v2928
    %2947 = vmatpush.msra.mxu0 %v2927
    %2948 = vmatpush.msra.mxu0 %v2926
    %2949 = vmatpush.msra.mxu0 %v2925
    %2950 = vmatpush.msra.mxu0 %v2924
    %2951 = vmatpush.msra.mxu0 %v2923
    %2952 = vmatpush.msra.mxu0 %v2922
    %2953 = vmatpush.msra.mxu0 %v2921
    %2954 = vmatpush.msra.mxu0 %v2920
    %2955 = vmatpush.msra.mxu0 %v2919
    %2956 = vmatmul.f32.gmra.mxu0 %v2914
    %v2957 = vpop.f32.mrf.mxu0
    %v2958 = vadd.f32 %v2938, %v2957
    %2959 = vmatmul.f32.gmra.mxu0 %v2915
    %v2960 = vpop.f32.mrf.mxu0
    %v2961 = vadd.f32 %v2938, %v2960
    %2962 = vmatmul.f32.gmra.mxu0 %v2916
    %v2963 = vpop.f32.mrf.mxu0
    %v2964 = vadd.f32 %v2938, %v2963
    %2965 = vmatmul.f32.gmra.mxu0 %v2917
    %v2966 = vpop.f32.mrf.mxu0
    %v2967 = vadd.f32 %v2938, %v2966
    %2968 = vdwg.mxu0
    %v2969 = vadd.f32 %v1669, %v2958
    %v2970 = vadd.f32 %v1670, %v2961
    %v2971 = vadd.f32 %v1671, %v2964
    %v2972 = vadd.f32 %v1672, %v2967
    %2973 = vst [vmem:[#allocation11] sm:$0xff] %v2969
    %2974 = vst [vmem:[#allocation11 + $0x8] sm:$0xff] %v2970
    %2975 = vst [vmem:[#allocation11 + $0x10] sm:$0xff] %v2971
    %2976 = vst [vmem:[#allocation11 + $0x18] sm:$0xff] %v2972
    // Predicated region
    $region98: #{tpu_custom_call.1} parent=1 // pred_check
      _
    $region99: #{tpu_custom_call.1} parent=1 // pred_check_branch
      %2978 = sbr.rel (0) target = $region101
    $region100: #{tpu_custom_call.1} parent=1 // pred_region
      %2980 = vsyncadd [#allocation4], 0
      %s2981 = sshll.u32 [#allocation11], 4
      %s2982 = int_to_ptr.vmem [resolvable:$true] %s2981
      %s2983 = sshll.u32 %s19, 4
      %s2984 = int_to_ptr.hbm [resolvable:$true] %s2983
      %2989 = dma.vmem_to_hbm [thread:$0]  %s2982, 512, %s2984, [#allocation4], 128, 128, 8
    $region101: #{tpu_custom_call.1} parent=1 // pred_fallthru
      _
    // Predicated region
    $region102: #{tpu_custom_call.1} parent=1 // pred_check
      _
    $region103: #{tpu_custom_call.1} parent=1 // pred_check_branch
      %2991 = sbr.rel (0) target = $region105
    $region104: #{tpu_custom_call.1} parent=1 // pred_region
      %2993 = dma.done [#allocation4], 512
    $region105: #{tpu_custom_call.1} parent=1 // pred_fallthru
      _
    %2994 = vsyncpa [#allocation3], 1
    %2995 = vsyncpa [#allocation6], 1
    %2996 = vsyncpa [#allocation9], 1
    %2997 = vsyncpa [#allocation4], 1

</llo_original>
